<compile_context>
chip_gen: v7x
topology: tpu7x:2x2x1
jax: 0.10.0
libtpu: 0.0.40
codegen_flags: <defaults>
</compile_context>

<pallas_src>
import jax
import jax.numpy as jnp
from jax.experimental import pallas as pl
from jax.experimental.pallas import tpu as pltpu

# ----------------------- configuration (small, module-consistent) ------------------
VOCAB_SIZE = 32
EMBED_DIM = 32        # embedding_dim
HIDDEN = 32           # hidden_size
N_CLASSES = 8
NUM_LAYERS = 2
BATCH = 2
SEQ = 8

G = 4 * HIDDEN        # gates per direction (PyTorch order i, f, g, o)
GG = 2 * G            # gates for both directions (forward | reverse)
H2 = 2 * HIDDEN       # bidirectional feature width


# ----------------------------- fused Pallas kernel ----------------------------------
def _ner_kernel(ids_ref, emb_ref,
                wih0_ref, b0_ref, whh0_ref,
                wih1_ref, b1_ref, whh1_ref,
                wlin_ref, blin_ref,
                out_ref,
                xp_scr, sf1_scr, sr1_scr, sf2_scr, sr2_scr):
    H = HIDDEN
    B = BATCH
    T = SEQ

    # ---- Embedding lookup fused as a one-hot MXU matmul (vocab is tiny) -------------
    ids = ids_ref[...]                                                   # (T*B, 1) int32, time-major
    vocab_iota = jax.lax.broadcasted_iota(jnp.int32, (T * B, VOCAB_SIZE), 1)
    one_hot = (vocab_iota == ids).astype(jnp.float32)                    # (T*B, V)
    x = jnp.dot(one_hot, emb_ref[...], preferred_element_type=jnp.float32)  # (T*B, E)

    def gate_block(gb, c_prev):
        # gb: (B, 4H) gates in PyTorch order i, f, g, o
        i = jax.nn.sigmoid(gb[:, 0 * H:1 * H])
        f = jax.nn.sigmoid(gb[:, 1 * H:2 * H])
        g = jnp.tanh(gb[:, 2 * H:3 * H])
        o = jax.nn.sigmoid(gb[:, 3 * H:4 * H])
        c = f * c_prev + i * g
        return o * jnp.tanh(c), c

    def bidir_lstm_layer(x_in, wih_ref, b_ref, whh_ref, sf_scr, sr_scr):
        # Input projection for the whole sequence, BOTH directions in one matmul:
        #   (T*B, F) @ (F, 8H); cols [0:4H] = forward gates, [4H:8H] = reverse gates.
        xp_scr[...] = (
            jnp.dot(x_in, wih_ref[...], preferred_element_type=jnp.float32) + b_ref[...]
        )
        whh_bd = whh_ref[...]                                            # (2H, 8H) block-diagonal

        h_f = jnp.zeros((B, H), jnp.float32)
        h_r = jnp.zeros((B, H), jnp.float32)
        c_f = jnp.zeros((B, H), jnp.float32)
        c_r = jnp.zeros((B, H), jnp.float32)

        # Statically unrolled time loop; both directions advance in lock-step:
        # forward processes time s, reverse processes time T-1-s.
        for s in range(T):
            rf = s * B
            rr = (T - 1 - s) * B
            xp_step = jnp.concatenate(
                [xp_scr[rf:rf + B, 0:G], xp_scr[rr:rr + B, G:GG]], axis=1)       # (B, 8H)
            h_cat = jnp.concatenate([h_f, h_r], axis=1)                          # (B, 2H)
            gates = xp_step + jnp.dot(h_cat, whh_bd,
                                      preferred_element_type=jnp.float32)        # (B, 8H)
            h_f, c_f = gate_block(gates[:, 0:G], c_f)
            h_r, c_r = gate_block(gates[:, G:GG], c_r)
            sf_scr[rf:rf + B, :] = h_f          # forward hidden for time s
            sr_scr[rr:rr + B, :] = h_r          # reverse hidden for time T-1-s
        # Bidirectional output: concat(fwd, rev) per time step, time-major (T*B, 2H)
        return jnp.concatenate([sf_scr[...], sr_scr[...]], axis=1)

    y1 = bidir_lstm_layer(x, wih0_ref, b0_ref, whh0_ref, sf1_scr, sr1_scr)
    # inter-layer LSTM dropout + nn.Dropout(p=0.2) are identities in eval mode
    y2 = bidir_lstm_layer(y1, wih1_ref, b1_ref, whh1_ref, sf2_scr, sr2_scr)

    # Classifier: (T*B, 2H) @ (2H, C) + b
    out_ref[...] = (
        jnp.dot(y2, wlin_ref[...], preferred_element_type=jnp.float32) + blin_ref[...]
    )


# ----------------------------- parameter construction -------------------------------
def init_params(key):
    n_keys = 1 + NUM_LAYERS * 2 * 4 + 2
    ks = iter(jax.random.split(key, n_keys))
    bound = 1.0 / jnp.sqrt(HIDDEN)

    params = {
        "embedding": jax.random.normal(next(ks), (VOCAB_SIZE, EMBED_DIM),
                                       dtype=jnp.float32)
    }

    lstm = []
    for layer in range(NUM_LAYERS):
        in_dim = EMBED_DIM if layer == 0 else H2
        wih_cols, b_cols = [], []
        whh_bd = jnp.zeros((H2, GG), jnp.float32)
        for d in range(2):  # 0 = forward, 1 = reverse
            w_ih = jax.random.uniform(next(ks), (G, in_dim),
                                      minval=-bound, maxval=bound, dtype=jnp.float32)
            w_hh = jax.random.uniform(next(ks), (G, HIDDEN),
                                      minval=-bound, maxval=bound, dtype=jnp.float32)
            b_ih = jax.random.uniform(next(ks), (G,),
                                      minval=-bound, maxval=bound, dtype=jnp.float32)
            b_hh = jax.random.uniform(next(ks), (G,),
                                      minval=-bound, maxval=bound, dtype=jnp.float32)
            wih_cols.append(w_ih.T)                     # (in_dim, 4H)
            b_cols.append(b_ih + b_hh)                  # fold both biases
            whh_bd = whh_bd.at[d * HIDDEN:(d + 1) * HIDDEN,
                               d * G:(d + 1) * G].set(w_hh.T)
        lstm.append({
            "w_ih": jnp.concatenate(wih_cols, axis=1),          # (in_dim, 8H)
            "b": jnp.concatenate(b_cols).reshape(1, GG),        # (1, 8H)
            "w_hh_bd": whh_bd,                                  # (2H, 8H) block-diagonal
        })
    params["lstm"] = lstm

    lin_bound = 1.0 / jnp.sqrt(H2)
    w_lin = jax.random.uniform(next(ks), (N_CLASSES, H2),
                               minval=-lin_bound, maxval=lin_bound, dtype=jnp.float32)
    b_lin = jax.random.uniform(next(ks), (N_CLASSES,),
                               minval=-lin_bound, maxval=lin_bound, dtype=jnp.float32)
    params["linear_w_t"] = w_lin.T                              # (2H, C)
    params["linear_b"] = b_lin.reshape(1, N_CLASSES)
    return params


# ----------------------------- forward pass -----------------------------------------
def ner_forward(params, sentences):
    B, T = sentences.shape
    TB = T * B
    # time-major flattened token ids as a column vector (row r = t*B + b)
    ids_col = sentences.astype(jnp.int32).T.reshape(TB, 1)

    def full(shape):
        return pl.BlockSpec(shape, lambda i, _s=shape: (0,) * len(_s))

    l0, l1 = params["lstm"]
    logits = pl.pallas_call(
        _ner_kernel,
        out_shape=jax.ShapeDtypeStruct((TB, N_CLASSES), jnp.float32),
        grid=(1,),
        in_specs=[
            full((TB, 1)),                        # token ids
            full((VOCAB_SIZE, EMBED_DIM)),        # embedding table
            full((EMBED_DIM, GG)), full((1, GG)), full((H2, GG)),   # layer 0
            full((H2, GG)),        full((1, GG)), full((H2, GG)),   # layer 1
            full((H2, N_CLASSES)), full((1, N_CLASSES)),            # classifier
        ],
        out_specs=full((TB, N_CLASSES)),
        scratch_shapes=[
            pltpu.VMEM((TB, GG), jnp.float32),        # xproj (both dirs), reused by both layers
            pltpu.VMEM((TB, HIDDEN), jnp.float32),    # layer-0 forward hidden sequence
            pltpu.VMEM((TB, HIDDEN), jnp.float32),    # layer-0 reverse hidden sequence
            pltpu.VMEM((TB, HIDDEN), jnp.float32),    # layer-1 forward hidden sequence
            pltpu.VMEM((TB, HIDDEN), jnp.float32),    # layer-1 reverse hidden sequence
        ],
        compiler_params=pltpu.CompilerParams(dimension_semantics=("arbitrary",)),
    )(ids_col, params["embedding"],
      l0["w_ih"], l0["b"], l0["w_hh_bd"],
      l1["w_ih"], l1["b"], l1["w_hh_bd"],
      params["linear_w_t"], params["linear_b"])

    # back to PyTorch batch_first layout (B, T, n_classes); tiny (512 B) XLA transpose
    return logits.reshape(T, B, N_CLASSES).transpose(1, 0, 2)


# ----------------------------------- main --------------------------------------------
if __name__ == "__main__":
    key = jax.random.PRNGKey(0)
    k_in, k_params = jax.random.split(key)

    sentences = jax.random.randint(k_in, (BATCH, SEQ), 0, VOCAB_SIZE, dtype=jnp.int32)
    params = init_params(k_params)

    out = jax.jit(ner_forward)(params, sentences)
    out = jax.block_until_ready(out)

    assert out.shape == (BATCH, SEQ, N_CLASSES), out.shape
    assert out.dtype == jnp.float32
    assert bool(jnp.isfinite(out).all())
    print("KERNEL_OK")
</pallas_src>

<mosaic_0001>
module attributes {stable_mosaic.version = 11 : i64} {
  func.func @_ner_kernel(%arg0: i32, %arg1: memref<16x1xi32, #tpu.memory_space<vmem>>, %arg2: memref<32x32xf32, #tpu.memory_space<vmem>>, %arg3: memref<32x256xf32, #tpu.memory_space<vmem>>, %arg4: memref<1x256xf32, #tpu.memory_space<vmem>>, %arg5: memref<64x256xf32, #tpu.memory_space<vmem>>, %arg6: memref<64x256xf32, #tpu.memory_space<vmem>>, %arg7: memref<1x256xf32, #tpu.memory_space<vmem>>, %arg8: memref<64x256xf32, #tpu.memory_space<vmem>>, %arg9: memref<64x8xf32, #tpu.memory_space<vmem>>, %arg10: memref<1x8xf32, #tpu.memory_space<vmem>>, %arg11: memref<16x8xf32, #tpu.memory_space<vmem>>, %arg12: memref<16x256xf32, #tpu.memory_space<vmem>>, %arg13: memref<16x32xf32, #tpu.memory_space<vmem>>, %arg14: memref<16x32xf32, #tpu.memory_space<vmem>>, %arg15: memref<16x32xf32, #tpu.memory_space<vmem>>, %arg16: memref<16x32xf32, #tpu.memory_space<vmem>>) attributes {dimension_semantics = [#tpu.dimension_semantics<arbitrary>], iteration_bounds = array<i64: 1>, scalar_prefetch = 0 : i64, scratch_operands = 5 : i64, tpu.core_type = #tpu.core_type<tc>, window_params = [{pipeline_mode = #tpu.pipeline_mode<synchronous>, transform_indices = @transform_0, window_bounds = array<i64: 16, 1>}, {pipeline_mode = #tpu.pipeline_mode<synchronous>, transform_indices = @transform_1, window_bounds = array<i64: 32, 32>}, {pipeline_mode = #tpu.pipeline_mode<synchronous>, transform_indices = @transform_2, window_bounds = array<i64: 32, 256>}, {pipeline_mode = #tpu.pipeline_mode<synchronous>, transform_indices = @transform_3, window_bounds = array<i64: 1, 256>}, {pipeline_mode = #tpu.pipeline_mode<synchronous>, transform_indices = @transform_4, window_bounds = array<i64: 64, 256>}, {pipeline_mode = #tpu.pipeline_mode<synchronous>, transform_indices = @transform_5, window_bounds = array<i64: 64, 256>}, {pipeline_mode = #tpu.pipeline_mode<synchronous>, transform_indices = @transform_6, window_bounds = array<i64: 1, 256>}, {pipeline_mode = #tpu.pipeline_mode<synchronous>, transform_indices = @transform_7, window_bounds = array<i64: 64, 256>}, {pipeline_mode = #tpu.pipeline_mode<synchronous>, transform_indices = @transform_8, window_bounds = array<i64: 64, 8>}, {pipeline_mode = #tpu.pipeline_mode<synchronous>, transform_indices = @transform_9, window_bounds = array<i64: 1, 8>}, {pipeline_mode = #tpu.pipeline_mode<synchronous>, transform_indices = @transform_10, window_bounds = array<i64: 16, 8>}]} {
    %c0 = arith.constant 0 : index
    %c0_0 = arith.constant 0 : index
    %0 = vector.load %arg1[%c0, %c0_0] : memref<16x1xi32, #tpu.memory_space<vmem>>, vector<16x1xi32>
    %1 = tpu.iota {dimensions = array<i32: 1>} : vector<16x32xi32>
    %2 = vector.broadcast %0 : vector<16x1xi32> to vector<16x32xi32>
    %3 = arith.cmpi eq, %1, %2 : vector<16x32xi32>
    %4 = arith.extui %3 : vector<16x32xi1> to vector<16x32xi32>
    %5 = arith.sitofp %4 : vector<16x32xi32> to vector<16x32xf32>
    %c0_1 = arith.constant 0 : index
    %c0_2 = arith.constant 0 : index
    %6 = vector.load %arg2[%c0_1, %c0_2] : memref<32x32xf32, #tpu.memory_space<vmem>>, vector<32x32xf32>
    %cst = arith.constant dense<0.000000e+00> : vector<16x32xf32>
    %7 = tpu.matmul %5, %6, %cst {dimension_numbers = #tpu.dot_dimension_numbers<[1], [0], [0], [1], [0, 0, 1, 1], [], []>} : vector<16x32xf32>, vector<32x32xf32>, vector<16x32xf32> -> vector<16x32xf32>
    %c0_3 = arith.constant 0 : index
    %c0_4 = arith.constant 0 : index
    %8 = vector.load %arg3[%c0_3, %c0_4] : memref<32x256xf32, #tpu.memory_space<vmem>>, vector<32x256xf32>
    %cst_5 = arith.constant dense<0.000000e+00> : vector<16x256xf32>
    %9 = tpu.matmul %7, %8, %cst_5 {dimension_numbers = #tpu.dot_dimension_numbers<[1], [0], [0], [1], [0, 0, 1, 1], [], []>} : vector<16x32xf32>, vector<32x256xf32>, vector<16x256xf32> -> vector<16x256xf32>
    %c0_6 = arith.constant 0 : index
    %c0_7 = arith.constant 0 : index
    %10 = vector.load %arg4[%c0_6, %c0_7] : memref<1x256xf32, #tpu.memory_space<vmem>>, vector<1x256xf32>
    %11 = vector.broadcast %10 : vector<1x256xf32> to vector<16x256xf32>
    %12 = arith.addf %9, %11 : vector<16x256xf32>
    %c0_8 = arith.constant 0 : index
    %c0_9 = arith.constant 0 : index
    %13 = vector.load %arg12[%c0_8, %c0_9] : memref<16x256xf32, #tpu.memory_space<vmem>>, vector<16x256xf32>
    tpu.vector_store %arg12[%c0_8, %c0_9], %12 {strides = array<i32>} : memref<16x256xf32, #tpu.memory_space<vmem>>, vector<16x256xf32>,
    %c0_10 = arith.constant 0 : index
    %c0_11 = arith.constant 0 : index
    %14 = vector.load %arg5[%c0_10, %c0_11] : memref<64x256xf32, #tpu.memory_space<vmem>>, vector<64x256xf32>
    %cst_12 = arith.constant 0.000000e+00 : f32
    %15 = vector.broadcast %cst_12 : f32 to vector<2x32xf32>
    %cst_13 = arith.constant 0.000000e+00 : f32
    %16 = vector.broadcast %cst_13 : f32 to vector<2x32xf32>
    %cst_14 = arith.constant 0.000000e+00 : f32
    %17 = vector.broadcast %cst_14 : f32 to vector<2x32xf32>
    %cst_15 = arith.constant 0.000000e+00 : f32
    %18 = vector.broadcast %cst_15 : f32 to vector<2x32xf32>
    %c0_16 = arith.constant 0 : index
    %c0_17 = arith.constant 0 : index
    %19 = vector.load %arg12[%c0_16, %c0_17] : memref<16x256xf32, #tpu.memory_space<vmem>>, vector<2x128xf32>
    %c14 = arith.constant 14 : index
    %c128 = arith.constant 128 : index
    %20 = vector.load %arg12[%c14, %c128] : memref<16x256xf32, #tpu.memory_space<vmem>>, vector<2x128xf32>
    %21 = tpu.concatenate %19, %20 in 1 : vector<2x128xf32>, vector<2x128xf32> -> vector<2x256xf32>
    %22 = tpu.concatenate %15, %16 in 1 : vector<2x32xf32>, vector<2x32xf32> -> vector<2x64xf32>
    %cst_18 = arith.constant dense<0.000000e+00> : vector<2x256xf32>
    %23 = tpu.matmul %22, %14, %cst_18 {dimension_numbers = #tpu.dot_dimension_numbers<[1], [0], [0], [1], [0, 0, 1, 1], [], []>} : vector<2x64xf32>, vector<64x256xf32>, vector<2x256xf32> -> vector<2x256xf32>
    %24 = arith.addf %21, %23 : vector<2x256xf32>
    %25 = vector.extract_strided_slice %24 {offsets = [0, 0], sizes = [2, 128], strides = [1, 1]} : vector<2x256xf32> to vector<2x128xf32>
    %26 = vector.extract_strided_slice %25 {offsets = [0, 0], sizes = [2, 32], strides = [1, 1]} : vector<2x128xf32> to vector<2x32xf32>
    %27 = arith.negf %26 : vector<2x32xf32>
    %28 = math.exp %27 : vector<2x32xf32>
    %cst_19 = arith.constant 1.000000e+00 : f32
    %29 = vector.broadcast %cst_19 : f32 to vector<2x32xf32>
    %30 = arith.addf %29, %28 : vector<2x32xf32>
    %31 = arith.divf %29, %30 : vector<2x32xf32>
    %32 = vector.extract_strided_slice %25 {offsets = [0, 32], sizes = [2, 32], strides = [1, 1]} : vector<2x128xf32> to vector<2x32xf32>
    %33 = arith.negf %32 : vector<2x32xf32>
    %34 = math.exp %33 : vector<2x32xf32>
    %cst_20 = arith.constant 1.000000e+00 : f32
    %35 = vector.broadcast %cst_20 : f32 to vector<2x32xf32>
    %36 = arith.addf %35, %34 : vector<2x32xf32>
    %37 = arith.divf %35, %36 : vector<2x32xf32>
    %38 = vector.extract_strided_slice %25 {offsets = [0, 64], sizes = [2, 32], strides = [1, 1]} : vector<2x128xf32> to vector<2x32xf32>
    %39 = math.tanh %38 : vector<2x32xf32>
    %40 = vector.extract_strided_slice %25 {offsets = [0, 96], sizes = [2, 32], strides = [1, 1]} : vector<2x128xf32> to vector<2x32xf32>
    %41 = arith.negf %40 : vector<2x32xf32>
    %42 = math.exp %41 : vector<2x32xf32>
    %cst_21 = arith.constant 1.000000e+00 : f32
    %43 = vector.broadcast %cst_21 : f32 to vector<2x32xf32>
    %44 = arith.addf %43, %42 : vector<2x32xf32>
    %45 = arith.divf %43, %44 : vector<2x32xf32>
    %46 = arith.mulf %37, %17 : vector<2x32xf32>
    %47 = arith.mulf %31, %39 : vector<2x32xf32>
    %48 = arith.addf %46, %47 : vector<2x32xf32>
    %49 = math.tanh %48 : vector<2x32xf32>
    %50 = arith.mulf %45, %49 : vector<2x32xf32>
    %51 = vector.extract_strided_slice %24 {offsets = [0, 128], sizes = [2, 128], strides = [1, 1]} : vector<2x256xf32> to vector<2x128xf32>
    %52 = vector.extract_strided_slice %51 {offsets = [0, 0], sizes = [2, 32], strides = [1, 1]} : vector<2x128xf32> to vector<2x32xf32>
    %53 = arith.negf %52 : vector<2x32xf32>
    %54 = math.exp %53 : vector<2x32xf32>
    %cst_22 = arith.constant 1.000000e+00 : f32
    %55 = vector.broadcast %cst_22 : f32 to vector<2x32xf32>
    %56 = arith.addf %55, %54 : vector<2x32xf32>
    %57 = arith.divf %55, %56 : vector<2x32xf32>
    %58 = vector.extract_strided_slice %51 {offsets = [0, 32], sizes = [2, 32], strides = [1, 1]} : vector<2x128xf32> to vector<2x32xf32>
    %59 = arith.negf %58 : vector<2x32xf32>
    %60 = math.exp %59 : vector<2x32xf32>
    %cst_23 = arith.constant 1.000000e+00 : f32
    %61 = vector.broadcast %cst_23 : f32 to vector<2x32xf32>
    %62 = arith.addf %61, %60 : vector<2x32xf32>
    %63 = arith.divf %61, %62 : vector<2x32xf32>
    %64 = vector.extract_strided_slice %51 {offsets = [0, 64], sizes = [2, 32], strides = [1, 1]} : vector<2x128xf32> to vector<2x32xf32>
    %65 = math.tanh %64 : vector<2x32xf32>
    %66 = vector.extract_strided_slice %51 {offsets = [0, 96], sizes = [2, 32], strides = [1, 1]} : vector<2x128xf32> to vector<2x32xf32>
    %67 = arith.negf %66 : vector<2x32xf32>
    %68 = math.exp %67 : vector<2x32xf32>
    %cst_24 = arith.constant 1.000000e+00 : f32
    %69 = vector.broadcast %cst_24 : f32 to vector<2x32xf32>
    %70 = arith.addf %69, %68 : vector<2x32xf32>
    %71 = arith.divf %69, %70 : vector<2x32xf32>
    %72 = arith.mulf %63, %18 : vector<2x32xf32>
    %73 = arith.mulf %57, %65 : vector<2x32xf32>
    %74 = arith.addf %72, %73 : vector<2x32xf32>
    %75 = math.tanh %74 : vector<2x32xf32>
    %76 = arith.mulf %71, %75 : vector<2x32xf32>
    %c0_25 = arith.constant 0 : index
    %c0_26 = arith.constant 0 : index
    %77 = vector.load %arg13[%c0_25, %c0_26] : memref<16x32xf32, #tpu.memory_space<vmem>>, vector<2x32xf32>
    tpu.vector_store %arg13[%c0_25, %c0_26], %50 {strides = array<i32>} : memref<16x32xf32, #tpu.memory_space<vmem>>, vector<2x32xf32>,
    %c14_27 = arith.constant 14 : index
    %c0_28 = arith.constant 0 : index
    %78 = vector.load %arg14[%c14_27, %c0_28] : memref<16x32xf32, #tpu.memory_space<vmem>>, vector<2x32xf32>
    tpu.vector_store %arg14[%c14_27, %c0_28], %76 {strides = array<i32>} : memref<16x32xf32, #tpu.memory_space<vmem>>, vector<2x32xf32>,
    %c2 = arith.constant 2 : index
    %c0_29 = arith.constant 0 : index
    %79 = vector.load %arg12[%c2, %c0_29] : memref<16x256xf32, #tpu.memory_space<vmem>>, vector<2x128xf32>
    %c12 = arith.constant 12 : index
    %c128_30 = arith.constant 128 : index
    %80 = vector.load %arg12[%c12, %c128_30] : memref<16x256xf32, #tpu.memory_space<vmem>>, vector<2x128xf32>
    %81 = tpu.concatenate %79, %80 in 1 : vector<2x128xf32>, vector<2x128xf32> -> vector<2x256xf32>
    %82 = tpu.concatenate %50, %76 in 1 : vector<2x32xf32>, vector<2x32xf32> -> vector<2x64xf32>
    %cst_31 = arith.constant dense<0.000000e+00> : vector<2x256xf32>
    %83 = tpu.matmul %82, %14, %cst_31 {dimension_numbers = #tpu.dot_dimension_numbers<[1], [0], [0], [1], [0, 0, 1, 1], [], []>} : vector<2x64xf32>, vector<64x256xf32>, vector<2x256xf32> -> vector<2x256xf32>
    %84 = arith.addf %81, %83 : vector<2x256xf32>
    %85 = vector.extract_strided_slice %84 {offsets = [0, 0], sizes = [2, 128], strides = [1, 1]} : vector<2x256xf32> to vector<2x128xf32>
    %86 = vector.extract_strided_slice %85 {offsets = [0, 0], sizes = [2, 32], strides = [1, 1]} : vector<2x128xf32> to vector<2x32xf32>
    %87 = arith.negf %86 : vector<2x32xf32>
    %88 = math.exp %87 : vector<2x32xf32>
    %cst_32 = arith.constant 1.000000e+00 : f32
    %89 = vector.broadcast %cst_32 : f32 to vector<2x32xf32>
    %90 = arith.addf %89, %88 : vector<2x32xf32>
    %91 = arith.divf %89, %90 : vector<2x32xf32>
    %92 = vector.extract_strided_slice %85 {offsets = [0, 32], sizes = [2, 32], strides = [1, 1]} : vector<2x128xf32> to vector<2x32xf32>
    %93 = arith.negf %92 : vector<2x32xf32>
    %94 = math.exp %93 : vector<2x32xf32>
    %cst_33 = arith.constant 1.000000e+00 : f32
    %95 = vector.broadcast %cst_33 : f32 to vector<2x32xf32>
    %96 = arith.addf %95, %94 : vector<2x32xf32>
    %97 = arith.divf %95, %96 : vector<2x32xf32>
    %98 = vector.extract_strided_slice %85 {offsets = [0, 64], sizes = [2, 32], strides = [1, 1]} : vector<2x128xf32> to vector<2x32xf32>
    %99 = math.tanh %98 : vector<2x32xf32>
    %100 = vector.extract_strided_slice %85 {offsets = [0, 96], sizes = [2, 32], strides = [1, 1]} : vector<2x128xf32> to vector<2x32xf32>
    %101 = arith.negf %100 : vector<2x32xf32>
    %102 = math.exp %101 : vector<2x32xf32>
    %cst_34 = arith.constant 1.000000e+00 : f32
    %103 = vector.broadcast %cst_34 : f32 to vector<2x32xf32>
    %104 = arith.addf %103, %102 : vector<2x32xf32>
    %105 = arith.divf %103, %104 : vector<2x32xf32>
    %106 = arith.mulf %97, %48 : vector<2x32xf32>
    %107 = arith.mulf %91, %99 : vector<2x32xf32>
    %108 = arith.addf %106, %107 : vector<2x32xf32>
    %109 = math.tanh %108 : vector<2x32xf32>
    %110 = arith.mulf %105, %109 : vector<2x32xf32>
    %111 = vector.extract_strided_slice %84 {offsets = [0, 128], sizes = [2, 128], strides = [1, 1]} : vector<2x256xf32> to vector<2x128xf32>
    %112 = vector.extract_strided_slice %111 {offsets = [0, 0], sizes = [2, 32], strides = [1, 1]} : vector<2x128xf32> to vector<2x32xf32>
    %113 = arith.negf %112 : vector<2x32xf32>
    %114 = math.exp %113 : vector<2x32xf32>
    %cst_35 = arith.constant 1.000000e+00 : f32
    %115 = vector.broadcast %cst_35 : f32 to vector<2x32xf32>
    %116 = arith.addf %115, %114 : vector<2x32xf32>
    %117 = arith.divf %115, %116 : vector<2x32xf32>
    %118 = vector.extract_strided_slice %111 {offsets = [0, 32], sizes = [2, 32], strides = [1, 1]} : vector<2x128xf32> to vector<2x32xf32>
    %119 = arith.negf %118 : vector<2x32xf32>
    %120 = math.exp %119 : vector<2x32xf32>
    %cst_36 = arith.constant 1.000000e+00 : f32
    %121 = vector.broadcast %cst_36 : f32 to vector<2x32xf32>
    %122 = arith.addf %121, %120 : vector<2x32xf32>
    %123 = arith.divf %121, %122 : vector<2x32xf32>
    %124 = vector.extract_strided_slice %111 {offsets = [0, 64], sizes = [2, 32], strides = [1, 1]} : vector<2x128xf32> to vector<2x32xf32>
    %125 = math.tanh %124 : vector<2x32xf32>
    %126 = vector.extract_strided_slice %111 {offsets = [0, 96], sizes = [2, 32], strides = [1, 1]} : vector<2x128xf32> to vector<2x32xf32>
    %127 = arith.negf %126 : vector<2x32xf32>
    %128 = math.exp %127 : vector<2x32xf32>
    %cst_37 = arith.constant 1.000000e+00 : f32
    %129 = vector.broadcast %cst_37 : f32 to vector<2x32xf32>
    %130 = arith.addf %129, %128 : vector<2x32xf32>
    %131 = arith.divf %129, %130 : vector<2x32xf32>
    %132 = arith.mulf %123, %74 : vector<2x32xf32>
    %133 = arith.mulf %117, %125 : vector<2x32xf32>
    %134 = arith.addf %132, %133 : vector<2x32xf32>
    %135 = math.tanh %134 : vector<2x32xf32>
    %136 = arith.mulf %131, %135 : vector<2x32xf32>
    %c2_38 = arith.constant 2 : index
    %c0_39 = arith.constant 0 : index
    %137 = vector.load %arg13[%c2_38, %c0_39] : memref<16x32xf32, #tpu.memory_space<vmem>>, vector<2x32xf32>
    tpu.vector_store %arg13[%c2_38, %c0_39], %110 {strides = array<i32>} : memref<16x32xf32, #tpu.memory_space<vmem>>, vector<2x32xf32>,
    %c12_40 = arith.constant 12 : index
    %c0_41 = arith.constant 0 : index
    %138 = vector.load %arg14[%c12_40, %c0_41] : memref<16x32xf32, #tpu.memory_space<vmem>>, vector<2x32xf32>
    tpu.vector_store %arg14[%c12_40, %c0_41], %136 {strides = array<i32>} : memref<16x32xf32, #tpu.memory_space<vmem>>, vector<2x32xf32>,
    %c4 = arith.constant 4 : index
    %c0_42 = arith.constant 0 : index
    %139 = vector.load %arg12[%c4, %c0_42] : memref<16x256xf32, #tpu.memory_space<vmem>>, vector<2x128xf32>
    %c10 = arith.constant 10 : index
    %c128_43 = arith.constant 128 : index
    %140 = vector.load %arg12[%c10, %c128_43] : memref<16x256xf32, #tpu.memory_space<vmem>>, vector<2x128xf32>
    %141 = tpu.concatenate %139, %140 in 1 : vector<2x128xf32>, vector<2x128xf32> -> vector<2x256xf32>
    %142 = tpu.concatenate %110, %136 in 1 : vector<2x32xf32>, vector<2x32xf32> -> vector<2x64xf32>
    %cst_44 = arith.constant dense<0.000000e+00> : vector<2x256xf32>
    %143 = tpu.matmul %142, %14, %cst_44 {dimension_numbers = #tpu.dot_dimension_numbers<[1], [0], [0], [1], [0, 0, 1, 1], [], []>} : vector<2x64xf32>, vector<64x256xf32>, vector<2x256xf32> -> vector<2x256xf32>
    %144 = arith.addf %141, %143 : vector<2x256xf32>
    %145 = vector.extract_strided_slice %144 {offsets = [0, 0], sizes = [2, 128], strides = [1, 1]} : vector<2x256xf32> to vector<2x128xf32>
    %146 = vector.extract_strided_slice %145 {offsets = [0, 0], sizes = [2, 32], strides = [1, 1]} : vector<2x128xf32> to vector<2x32xf32>
    %147 = arith.negf %146 : vector<2x32xf32>
    %148 = math.exp %147 : vector<2x32xf32>
    %cst_45 = arith.constant 1.000000e+00 : f32
    %149 = vector.broadcast %cst_45 : f32 to vector<2x32xf32>
    %150 = arith.addf %149, %148 : vector<2x32xf32>
    %151 = arith.divf %149, %150 : vector<2x32xf32>
    %152 = vector.extract_strided_slice %145 {offsets = [0, 32], sizes = [2, 32], strides = [1, 1]} : vector<2x128xf32> to vector<2x32xf32>
    %153 = arith.negf %152 : vector<2x32xf32>
    %154 = math.exp %153 : vector<2x32xf32>
    %cst_46 = arith.constant 1.000000e+00 : f32
    %155 = vector.broadcast %cst_46 : f32 to vector<2x32xf32>
    %156 = arith.addf %155, %154 : vector<2x32xf32>
    %157 = arith.divf %155, %156 : vector<2x32xf32>
    %158 = vector.extract_strided_slice %145 {offsets = [0, 64], sizes = [2, 32], strides = [1, 1]} : vector<2x128xf32> to vector<2x32xf32>
    %159 = math.tanh %158 : vector<2x32xf32>
    %160 = vector.extract_strided_slice %145 {offsets = [0, 96], sizes = [2, 32], strides = [1, 1]} : vector<2x128xf32> to vector<2x32xf32>
    %161 = arith.negf %160 : vector<2x32xf32>
    %162 = math.exp %161 : vector<2x32xf32>
    %cst_47 = arith.constant 1.000000e+00 : f32
    %163 = vector.broadcast %cst_47 : f32 to vector<2x32xf32>
    %164 = arith.addf %163, %162 : vector<2x32xf32>
    %165 = arith.divf %163, %164 : vector<2x32xf32>
    %166 = arith.mulf %157, %108 : vector<2x32xf32>
    %167 = arith.mulf %151, %159 : vector<2x32xf32>
    %168 = arith.addf %166, %167 : vector<2x32xf32>
    %169 = math.tanh %168 : vector<2x32xf32>
    %170 = arith.mulf %165, %169 : vector<2x32xf32>
    %171 = vector.extract_strided_slice %144 {offsets = [0, 128], sizes = [2, 128], strides = [1, 1]} : vector<2x256xf32> to vector<2x128xf32>
    %172 = vector.extract_strided_slice %171 {offsets = [0, 0], sizes = [2, 32], strides = [1, 1]} : vector<2x128xf32> to vector<2x32xf32>
    %173 = arith.negf %172 : vector<2x32xf32>
    %174 = math.exp %173 : vector<2x32xf32>
    %cst_48 = arith.constant 1.000000e+00 : f32
    %175 = vector.broadcast %cst_48 : f32 to vector<2x32xf32>
    %176 = arith.addf %175, %174 : vector<2x32xf32>
    %177 = arith.divf %175, %176 : vector<2x32xf32>
    %178 = vector.extract_strided_slice %171 {offsets = [0, 32], sizes = [2, 32], strides = [1, 1]} : vector<2x128xf32> to vector<2x32xf32>
    %179 = arith.negf %178 : vector<2x32xf32>
    %180 = math.exp %179 : vector<2x32xf32>
    %cst_49 = arith.constant 1.000000e+00 : f32
    %181 = vector.broadcast %cst_49 : f32 to vector<2x32xf32>
    %182 = arith.addf %181, %180 : vector<2x32xf32>
    %183 = arith.divf %181, %182 : vector<2x32xf32>
    %184 = vector.extract_strided_slice %171 {offsets = [0, 64], sizes = [2, 32], strides = [1, 1]} : vector<2x128xf32> to vector<2x32xf32>
    %185 = math.tanh %184 : vector<2x32xf32>
    %186 = vector.extract_strided_slice %171 {offsets = [0, 96], sizes = [2, 32], strides = [1, 1]} : vector<2x128xf32> to vector<2x32xf32>
    %187 = arith.negf %186 : vector<2x32xf32>
    %188 = math.exp %187 : vector<2x32xf32>
    %cst_50 = arith.constant 1.000000e+00 : f32
    %189 = vector.broadcast %cst_50 : f32 to vector<2x32xf32>
    %190 = arith.addf %189, %188 : vector<2x32xf32>
    %191 = arith.divf %189, %190 : vector<2x32xf32>
    %192 = arith.mulf %183, %134 : vector<2x32xf32>
    %193 = arith.mulf %177, %185 : vector<2x32xf32>
    %194 = arith.addf %192, %193 : vector<2x32xf32>
    %195 = math.tanh %194 : vector<2x32xf32>
    %196 = arith.mulf %191, %195 : vector<2x32xf32>
    %c4_51 = arith.constant 4 : index
    %c0_52 = arith.constant 0 : index
    %197 = vector.load %arg13[%c4_51, %c0_52] : memref<16x32xf32, #tpu.memory_space<vmem>>, vector<2x32xf32>
    tpu.vector_store %arg13[%c4_51, %c0_52], %170 {strides = array<i32>} : memref<16x32xf32, #tpu.memory_space<vmem>>, vector<2x32xf32>,
    %c10_53 = arith.constant 10 : index
    %c0_54 = arith.constant 0 : index
    %198 = vector.load %arg14[%c10_53, %c0_54] : memref<16x32xf32, #tpu.memory_space<vmem>>, vector<2x32xf32>
    tpu.vector_store %arg14[%c10_53, %c0_54], %196 {strides = array<i32>} : memref<16x32xf32, #tpu.memory_space<vmem>>, vector<2x32xf32>,
    %c6 = arith.constant 6 : index
    %c0_55 = arith.constant 0 : index
    %199 = vector.load %arg12[%c6, %c0_55] : memref<16x256xf32, #tpu.memory_space<vmem>>, vector<2x128xf32>
    %c8 = arith.constant 8 : index
    %c128_56 = arith.constant 128 : index
    %200 = vector.load %arg12[%c8, %c128_56] : memref<16x256xf32, #tpu.memory_space<vmem>>, vector<2x128xf32>
    %201 = tpu.concatenate %199, %200 in 1 : vector<2x128xf32>, vector<2x128xf32> -> vector<2x256xf32>
    %202 = tpu.concatenate %170, %196 in 1 : vector<2x32xf32>, vector<2x32xf32> -> vector<2x64xf32>
    %cst_57 = arith.constant dense<0.000000e+00> : vector<2x256xf32>
    %203 = tpu.matmul %202, %14, %cst_57 {dimension_numbers = #tpu.dot_dimension_numbers<[1], [0], [0], [1], [0, 0, 1, 1], [], []>} : vector<2x64xf32>, vector<64x256xf32>, vector<2x256xf32> -> vector<2x256xf32>
    %204 = arith.addf %201, %203 : vector<2x256xf32>
    %205 = vector.extract_strided_slice %204 {offsets = [0, 0], sizes = [2, 128], strides = [1, 1]} : vector<2x256xf32> to vector<2x128xf32>
    %206 = vector.extract_strided_slice %205 {offsets = [0, 0], sizes = [2, 32], strides = [1, 1]} : vector<2x128xf32> to vector<2x32xf32>
    %207 = arith.negf %206 : vector<2x32xf32>
    %208 = math.exp %207 : vector<2x32xf32>
    %cst_58 = arith.constant 1.000000e+00 : f32
    %209 = vector.broadcast %cst_58 : f32 to vector<2x32xf32>
    %210 = arith.addf %209, %208 : vector<2x32xf32>
    %211 = arith.divf %209, %210 : vector<2x32xf32>
    %212 = vector.extract_strided_slice %205 {offsets = [0, 32], sizes = [2, 32], strides = [1, 1]} : vector<2x128xf32> to vector<2x32xf32>
    %213 = arith.negf %212 : vector<2x32xf32>
    %214 = math.exp %213 : vector<2x32xf32>
    %cst_59 = arith.constant 1.000000e+00 : f32
    %215 = vector.broadcast %cst_59 : f32 to vector<2x32xf32>
    %216 = arith.addf %215, %214 : vector<2x32xf32>
    %217 = arith.divf %215, %216 : vector<2x32xf32>
    %218 = vector.extract_strided_slice %205 {offsets = [0, 64], sizes = [2, 32], strides = [1, 1]} : vector<2x128xf32> to vector<2x32xf32>
    %219 = math.tanh %218 : vector<2x32xf32>
    %220 = vector.extract_strided_slice %205 {offsets = [0, 96], sizes = [2, 32], strides = [1, 1]} : vector<2x128xf32> to vector<2x32xf32>
    %221 = arith.negf %220 : vector<2x32xf32>
    %222 = math.exp %221 : vector<2x32xf32>
    %cst_60 = arith.constant 1.000000e+00 : f32
    %223 = vector.broadcast %cst_60 : f32 to vector<2x32xf32>
    %224 = arith.addf %223, %222 : vector<2x32xf32>
    %225 = arith.divf %223, %224 : vector<2x32xf32>
    %226 = arith.mulf %217, %168 : vector<2x32xf32>
    %227 = arith.mulf %211, %219 : vector<2x32xf32>
    %228 = arith.addf %226, %227 : vector<2x32xf32>
    %229 = math.tanh %228 : vector<2x32xf32>
    %230 = arith.mulf %225, %229 : vector<2x32xf32>
    %231 = vector.extract_strided_slice %204 {offsets = [0, 128], sizes = [2, 128], strides = [1, 1]} : vector<2x256xf32> to vector<2x128xf32>
    %232 = vector.extract_strided_slice %231 {offsets = [0, 0], sizes = [2, 32], strides = [1, 1]} : vector<2x128xf32> to vector<2x32xf32>
    %233 = arith.negf %232 : vector<2x32xf32>
    %234 = math.exp %233 : vector<2x32xf32>
    %cst_61 = arith.constant 1.000000e+00 : f32
    %235 = vector.broadcast %cst_61 : f32 to vector<2x32xf32>
    %236 = arith.addf %235, %234 : vector<2x32xf32>
    %237 = arith.divf %235, %236 : vector<2x32xf32>
    %238 = vector.extract_strided_slice %231 {offsets = [0, 32], sizes = [2, 32], strides = [1, 1]} : vector<2x128xf32> to vector<2x32xf32>
    %239 = arith.negf %238 : vector<2x32xf32>
    %240 = math.exp %239 : vector<2x32xf32>
    %cst_62 = arith.constant 1.000000e+00 : f32
    %241 = vector.broadcast %cst_62 : f32 to vector<2x32xf32>
    %242 = arith.addf %241, %240 : vector<2x32xf32>
    %243 = arith.divf %241, %242 : vector<2x32xf32>
    %244 = vector.extract_strided_slice %231 {offsets = [0, 64], sizes = [2, 32], strides = [1, 1]} : vector<2x128xf32> to vector<2x32xf32>
    %245 = math.tanh %244 : vector<2x32xf32>
    %246 = vector.extract_strided_slice %231 {offsets = [0, 96], sizes = [2, 32], strides = [1, 1]} : vector<2x128xf32> to vector<2x32xf32>
    %247 = arith.negf %246 : vector<2x32xf32>
    %248 = math.exp %247 : vector<2x32xf32>
    %cst_63 = arith.constant 1.000000e+00 : f32
    %249 = vector.broadcast %cst_63 : f32 to vector<2x32xf32>
    %250 = arith.addf %249, %248 : vector<2x32xf32>
    %251 = arith.divf %249, %250 : vector<2x32xf32>
    %252 = arith.mulf %243, %194 : vector<2x32xf32>
    %253 = arith.mulf %237, %245 : vector<2x32xf32>
    %254 = arith.addf %252, %253 : vector<2x32xf32>
    %255 = math.tanh %254 : vector<2x32xf32>
    %256 = arith.mulf %251, %255 : vector<2x32xf32>
    %c6_64 = arith.constant 6 : index
    %c0_65 = arith.constant 0 : index
    %257 = vector.load %arg13[%c6_64, %c0_65] : memref<16x32xf32, #tpu.memory_space<vmem>>, vector<2x32xf32>
    tpu.vector_store %arg13[%c6_64, %c0_65], %230 {strides = array<i32>} : memref<16x32xf32, #tpu.memory_space<vmem>>, vector<2x32xf32>,
    %c8_66 = arith.constant 8 : index
    %c0_67 = arith.constant 0 : index
    %258 = vector.load %arg14[%c8_66, %c0_67] : memref<16x32xf32, #tpu.memory_space<vmem>>, vector<2x32xf32>
    tpu.vector_store %arg14[%c8_66, %c0_67], %256 {strides = array<i32>} : memref<16x32xf32, #tpu.memory_space<vmem>>, vector<2x32xf32>,
    %c8_68 = arith.constant 8 : index
    %c0_69 = arith.constant 0 : index
    %259 = vector.load %arg12[%c8_68, %c0_69] : memref<16x256xf32, #tpu.memory_space<vmem>>, vector<2x128xf32>
    %c6_70 = arith.constant 6 : index
    %c128_71 = arith.constant 128 : index
    %260 = vector.load %arg12[%c6_70, %c128_71] : memref<16x256xf32, #tpu.memory_space<vmem>>, vector<2x128xf32>
    %261 = tpu.concatenate %259, %260 in 1 : vector<2x128xf32>, vector<2x128xf32> -> vector<2x256xf32>
    %262 = tpu.concatenate %230, %256 in 1 : vector<2x32xf32>, vector<2x32xf32> -> vector<2x64xf32>
    %cst_72 = arith.constant dense<0.000000e+00> : vector<2x256xf32>
    %263 = tpu.matmul %262, %14, %cst_72 {dimension_numbers = #tpu.dot_dimension_numbers<[1], [0], [0], [1], [0, 0, 1, 1], [], []>} : vector<2x64xf32>, vector<64x256xf32>, vector<2x256xf32> -> vector<2x256xf32>
    %264 = arith.addf %261, %263 : vector<2x256xf32>
    %265 = vector.extract_strided_slice %264 {offsets = [0, 0], sizes = [2, 128], strides = [1, 1]} : vector<2x256xf32> to vector<2x128xf32>
    %266 = vector.extract_strided_slice %265 {offsets = [0, 0], sizes = [2, 32], strides = [1, 1]} : vector<2x128xf32> to vector<2x32xf32>
    %267 = arith.negf %266 : vector<2x32xf32>
    %268 = math.exp %267 : vector<2x32xf32>
    %cst_73 = arith.constant 1.000000e+00 : f32
    %269 = vector.broadcast %cst_73 : f32 to vector<2x32xf32>
    %270 = arith.addf %269, %268 : vector<2x32xf32>
    %271 = arith.divf %269, %270 : vector<2x32xf32>
    %272 = vector.extract_strided_slice %265 {offsets = [0, 32], sizes = [2, 32], strides = [1, 1]} : vector<2x128xf32> to vector<2x32xf32>
    %273 = arith.negf %272 : vector<2x32xf32>
    %274 = math.exp %273 : vector<2x32xf32>
    %cst_74 = arith.constant 1.000000e+00 : f32
    %275 = vector.broadcast %cst_74 : f32 to vector<2x32xf32>
    %276 = arith.addf %275, %274 : vector<2x32xf32>
    %277 = arith.divf %275, %276 : vector<2x32xf32>
    %278 = vector.extract_strided_slice %265 {offsets = [0, 64], sizes = [2, 32], strides = [1, 1]} : vector<2x128xf32> to vector<2x32xf32>
    %279 = math.tanh %278 : vector<2x32xf32>
    %280 = vector.extract_strided_slice %265 {offsets = [0, 96], sizes = [2, 32], strides = [1, 1]} : vector<2x128xf32> to vector<2x32xf32>
    %281 = arith.negf %280 : vector<2x32xf32>
    %282 = math.exp %281 : vector<2x32xf32>
    %cst_75 = arith.constant 1.000000e+00 : f32
    %283 = vector.broadcast %cst_75 : f32 to vector<2x32xf32>
    %284 = arith.addf %283, %282 : vector<2x32xf32>
    %285 = arith.divf %283, %284 : vector<2x32xf32>
    %286 = arith.mulf %277, %228 : vector<2x32xf32>
    %287 = arith.mulf %271, %279 : vector<2x32xf32>
    %288 = arith.addf %286, %287 : vector<2x32xf32>
    %289 = math.tanh %288 : vector<2x32xf32>
    %290 = arith.mulf %285, %289 : vector<2x32xf32>
    %291 = vector.extract_strided_slice %264 {offsets = [0, 128], sizes = [2, 128], strides = [1, 1]} : vector<2x256xf32> to vector<2x128xf32>
    %292 = vector.extract_strided_slice %291 {offsets = [0, 0], sizes = [2, 32], strides = [1, 1]} : vector<2x128xf32> to vector<2x32xf32>
    %293 = arith.negf %292 : vector<2x32xf32>
    %294 = math.exp %293 : vector<2x32xf32>
    %cst_76 = arith.constant 1.000000e+00 : f32
    %295 = vector.broadcast %cst_76 : f32 to vector<2x32xf32>
    %296 = arith.addf %295, %294 : vector<2x32xf32>
    %297 = arith.divf %295, %296 : vector<2x32xf32>
    %298 = vector.extract_strided_slice %291 {offsets = [0, 32], sizes = [2, 32], strides = [1, 1]} : vector<2x128xf32> to vector<2x32xf32>
    %299 = arith.negf %298 : vector<2x32xf32>
    %300 = math.exp %299 : vector<2x32xf32>
    %cst_77 = arith.constant 1.000000e+00 : f32
    %301 = vector.broadcast %cst_77 : f32 to vector<2x32xf32>
    %302 = arith.addf %301, %300 : vector<2x32xf32>
    %303 = arith.divf %301, %302 : vector<2x32xf32>
    %304 = vector.extract_strided_slice %291 {offsets = [0, 64], sizes = [2, 32], strides = [1, 1]} : vector<2x128xf32> to vector<2x32xf32>
    %305 = math.tanh %304 : vector<2x32xf32>
    %306 = vector.extract_strided_slice %291 {offsets = [0, 96], sizes = [2, 32], strides = [1, 1]} : vector<2x128xf32> to vector<2x32xf32>
    %307 = arith.negf %306 : vector<2x32xf32>
    %308 = math.exp %307 : vector<2x32xf32>
    %cst_78 = arith.constant 1.000000e+00 : f32
    %309 = vector.broadcast %cst_78 : f32 to vector<2x32xf32>
    %310 = arith.addf %309, %308 : vector<2x32xf32>
    %311 = arith.divf %309, %310 : vector<2x32xf32>
    %312 = arith.mulf %303, %254 : vector<2x32xf32>
    %313 = arith.mulf %297, %305 : vector<2x32xf32>
    %314 = arith.addf %312, %313 : vector<2x32xf32>
    %315 = math.tanh %314 : vector<2x32xf32>
    %316 = arith.mulf %311, %315 : vector<2x32xf32>
    %c8_79 = arith.constant 8 : index
    %c0_80 = arith.constant 0 : index
    %317 = vector.load %arg13[%c8_79, %c0_80] : memref<16x32xf32, #tpu.memory_space<vmem>>, vector<2x32xf32>
    tpu.vector_store %arg13[%c8_79, %c0_80], %290 {strides = array<i32>} : memref<16x32xf32, #tpu.memory_space<vmem>>, vector<2x32xf32>,
    %c6_81 = arith.constant 6 : index
    %c0_82 = arith.constant 0 : index
    %318 = vector.load %arg14[%c6_81, %c0_82] : memref<16x32xf32, #tpu.memory_space<vmem>>, vector<2x32xf32>
    tpu.vector_store %arg14[%c6_81, %c0_82], %316 {strides = array<i32>} : memref<16x32xf32, #tpu.memory_space<vmem>>, vector<2x32xf32>,
    %c10_83 = arith.constant 10 : index
    %c0_84 = arith.constant 0 : index
    %319 = vector.load %arg12[%c10_83, %c0_84] : memref<16x256xf32, #tpu.memory_space<vmem>>, vector<2x128xf32>
    %c4_85 = arith.constant 4 : index
    %c128_86 = arith.constant 128 : index
    %320 = vector.load %arg12[%c4_85, %c128_86] : memref<16x256xf32, #tpu.memory_space<vmem>>, vector<2x128xf32>
    %321 = tpu.concatenate %319, %320 in 1 : vector<2x128xf32>, vector<2x128xf32> -> vector<2x256xf32>
    %322 = tpu.concatenate %290, %316 in 1 : vector<2x32xf32>, vector<2x32xf32> -> vector<2x64xf32>
    %cst_87 = arith.constant dense<0.000000e+00> : vector<2x256xf32>
    %323 = tpu.matmul %322, %14, %cst_87 {dimension_numbers = #tpu.dot_dimension_numbers<[1], [0], [0], [1], [0, 0, 1, 1], [], []>} : vector<2x64xf32>, vector<64x256xf32>, vector<2x256xf32> -> vector<2x256xf32>
    %324 = arith.addf %321, %323 : vector<2x256xf32>
    %325 = vector.extract_strided_slice %324 {offsets = [0, 0], sizes = [2, 128], strides = [1, 1]} : vector<2x256xf32> to vector<2x128xf32>
    %326 = vector.extract_strided_slice %325 {offsets = [0, 0], sizes = [2, 32], strides = [1, 1]} : vector<2x128xf32> to vector<2x32xf32>
    %327 = arith.negf %326 : vector<2x32xf32>
    %328 = math.exp %327 : vector<2x32xf32>
    %cst_88 = arith.constant 1.000000e+00 : f32
    %329 = vector.broadcast %cst_88 : f32 to vector<2x32xf32>
    %330 = arith.addf %329, %328 : vector<2x32xf32>
    %331 = arith.divf %329, %330 : vector<2x32xf32>
    %332 = vector.extract_strided_slice %325 {offsets = [0, 32], sizes = [2, 32], strides = [1, 1]} : vector<2x128xf32> to vector<2x32xf32>
    %333 = arith.negf %332 : vector<2x32xf32>
    %334 = math.exp %333 : vector<2x32xf32>
    %cst_89 = arith.constant 1.000000e+00 : f32
    %335 = vector.broadcast %cst_89 : f32 to vector<2x32xf32>
    %336 = arith.addf %335, %334 : vector<2x32xf32>
    %337 = arith.divf %335, %336 : vector<2x32xf32>
    %338 = vector.extract_strided_slice %325 {offsets = [0, 64], sizes = [2, 32], strides = [1, 1]} : vector<2x128xf32> to vector<2x32xf32>
    %339 = math.tanh %338 : vector<2x32xf32>
    %340 = vector.extract_strided_slice %325 {offsets = [0, 96], sizes = [2, 32], strides = [1, 1]} : vector<2x128xf32> to vector<2x32xf32>
    %341 = arith.negf %340 : vector<2x32xf32>
    %342 = math.exp %341 : vector<2x32xf32>
    %cst_90 = arith.constant 1.000000e+00 : f32
    %343 = vector.broadcast %cst_90 : f32 to vector<2x32xf32>
    %344 = arith.addf %343, %342 : vector<2x32xf32>
    %345 = arith.divf %343, %344 : vector<2x32xf32>
    %346 = arith.mulf %337, %288 : vector<2x32xf32>
    %347 = arith.mulf %331, %339 : vector<2x32xf32>
    %348 = arith.addf %346, %347 : vector<2x32xf32>
    %349 = math.tanh %348 : vector<2x32xf32>
    %350 = arith.mulf %345, %349 : vector<2x32xf32>
    %351 = vector.extract_strided_slice %324 {offsets = [0, 128], sizes = [2, 128], strides = [1, 1]} : vector<2x256xf32> to vector<2x128xf32>
    %352 = vector.extract_strided_slice %351 {offsets = [0, 0], sizes = [2, 32], strides = [1, 1]} : vector<2x128xf32> to vector<2x32xf32>
    %353 = arith.negf %352 : vector<2x32xf32>
    %354 = math.exp %353 : vector<2x32xf32>
    %cst_91 = arith.constant 1.000000e+00 : f32
    %355 = vector.broadcast %cst_91 : f32 to vector<2x32xf32>
    %356 = arith.addf %355, %354 : vector<2x32xf32>
    %357 = arith.divf %355, %356 : vector<2x32xf32>
    %358 = vector.extract_strided_slice %351 {offsets = [0, 32], sizes = [2, 32], strides = [1, 1]} : vector<2x128xf32> to vector<2x32xf32>
    %359 = arith.negf %358 : vector<2x32xf32>
    %360 = math.exp %359 : vector<2x32xf32>
    %cst_92 = arith.constant 1.000000e+00 : f32
    %361 = vector.broadcast %cst_92 : f32 to vector<2x32xf32>
    %362 = arith.addf %361, %360 : vector<2x32xf32>
    %363 = arith.divf %361, %362 : vector<2x32xf32>
    %364 = vector.extract_strided_slice %351 {offsets = [0, 64], sizes = [2, 32], strides = [1, 1]} : vector<2x128xf32> to vector<2x32xf32>
    %365 = math.tanh %364 : vector<2x32xf32>
    %366 = vector.extract_strided_slice %351 {offsets = [0, 96], sizes = [2, 32], strides = [1, 1]} : vector<2x128xf32> to vector<2x32xf32>
    %367 = arith.negf %366 : vector<2x32xf32>
    %368 = math.exp %367 : vector<2x32xf32>
    %cst_93 = arith.constant 1.000000e+00 : f32
    %369 = vector.broadcast %cst_93 : f32 to vector<2x32xf32>
    %370 = arith.addf %369, %368 : vector<2x32xf32>
    %371 = arith.divf %369, %370 : vector<2x32xf32>
    %372 = arith.mulf %363, %314 : vector<2x32xf32>
    %373 = arith.mulf %357, %365 : vector<2x32xf32>
    %374 = arith.addf %372, %373 : vector<2x32xf32>
    %375 = math.tanh %374 : vector<2x32xf32>
    %376 = arith.mulf %371, %375 : vector<2x32xf32>
    %c10_94 = arith.constant 10 : index
    %c0_95 = arith.constant 0 : index
    %377 = vector.load %arg13[%c10_94, %c0_95] : memref<16x32xf32, #tpu.memory_space<vmem>>, vector<2x32xf32>
    tpu.vector_store %arg13[%c10_94, %c0_95], %350 {strides = array<i32>} : memref<16x32xf32, #tpu.memory_space<vmem>>, vector<2x32xf32>,
    %c4_96 = arith.constant 4 : index
    %c0_97 = arith.constant 0 : index
    %378 = vector.load %arg14[%c4_96, %c0_97] : memref<16x32xf32, #tpu.memory_space<vmem>>, vector<2x32xf32>
    tpu.vector_store %arg14[%c4_96, %c0_97], %376 {strides = array<i32>} : memref<16x32xf32, #tpu.memory_space<vmem>>, vector<2x32xf32>,
    %c12_98 = arith.constant 12 : index
    %c0_99 = arith.constant 0 : index
    %379 = vector.load %arg12[%c12_98, %c0_99] : memref<16x256xf32, #tpu.memory_space<vmem>>, vector<2x128xf32>
    %c2_100 = arith.constant 2 : index
    %c128_101 = arith.constant 128 : index
    %380 = vector.load %arg12[%c2_100, %c128_101] : memref<16x256xf32, #tpu.memory_space<vmem>>, vector<2x128xf32>
    %381 = tpu.concatenate %379, %380 in 1 : vector<2x128xf32>, vector<2x128xf32> -> vector<2x256xf32>
    %382 = tpu.concatenate %350, %376 in 1 : vector<2x32xf32>, vector<2x32xf32> -> vector<2x64xf32>
    %cst_102 = arith.constant dense<0.000000e+00> : vector<2x256xf32>
    %383 = tpu.matmul %382, %14, %cst_102 {dimension_numbers = #tpu.dot_dimension_numbers<[1], [0], [0], [1], [0, 0, 1, 1], [], []>} : vector<2x64xf32>, vector<64x256xf32>, vector<2x256xf32> -> vector<2x256xf32>
    %384 = arith.addf %381, %383 : vector<2x256xf32>
    %385 = vector.extract_strided_slice %384 {offsets = [0, 0], sizes = [2, 128], strides = [1, 1]} : vector<2x256xf32> to vector<2x128xf32>
    %386 = vector.extract_strided_slice %385 {offsets = [0, 0], sizes = [2, 32], strides = [1, 1]} : vector<2x128xf32> to vector<2x32xf32>
    %387 = arith.negf %386 : vector<2x32xf32>
    %388 = math.exp %387 : vector<2x32xf32>
    %cst_103 = arith.constant 1.000000e+00 : f32
    %389 = vector.broadcast %cst_103 : f32 to vector<2x32xf32>
    %390 = arith.addf %389, %388 : vector<2x32xf32>
    %391 = arith.divf %389, %390 : vector<2x32xf32>
    %392 = vector.extract_strided_slice %385 {offsets = [0, 32], sizes = [2, 32], strides = [1, 1]} : vector<2x128xf32> to vector<2x32xf32>
    %393 = arith.negf %392 : vector<2x32xf32>
    %394 = math.exp %393 : vector<2x32xf32>
    %cst_104 = arith.constant 1.000000e+00 : f32
    %395 = vector.broadcast %cst_104 : f32 to vector<2x32xf32>
    %396 = arith.addf %395, %394 : vector<2x32xf32>
    %397 = arith.divf %395, %396 : vector<2x32xf32>
    %398 = vector.extract_strided_slice %385 {offsets = [0, 64], sizes = [2, 32], strides = [1, 1]} : vector<2x128xf32> to vector<2x32xf32>
    %399 = math.tanh %398 : vector<2x32xf32>
    %400 = vector.extract_strided_slice %385 {offsets = [0, 96], sizes = [2, 32], strides = [1, 1]} : vector<2x128xf32> to vector<2x32xf32>
    %401 = arith.negf %400 : vector<2x32xf32>
    %402 = math.exp %401 : vector<2x32xf32>
    %cst_105 = arith.constant 1.000000e+00 : f32
    %403 = vector.broadcast %cst_105 : f32 to vector<2x32xf32>
    %404 = arith.addf %403, %402 : vector<2x32xf32>
    %405 = arith.divf %403, %404 : vector<2x32xf32>
    %406 = arith.mulf %397, %348 : vector<2x32xf32>
    %407 = arith.mulf %391, %399 : vector<2x32xf32>
    %408 = arith.addf %406, %407 : vector<2x32xf32>
    %409 = math.tanh %408 : vector<2x32xf32>
    %410 = arith.mulf %405, %409 : vector<2x32xf32>
    %411 = vector.extract_strided_slice %384 {offsets = [0, 128], sizes = [2, 128], strides = [1, 1]} : vector<2x256xf32> to vector<2x128xf32>
    %412 = vector.extract_strided_slice %411 {offsets = [0, 0], sizes = [2, 32], strides = [1, 1]} : vector<2x128xf32> to vector<2x32xf32>
    %413 = arith.negf %412 : vector<2x32xf32>
    %414 = math.exp %413 : vector<2x32xf32>
    %cst_106 = arith.constant 1.000000e+00 : f32
    %415 = vector.broadcast %cst_106 : f32 to vector<2x32xf32>
    %416 = arith.addf %415, %414 : vector<2x32xf32>
    %417 = arith.divf %415, %416 : vector<2x32xf32>
    %418 = vector.extract_strided_slice %411 {offsets = [0, 32], sizes = [2, 32], strides = [1, 1]} : vector<2x128xf32> to vector<2x32xf32>
    %419 = arith.negf %418 : vector<2x32xf32>
    %420 = math.exp %419 : vector<2x32xf32>
    %cst_107 = arith.constant 1.000000e+00 : f32
    %421 = vector.broadcast %cst_107 : f32 to vector<2x32xf32>
    %422 = arith.addf %421, %420 : vector<2x32xf32>
    %423 = arith.divf %421, %422 : vector<2x32xf32>
    %424 = vector.extract_strided_slice %411 {offsets = [0, 64], sizes = [2, 32], strides = [1, 1]} : vector<2x128xf32> to vector<2x32xf32>
    %425 = math.tanh %424 : vector<2x32xf32>
    %426 = vector.extract_strided_slice %411 {offsets = [0, 96], sizes = [2, 32], strides = [1, 1]} : vector<2x128xf32> to vector<2x32xf32>
    %427 = arith.negf %426 : vector<2x32xf32>
    %428 = math.exp %427 : vector<2x32xf32>
    %cst_108 = arith.constant 1.000000e+00 : f32
    %429 = vector.broadcast %cst_108 : f32 to vector<2x32xf32>
    %430 = arith.addf %429, %428 : vector<2x32xf32>
    %431 = arith.divf %429, %430 : vector<2x32xf32>
    %432 = arith.mulf %423, %374 : vector<2x32xf32>
    %433 = arith.mulf %417, %425 : vector<2x32xf32>
    %434 = arith.addf %432, %433 : vector<2x32xf32>
    %435 = math.tanh %434 : vector<2x32xf32>
    %436 = arith.mulf %431, %435 : vector<2x32xf32>
    %c12_109 = arith.constant 12 : index
    %c0_110 = arith.constant 0 : index
    %437 = vector.load %arg13[%c12_109, %c0_110] : memref<16x32xf32, #tpu.memory_space<vmem>>, vector<2x32xf32>
    tpu.vector_store %arg13[%c12_109, %c0_110], %410 {strides = array<i32>} : memref<16x32xf32, #tpu.memory_space<vmem>>, vector<2x32xf32>,
    %c2_111 = arith.constant 2 : index
    %c0_112 = arith.constant 0 : index
    %438 = vector.load %arg14[%c2_111, %c0_112] : memref<16x32xf32, #tpu.memory_space<vmem>>, vector<2x32xf32>
    tpu.vector_store %arg14[%c2_111, %c0_112], %436 {strides = array<i32>} : memref<16x32xf32, #tpu.memory_space<vmem>>, vector<2x32xf32>,
    %c14_113 = arith.constant 14 : index
    %c0_114 = arith.constant 0 : index
    %439 = vector.load %arg12[%c14_113, %c0_114] : memref<16x256xf32, #tpu.memory_space<vmem>>, vector<2x128xf32>
    %c0_115 = arith.constant 0 : index
    %c128_116 = arith.constant 128 : index
    %440 = vector.load %arg12[%c0_115, %c128_116] : memref<16x256xf32, #tpu.memory_space<vmem>>, vector<2x128xf32>
    %441 = tpu.concatenate %439, %440 in 1 : vector<2x128xf32>, vector<2x128xf32> -> vector<2x256xf32>
    %442 = tpu.concatenate %410, %436 in 1 : vector<2x32xf32>, vector<2x32xf32> -> vector<2x64xf32>
    %cst_117 = arith.constant dense<0.000000e+00> : vector<2x256xf32>
    %443 = tpu.matmul %442, %14, %cst_117 {dimension_numbers = #tpu.dot_dimension_numbers<[1], [0], [0], [1], [0, 0, 1, 1], [], []>} : vector<2x64xf32>, vector<64x256xf32>, vector<2x256xf32> -> vector<2x256xf32>
    %444 = arith.addf %441, %443 : vector<2x256xf32>
    %445 = vector.extract_strided_slice %444 {offsets = [0, 0], sizes = [2, 128], strides = [1, 1]} : vector<2x256xf32> to vector<2x128xf32>
    %446 = vector.extract_strided_slice %445 {offsets = [0, 0], sizes = [2, 32], strides = [1, 1]} : vector<2x128xf32> to vector<2x32xf32>
    %447 = arith.negf %446 : vector<2x32xf32>
    %448 = math.exp %447 : vector<2x32xf32>
    %cst_118 = arith.constant 1.000000e+00 : f32
    %449 = vector.broadcast %cst_118 : f32 to vector<2x32xf32>
    %450 = arith.addf %449, %448 : vector<2x32xf32>
    %451 = arith.divf %449, %450 : vector<2x32xf32>
    %452 = vector.extract_strided_slice %445 {offsets = [0, 32], sizes = [2, 32], strides = [1, 1]} : vector<2x128xf32> to vector<2x32xf32>
    %453 = arith.negf %452 : vector<2x32xf32>
    %454 = math.exp %453 : vector<2x32xf32>
    %cst_119 = arith.constant 1.000000e+00 : f32
    %455 = vector.broadcast %cst_119 : f32 to vector<2x32xf32>
    %456 = arith.addf %455, %454 : vector<2x32xf32>
    %457 = arith.divf %455, %456 : vector<2x32xf32>
    %458 = vector.extract_strided_slice %445 {offsets = [0, 64], sizes = [2, 32], strides = [1, 1]} : vector<2x128xf32> to vector<2x32xf32>
    %459 = math.tanh %458 : vector<2x32xf32>
    %460 = vector.extract_strided_slice %445 {offsets = [0, 96], sizes = [2, 32], strides = [1, 1]} : vector<2x128xf32> to vector<2x32xf32>
    %461 = arith.negf %460 : vector<2x32xf32>
    %462 = math.exp %461 : vector<2x32xf32>
    %cst_120 = arith.constant 1.000000e+00 : f32
    %463 = vector.broadcast %cst_120 : f32 to vector<2x32xf32>
    %464 = arith.addf %463, %462 : vector<2x32xf32>
    %465 = arith.divf %463, %464 : vector<2x32xf32>
    %466 = arith.mulf %457, %408 : vector<2x32xf32>
    %467 = arith.mulf %451, %459 : vector<2x32xf32>
    %468 = arith.addf %466, %467 : vector<2x32xf32>
    %469 = math.tanh %468 : vector<2x32xf32>
    %470 = arith.mulf %465, %469 : vector<2x32xf32>
    %471 = vector.extract_strided_slice %444 {offsets = [0, 128], sizes = [2, 128], strides = [1, 1]} : vector<2x256xf32> to vector<2x128xf32>
    %472 = vector.extract_strided_slice %471 {offsets = [0, 0], sizes = [2, 32], strides = [1, 1]} : vector<2x128xf32> to vector<2x32xf32>
    %473 = arith.negf %472 : vector<2x32xf32>
    %474 = math.exp %473 : vector<2x32xf32>
    %cst_121 = arith.constant 1.000000e+00 : f32
    %475 = vector.broadcast %cst_121 : f32 to vector<2x32xf32>
    %476 = arith.addf %475, %474 : vector<2x32xf32>
    %477 = arith.divf %475, %476 : vector<2x32xf32>
    %478 = vector.extract_strided_slice %471 {offsets = [0, 32], sizes = [2, 32], strides = [1, 1]} : vector<2x128xf32> to vector<2x32xf32>
    %479 = arith.negf %478 : vector<2x32xf32>
    %480 = math.exp %479 : vector<2x32xf32>
    %cst_122 = arith.constant 1.000000e+00 : f32
    %481 = vector.broadcast %cst_122 : f32 to vector<2x32xf32>
    %482 = arith.addf %481, %480 : vector<2x32xf32>
    %483 = arith.divf %481, %482 : vector<2x32xf32>
    %484 = vector.extract_strided_slice %471 {offsets = [0, 64], sizes = [2, 32], strides = [1, 1]} : vector<2x128xf32> to vector<2x32xf32>
    %485 = math.tanh %484 : vector<2x32xf32>
    %486 = vector.extract_strided_slice %471 {offsets = [0, 96], sizes = [2, 32], strides = [1, 1]} : vector<2x128xf32> to vector<2x32xf32>
    %487 = arith.negf %486 : vector<2x32xf32>
    %488 = math.exp %487 : vector<2x32xf32>
    %cst_123 = arith.constant 1.000000e+00 : f32
    %489 = vector.broadcast %cst_123 : f32 to vector<2x32xf32>
    %490 = arith.addf %489, %488 : vector<2x32xf32>
    %491 = arith.divf %489, %490 : vector<2x32xf32>
    %492 = arith.mulf %483, %434 : vector<2x32xf32>
    %493 = arith.mulf %477, %485 : vector<2x32xf32>
    %494 = arith.addf %492, %493 : vector<2x32xf32>
    %495 = math.tanh %494 : vector<2x32xf32>
    %496 = arith.mulf %491, %495 : vector<2x32xf32>
    %c14_124 = arith.constant 14 : index
    %c0_125 = arith.constant 0 : index
    %497 = vector.load %arg13[%c14_124, %c0_125] : memref<16x32xf32, #tpu.memory_space<vmem>>, vector<2x32xf32>
    tpu.vector_store %arg13[%c14_124, %c0_125], %470 {strides = array<i32>} : memref<16x32xf32, #tpu.memory_space<vmem>>, vector<2x32xf32>,
    %c0_126 = arith.constant 0 : index
    %c0_127 = arith.constant 0 : index
    %498 = vector.load %arg14[%c0_126, %c0_127] : memref<16x32xf32, #tpu.memory_space<vmem>>, vector<2x32xf32>
    tpu.vector_store %arg14[%c0_126, %c0_127], %496 {strides = array<i32>} : memref<16x32xf32, #tpu.memory_space<vmem>>, vector<2x32xf32>,
    %c0_128 = arith.constant 0 : index
    %c0_129 = arith.constant 0 : index
    %499 = vector.load %arg13[%c0_128, %c0_129] : memref<16x32xf32, #tpu.memory_space<vmem>>, vector<16x32xf32>
    %c0_130 = arith.constant 0 : index
    %c0_131 = arith.constant 0 : index
    %500 = vector.load %arg14[%c0_130, %c0_131] : memref<16x32xf32, #tpu.memory_space<vmem>>, vector<16x32xf32>
    %501 = tpu.concatenate %499, %500 in 1 : vector<16x32xf32>, vector<16x32xf32> -> vector<16x64xf32>
    %c0_132 = arith.constant 0 : index
    %c0_133 = arith.constant 0 : index
    %502 = vector.load %arg6[%c0_132, %c0_133] : memref<64x256xf32, #tpu.memory_space<vmem>>, vector<64x256xf32>
    %cst_134 = arith.constant dense<0.000000e+00> : vector<16x256xf32>
    %503 = tpu.matmul %501, %502, %cst_134 {dimension_numbers = #tpu.dot_dimension_numbers<[1], [0], [0], [1], [0, 0, 1, 1], [], []>} : vector<16x64xf32>, vector<64x256xf32>, vector<16x256xf32> -> vector<16x256xf32>
    %c0_135 = arith.constant 0 : index
    %c0_136 = arith.constant 0 : index
    %504 = vector.load %arg7[%c0_135, %c0_136] : memref<1x256xf32, #tpu.memory_space<vmem>>, vector<1x256xf32>
    %505 = vector.broadcast %504 : vector<1x256xf32> to vector<16x256xf32>
    %506 = arith.addf %503, %505 : vector<16x256xf32>
    %c0_137 = arith.constant 0 : index
    %c0_138 = arith.constant 0 : index
    %507 = vector.load %arg12[%c0_137, %c0_138] : memref<16x256xf32, #tpu.memory_space<vmem>>, vector<16x256xf32>
    tpu.vector_store %arg12[%c0_137, %c0_138], %506 {strides = array<i32>} : memref<16x256xf32, #tpu.memory_space<vmem>>, vector<16x256xf32>,
    %c0_139 = arith.constant 0 : index
    %c0_140 = arith.constant 0 : index
    %508 = vector.load %arg8[%c0_139, %c0_140] : memref<64x256xf32, #tpu.memory_space<vmem>>, vector<64x256xf32>
    %cst_141 = arith.constant 0.000000e+00 : f32
    %509 = vector.broadcast %cst_141 : f32 to vector<2x32xf32>
    %cst_142 = arith.constant 0.000000e+00 : f32
    %510 = vector.broadcast %cst_142 : f32 to vector<2x32xf32>
    %cst_143 = arith.constant 0.000000e+00 : f32
    %511 = vector.broadcast %cst_143 : f32 to vector<2x32xf32>
    %cst_144 = arith.constant 0.000000e+00 : f32
    %512 = vector.broadcast %cst_144 : f32 to vector<2x32xf32>
    %c0_145 = arith.constant 0 : index
    %c0_146 = arith.constant 0 : index
    %513 = vector.load %arg12[%c0_145, %c0_146] : memref<16x256xf32, #tpu.memory_space<vmem>>, vector<2x128xf32>
    %c14_147 = arith.constant 14 : index
    %c128_148 = arith.constant 128 : index
    %514 = vector.load %arg12[%c14_147, %c128_148] : memref<16x256xf32, #tpu.memory_space<vmem>>, vector<2x128xf32>
    %515 = tpu.concatenate %513, %514 in 1 : vector<2x128xf32>, vector<2x128xf32> -> vector<2x256xf32>
    %516 = tpu.concatenate %509, %510 in 1 : vector<2x32xf32>, vector<2x32xf32> -> vector<2x64xf32>
    %cst_149 = arith.constant dense<0.000000e+00> : vector<2x256xf32>
    %517 = tpu.matmul %516, %508, %cst_149 {dimension_numbers = #tpu.dot_dimension_numbers<[1], [0], [0], [1], [0, 0, 1, 1], [], []>} : vector<2x64xf32>, vector<64x256xf32>, vector<2x256xf32> -> vector<2x256xf32>
    %518 = arith.addf %515, %517 : vector<2x256xf32>
    %519 = vector.extract_strided_slice %518 {offsets = [0, 0], sizes = [2, 128], strides = [1, 1]} : vector<2x256xf32> to vector<2x128xf32>
    %520 = vector.extract_strided_slice %519 {offsets = [0, 0], sizes = [2, 32], strides = [1, 1]} : vector<2x128xf32> to vector<2x32xf32>
    %521 = arith.negf %520 : vector<2x32xf32>
    %522 = math.exp %521 : vector<2x32xf32>
    %cst_150 = arith.constant 1.000000e+00 : f32
    %523 = vector.broadcast %cst_150 : f32 to vector<2x32xf32>
    %524 = arith.addf %523, %522 : vector<2x32xf32>
    %525 = arith.divf %523, %524 : vector<2x32xf32>
    %526 = vector.extract_strided_slice %519 {offsets = [0, 32], sizes = [2, 32], strides = [1, 1]} : vector<2x128xf32> to vector<2x32xf32>
    %527 = arith.negf %526 : vector<2x32xf32>
    %528 = math.exp %527 : vector<2x32xf32>
    %cst_151 = arith.constant 1.000000e+00 : f32
    %529 = vector.broadcast %cst_151 : f32 to vector<2x32xf32>
    %530 = arith.addf %529, %528 : vector<2x32xf32>
    %531 = arith.divf %529, %530 : vector<2x32xf32>
    %532 = vector.extract_strided_slice %519 {offsets = [0, 64], sizes = [2, 32], strides = [1, 1]} : vector<2x128xf32> to vector<2x32xf32>
    %533 = math.tanh %532 : vector<2x32xf32>
    %534 = vector.extract_strided_slice %519 {offsets = [0, 96], sizes = [2, 32], strides = [1, 1]} : vector<2x128xf32> to vector<2x32xf32>
    %535 = arith.negf %534 : vector<2x32xf32>
    %536 = math.exp %535 : vector<2x32xf32>
    %cst_152 = arith.constant 1.000000e+00 : f32
    %537 = vector.broadcast %cst_152 : f32 to vector<2x32xf32>
    %538 = arith.addf %537, %536 : vector<2x32xf32>
    %539 = arith.divf %537, %538 : vector<2x32xf32>
    %540 = arith.mulf %531, %511 : vector<2x32xf32>
    %541 = arith.mulf %525, %533 : vector<2x32xf32>
    %542 = arith.addf %540, %541 : vector<2x32xf32>
    %543 = math.tanh %542 : vector<2x32xf32>
    %544 = arith.mulf %539, %543 : vector<2x32xf32>
    %545 = vector.extract_strided_slice %518 {offsets = [0, 128], sizes = [2, 128], strides = [1, 1]} : vector<2x256xf32> to vector<2x128xf32>
    %546 = vector.extract_strided_slice %545 {offsets = [0, 0], sizes = [2, 32], strides = [1, 1]} : vector<2x128xf32> to vector<2x32xf32>
    %547 = arith.negf %546 : vector<2x32xf32>
    %548 = math.exp %547 : vector<2x32xf32>
    %cst_153 = arith.constant 1.000000e+00 : f32
    %549 = vector.broadcast %cst_153 : f32 to vector<2x32xf32>
    %550 = arith.addf %549, %548 : vector<2x32xf32>
    %551 = arith.divf %549, %550 : vector<2x32xf32>
    %552 = vector.extract_strided_slice %545 {offsets = [0, 32], sizes = [2, 32], strides = [1, 1]} : vector<2x128xf32> to vector<2x32xf32>
    %553 = arith.negf %552 : vector<2x32xf32>
    %554 = math.exp %553 : vector<2x32xf32>
    %cst_154 = arith.constant 1.000000e+00 : f32
    %555 = vector.broadcast %cst_154 : f32 to vector<2x32xf32>
    %556 = arith.addf %555, %554 : vector<2x32xf32>
    %557 = arith.divf %555, %556 : vector<2x32xf32>
    %558 = vector.extract_strided_slice %545 {offsets = [0, 64], sizes = [2, 32], strides = [1, 1]} : vector<2x128xf32> to vector<2x32xf32>
    %559 = math.tanh %558 : vector<2x32xf32>
    %560 = vector.extract_strided_slice %545 {offsets = [0, 96], sizes = [2, 32], strides = [1, 1]} : vector<2x128xf32> to vector<2x32xf32>
    %561 = arith.negf %560 : vector<2x32xf32>
    %562 = math.exp %561 : vector<2x32xf32>
    %cst_155 = arith.constant 1.000000e+00 : f32
    %563 = vector.broadcast %cst_155 : f32 to vector<2x32xf32>
    %564 = arith.addf %563, %562 : vector<2x32xf32>
    %565 = arith.divf %563, %564 : vector<2x32xf32>
    %566 = arith.mulf %557, %512 : vector<2x32xf32>
    %567 = arith.mulf %551, %559 : vector<2x32xf32>
    %568 = arith.addf %566, %567 : vector<2x32xf32>
    %569 = math.tanh %568 : vector<2x32xf32>
    %570 = arith.mulf %565, %569 : vector<2x32xf32>
    %c0_156 = arith.constant 0 : index
    %c0_157 = arith.constant 0 : index
    %571 = vector.load %arg15[%c0_156, %c0_157] : memref<16x32xf32, #tpu.memory_space<vmem>>, vector<2x32xf32>
    tpu.vector_store %arg15[%c0_156, %c0_157], %544 {strides = array<i32>} : memref<16x32xf32, #tpu.memory_space<vmem>>, vector<2x32xf32>,
    %c14_158 = arith.constant 14 : index
    %c0_159 = arith.constant 0 : index
    %572 = vector.load %arg16[%c14_158, %c0_159] : memref<16x32xf32, #tpu.memory_space<vmem>>, vector<2x32xf32>
    tpu.vector_store %arg16[%c14_158, %c0_159], %570 {strides = array<i32>} : memref<16x32xf32, #tpu.memory_space<vmem>>, vector<2x32xf32>,
    %c2_160 = arith.constant 2 : index
    %c0_161 = arith.constant 0 : index
    %573 = vector.load %arg12[%c2_160, %c0_161] : memref<16x256xf32, #tpu.memory_space<vmem>>, vector<2x128xf32>
    %c12_162 = arith.constant 12 : index
    %c128_163 = arith.constant 128 : index
    %574 = vector.load %arg12[%c12_162, %c128_163] : memref<16x256xf32, #tpu.memory_space<vmem>>, vector<2x128xf32>
    %575 = tpu.concatenate %573, %574 in 1 : vector<2x128xf32>, vector<2x128xf32> -> vector<2x256xf32>
    %576 = tpu.concatenate %544, %570 in 1 : vector<2x32xf32>, vector<2x32xf32> -> vector<2x64xf32>
    %cst_164 = arith.constant dense<0.000000e+00> : vector<2x256xf32>
    %577 = tpu.matmul %576, %508, %cst_164 {dimension_numbers = #tpu.dot_dimension_numbers<[1], [0], [0], [1], [0, 0, 1, 1], [], []>} : vector<2x64xf32>, vector<64x256xf32>, vector<2x256xf32> -> vector<2x256xf32>
    %578 = arith.addf %575, %577 : vector<2x256xf32>
    %579 = vector.extract_strided_slice %578 {offsets = [0, 0], sizes = [2, 128], strides = [1, 1]} : vector<2x256xf32> to vector<2x128xf32>
    %580 = vector.extract_strided_slice %579 {offsets = [0, 0], sizes = [2, 32], strides = [1, 1]} : vector<2x128xf32> to vector<2x32xf32>
    %581 = arith.negf %580 : vector<2x32xf32>
    %582 = math.exp %581 : vector<2x32xf32>
    %cst_165 = arith.constant 1.000000e+00 : f32
    %583 = vector.broadcast %cst_165 : f32 to vector<2x32xf32>
    %584 = arith.addf %583, %582 : vector<2x32xf32>
    %585 = arith.divf %583, %584 : vector<2x32xf32>
    %586 = vector.extract_strided_slice %579 {offsets = [0, 32], sizes = [2, 32], strides = [1, 1]} : vector<2x128xf32> to vector<2x32xf32>
    %587 = arith.negf %586 : vector<2x32xf32>
    %588 = math.exp %587 : vector<2x32xf32>
    %cst_166 = arith.constant 1.000000e+00 : f32
    %589 = vector.broadcast %cst_166 : f32 to vector<2x32xf32>
    %590 = arith.addf %589, %588 : vector<2x32xf32>
    %591 = arith.divf %589, %590 : vector<2x32xf32>
    %592 = vector.extract_strided_slice %579 {offsets = [0, 64], sizes = [2, 32], strides = [1, 1]} : vector<2x128xf32> to vector<2x32xf32>
    %593 = math.tanh %592 : vector<2x32xf32>
    %594 = vector.extract_strided_slice %579 {offsets = [0, 96], sizes = [2, 32], strides = [1, 1]} : vector<2x128xf32> to vector<2x32xf32>
    %595 = arith.negf %594 : vector<2x32xf32>
    %596 = math.exp %595 : vector<2x32xf32>
    %cst_167 = arith.constant 1.000000e+00 : f32
    %597 = vector.broadcast %cst_167 : f32 to vector<2x32xf32>
    %598 = arith.addf %597, %596 : vector<2x32xf32>
    %599 = arith.divf %597, %598 : vector<2x32xf32>
    %600 = arith.mulf %591, %542 : vector<2x32xf32>
    %601 = arith.mulf %585, %593 : vector<2x32xf32>
    %602 = arith.addf %600, %601 : vector<2x32xf32>
    %603 = math.tanh %602 : vector<2x32xf32>
    %604 = arith.mulf %599, %603 : vector<2x32xf32>
    %605 = vector.extract_strided_slice %578 {offsets = [0, 128], sizes = [2, 128], strides = [1, 1]} : vector<2x256xf32> to vector<2x128xf32>
    %606 = vector.extract_strided_slice %605 {offsets = [0, 0], sizes = [2, 32], strides = [1, 1]} : vector<2x128xf32> to vector<2x32xf32>
    %607 = arith.negf %606 : vector<2x32xf32>
    %608 = math.exp %607 : vector<2x32xf32>
    %cst_168 = arith.constant 1.000000e+00 : f32
    %609 = vector.broadcast %cst_168 : f32 to vector<2x32xf32>
    %610 = arith.addf %609, %608 : vector<2x32xf32>
    %611 = arith.divf %609, %610 : vector<2x32xf32>
    %612 = vector.extract_strided_slice %605 {offsets = [0, 32], sizes = [2, 32], strides = [1, 1]} : vector<2x128xf32> to vector<2x32xf32>
    %613 = arith.negf %612 : vector<2x32xf32>
    %614 = math.exp %613 : vector<2x32xf32>
    %cst_169 = arith.constant 1.000000e+00 : f32
    %615 = vector.broadcast %cst_169 : f32 to vector<2x32xf32>
    %616 = arith.addf %615, %614 : vector<2x32xf32>
    %617 = arith.divf %615, %616 : vector<2x32xf32>
    %618 = vector.extract_strided_slice %605 {offsets = [0, 64], sizes = [2, 32], strides = [1, 1]} : vector<2x128xf32> to vector<2x32xf32>
    %619 = math.tanh %618 : vector<2x32xf32>
    %620 = vector.extract_strided_slice %605 {offsets = [0, 96], sizes = [2, 32], strides = [1, 1]} : vector<2x128xf32> to vector<2x32xf32>
    %621 = arith.negf %620 : vector<2x32xf32>
    %622 = math.exp %621 : vector<2x32xf32>
    %cst_170 = arith.constant 1.000000e+00 : f32
    %623 = vector.broadcast %cst_170 : f32 to vector<2x32xf32>
    %624 = arith.addf %623, %622 : vector<2x32xf32>
    %625 = arith.divf %623, %624 : vector<2x32xf32>
    %626 = arith.mulf %617, %568 : vector<2x32xf32>
    %627 = arith.mulf %611, %619 : vector<2x32xf32>
    %628 = arith.addf %626, %627 : vector<2x32xf32>
    %629 = math.tanh %628 : vector<2x32xf32>
    %630 = arith.mulf %625, %629 : vector<2x32xf32>
    %c2_171 = arith.constant 2 : index
    %c0_172 = arith.constant 0 : index
    %631 = vector.load %arg15[%c2_171, %c0_172] : memref<16x32xf32, #tpu.memory_space<vmem>>, vector<2x32xf32>
    tpu.vector_store %arg15[%c2_171, %c0_172], %604 {strides = array<i32>} : memref<16x32xf32, #tpu.memory_space<vmem>>, vector<2x32xf32>,
    %c12_173 = arith.constant 12 : index
    %c0_174 = arith.constant 0 : index
    %632 = vector.load %arg16[%c12_173, %c0_174] : memref<16x32xf32, #tpu.memory_space<vmem>>, vector<2x32xf32>
    tpu.vector_store %arg16[%c12_173, %c0_174], %630 {strides = array<i32>} : memref<16x32xf32, #tpu.memory_space<vmem>>, vector<2x32xf32>,
    %c4_175 = arith.constant 4 : index
    %c0_176 = arith.constant 0 : index
    %633 = vector.load %arg12[%c4_175, %c0_176] : memref<16x256xf32, #tpu.memory_space<vmem>>, vector<2x128xf32>
    %c10_177 = arith.constant 10 : index
    %c128_178 = arith.constant 128 : index
    %634 = vector.load %arg12[%c10_177, %c128_178] : memref<16x256xf32, #tpu.memory_space<vmem>>, vector<2x128xf32>
    %635 = tpu.concatenate %633, %634 in 1 : vector<2x128xf32>, vector<2x128xf32> -> vector<2x256xf32>
    %636 = tpu.concatenate %604, %630 in 1 : vector<2x32xf32>, vector<2x32xf32> -> vector<2x64xf32>
    %cst_179 = arith.constant dense<0.000000e+00> : vector<2x256xf32>
    %637 = tpu.matmul %636, %508, %cst_179 {dimension_numbers = #tpu.dot_dimension_numbers<[1], [0], [0], [1], [0, 0, 1, 1], [], []>} : vector<2x64xf32>, vector<64x256xf32>, vector<2x256xf32> -> vector<2x256xf32>
    %638 = arith.addf %635, %637 : vector<2x256xf32>
    %639 = vector.extract_strided_slice %638 {offsets = [0, 0], sizes = [2, 128], strides = [1, 1]} : vector<2x256xf32> to vector<2x128xf32>
    %640 = vector.extract_strided_slice %639 {offsets = [0, 0], sizes = [2, 32], strides = [1, 1]} : vector<2x128xf32> to vector<2x32xf32>
    %641 = arith.negf %640 : vector<2x32xf32>
    %642 = math.exp %641 : vector<2x32xf32>
    %cst_180 = arith.constant 1.000000e+00 : f32
    %643 = vector.broadcast %cst_180 : f32 to vector<2x32xf32>
    %644 = arith.addf %643, %642 : vector<2x32xf32>
    %645 = arith.divf %643, %644 : vector<2x32xf32>
    %646 = vector.extract_strided_slice %639 {offsets = [0, 32], sizes = [2, 32], strides = [1, 1]} : vector<2x128xf32> to vector<2x32xf32>
    %647 = arith.negf %646 : vector<2x32xf32>
    %648 = math.exp %647 : vector<2x32xf32>
    %cst_181 = arith.constant 1.000000e+00 : f32
    %649 = vector.broadcast %cst_181 : f32 to vector<2x32xf32>
    %650 = arith.addf %649, %648 : vector<2x32xf32>
    %651 = arith.divf %649, %650 : vector<2x32xf32>
    %652 = vector.extract_strided_slice %639 {offsets = [0, 64], sizes = [2, 32], strides = [1, 1]} : vector<2x128xf32> to vector<2x32xf32>
    %653 = math.tanh %652 : vector<2x32xf32>
    %654 = vector.extract_strided_slice %639 {offsets = [0, 96], sizes = [2, 32], strides = [1, 1]} : vector<2x128xf32> to vector<2x32xf32>
    %655 = arith.negf %654 : vector<2x32xf32>
    %656 = math.exp %655 : vector<2x32xf32>
    %cst_182 = arith.constant 1.000000e+00 : f32
    %657 = vector.broadcast %cst_182 : f32 to vector<2x32xf32>
    %658 = arith.addf %657, %656 : vector<2x32xf32>
    %659 = arith.divf %657, %658 : vector<2x32xf32>
    %660 = arith.mulf %651, %602 : vector<2x32xf32>
    %661 = arith.mulf %645, %653 : vector<2x32xf32>
    %662 = arith.addf %660, %661 : vector<2x32xf32>
    %663 = math.tanh %662 : vector<2x32xf32>
    %664 = arith.mulf %659, %663 : vector<2x32xf32>
    %665 = vector.extract_strided_slice %638 {offsets = [0, 128], sizes = [2, 128], strides = [1, 1]} : vector<2x256xf32> to vector<2x128xf32>
    %666 = vector.extract_strided_slice %665 {offsets = [0, 0], sizes = [2, 32], strides = [1, 1]} : vector<2x128xf32> to vector<2x32xf32>
    %667 = arith.negf %666 : vector<2x32xf32>
    %668 = math.exp %667 : vector<2x32xf32>
    %cst_183 = arith.constant 1.000000e+00 : f32
    %669 = vector.broadcast %cst_183 : f32 to vector<2x32xf32>
    %670 = arith.addf %669, %668 : vector<2x32xf32>
    %671 = arith.divf %669, %670 : vector<2x32xf32>
    %672 = vector.extract_strided_slice %665 {offsets = [0, 32], sizes = [2, 32], strides = [1, 1]} : vector<2x128xf32> to vector<2x32xf32>
    %673 = arith.negf %672 : vector<2x32xf32>
    %674 = math.exp %673 : vector<2x32xf32>
    %cst_184 = arith.constant 1.000000e+00 : f32
    %675 = vector.broadcast %cst_184 : f32 to vector<2x32xf32>
    %676 = arith.addf %675, %674 : vector<2x32xf32>
    %677 = arith.divf %675, %676 : vector<2x32xf32>
    %678 = vector.extract_strided_slice %665 {offsets = [0, 64], sizes = [2, 32], strides = [1, 1]} : vector<2x128xf32> to vector<2x32xf32>
    %679 = math.tanh %678 : vector<2x32xf32>
    %680 = vector.extract_strided_slice %665 {offsets = [0, 96], sizes = [2, 32], strides = [1, 1]} : vector<2x128xf32> to vector<2x32xf32>
    %681 = arith.negf %680 : vector<2x32xf32>
    %682 = math.exp %681 : vector<2x32xf32>
    %cst_185 = arith.constant 1.000000e+00 : f32
    %683 = vector.broadcast %cst_185 : f32 to vector<2x32xf32>
    %684 = arith.addf %683, %682 : vector<2x32xf32>
    %685 = arith.divf %683, %684 : vector<2x32xf32>
    %686 = arith.mulf %677, %628 : vector<2x32xf32>
    %687 = arith.mulf %671, %679 : vector<2x32xf32>
    %688 = arith.addf %686, %687 : vector<2x32xf32>
    %689 = math.tanh %688 : vector<2x32xf32>
    %690 = arith.mulf %685, %689 : vector<2x32xf32>
    %c4_186 = arith.constant 4 : index
    %c0_187 = arith.constant 0 : index
    %691 = vector.load %arg15[%c4_186, %c0_187] : memref<16x32xf32, #tpu.memory_space<vmem>>, vector<2x32xf32>
    tpu.vector_store %arg15[%c4_186, %c0_187], %664 {strides = array<i32>} : memref<16x32xf32, #tpu.memory_space<vmem>>, vector<2x32xf32>,
    %c10_188 = arith.constant 10 : index
    %c0_189 = arith.constant 0 : index
    %692 = vector.load %arg16[%c10_188, %c0_189] : memref<16x32xf32, #tpu.memory_space<vmem>>, vector<2x32xf32>
    tpu.vector_store %arg16[%c10_188, %c0_189], %690 {strides = array<i32>} : memref<16x32xf32, #tpu.memory_space<vmem>>, vector<2x32xf32>,
    %c6_190 = arith.constant 6 : index
    %c0_191 = arith.constant 0 : index
    %693 = vector.load %arg12[%c6_190, %c0_191] : memref<16x256xf32, #tpu.memory_space<vmem>>, vector<2x128xf32>
    %c8_192 = arith.constant 8 : index
    %c128_193 = arith.constant 128 : index
    %694 = vector.load %arg12[%c8_192, %c128_193] : memref<16x256xf32, #tpu.memory_space<vmem>>, vector<2x128xf32>
    %695 = tpu.concatenate %693, %694 in 1 : vector<2x128xf32>, vector<2x128xf32> -> vector<2x256xf32>
    %696 = tpu.concatenate %664, %690 in 1 : vector<2x32xf32>, vector<2x32xf32> -> vector<2x64xf32>
    %cst_194 = arith.constant dense<0.000000e+00> : vector<2x256xf32>
    %697 = tpu.matmul %696, %508, %cst_194 {dimension_numbers = #tpu.dot_dimension_numbers<[1], [0], [0], [1], [0, 0, 1, 1], [], []>} : vector<2x64xf32>, vector<64x256xf32>, vector<2x256xf32> -> vector<2x256xf32>
    %698 = arith.addf %695, %697 : vector<2x256xf32>
    %699 = vector.extract_strided_slice %698 {offsets = [0, 0], sizes = [2, 128], strides = [1, 1]} : vector<2x256xf32> to vector<2x128xf32>
    %700 = vector.extract_strided_slice %699 {offsets = [0, 0], sizes = [2, 32], strides = [1, 1]} : vector<2x128xf32> to vector<2x32xf32>
    %701 = arith.negf %700 : vector<2x32xf32>
    %702 = math.exp %701 : vector<2x32xf32>
    %cst_195 = arith.constant 1.000000e+00 : f32
    %703 = vector.broadcast %cst_195 : f32 to vector<2x32xf32>
    %704 = arith.addf %703, %702 : vector<2x32xf32>
    %705 = arith.divf %703, %704 : vector<2x32xf32>
    %706 = vector.extract_strided_slice %699 {offsets = [0, 32], sizes = [2, 32], strides = [1, 1]} : vector<2x128xf32> to vector<2x32xf32>
    %707 = arith.negf %706 : vector<2x32xf32>
    %708 = math.exp %707 : vector<2x32xf32>
    %cst_196 = arith.constant 1.000000e+00 : f32
    %709 = vector.broadcast %cst_196 : f32 to vector<2x32xf32>
    %710 = arith.addf %709, %708 : vector<2x32xf32>
    %711 = arith.divf %709, %710 : vector<2x32xf32>
    %712 = vector.extract_strided_slice %699 {offsets = [0, 64], sizes = [2, 32], strides = [1, 1]} : vector<2x128xf32> to vector<2x32xf32>
    %713 = math.tanh %712 : vector<2x32xf32>
    %714 = vector.extract_strided_slice %699 {offsets = [0, 96], sizes = [2, 32], strides = [1, 1]} : vector<2x128xf32> to vector<2x32xf32>
    %715 = arith.negf %714 : vector<2x32xf32>
    %716 = math.exp %715 : vector<2x32xf32>
    %cst_197 = arith.constant 1.000000e+00 : f32
    %717 = vector.broadcast %cst_197 : f32 to vector<2x32xf32>
    %718 = arith.addf %717, %716 : vector<2x32xf32>
    %719 = arith.divf %717, %718 : vector<2x32xf32>
    %720 = arith.mulf %711, %662 : vector<2x32xf32>
    %721 = arith.mulf %705, %713 : vector<2x32xf32>
    %722 = arith.addf %720, %721 : vector<2x32xf32>
    %723 = math.tanh %722 : vector<2x32xf32>
    %724 = arith.mulf %719, %723 : vector<2x32xf32>
    %725 = vector.extract_strided_slice %698 {offsets = [0, 128], sizes = [2, 128], strides = [1, 1]} : vector<2x256xf32> to vector<2x128xf32>
    %726 = vector.extract_strided_slice %725 {offsets = [0, 0], sizes = [2, 32], strides = [1, 1]} : vector<2x128xf32> to vector<2x32xf32>
    %727 = arith.negf %726 : vector<2x32xf32>
    %728 = math.exp %727 : vector<2x32xf32>
    %cst_198 = arith.constant 1.000000e+00 : f32
    %729 = vector.broadcast %cst_198 : f32 to vector<2x32xf32>
    %730 = arith.addf %729, %728 : vector<2x32xf32>
    %731 = arith.divf %729, %730 : vector<2x32xf32>
    %732 = vector.extract_strided_slice %725 {offsets = [0, 32], sizes = [2, 32], strides = [1, 1]} : vector<2x128xf32> to vector<2x32xf32>
    %733 = arith.negf %732 : vector<2x32xf32>
    %734 = math.exp %733 : vector<2x32xf32>
    %cst_199 = arith.constant 1.000000e+00 : f32
    %735 = vector.broadcast %cst_199 : f32 to vector<2x32xf32>
    %736 = arith.addf %735, %734 : vector<2x32xf32>
    %737 = arith.divf %735, %736 : vector<2x32xf32>
    %738 = vector.extract_strided_slice %725 {offsets = [0, 64], sizes = [2, 32], strides = [1, 1]} : vector<2x128xf32> to vector<2x32xf32>
    %739 = math.tanh %738 : vector<2x32xf32>
    %740 = vector.extract_strided_slice %725 {offsets = [0, 96], sizes = [2, 32], strides = [1, 1]} : vector<2x128xf32> to vector<2x32xf32>
    %741 = arith.negf %740 : vector<2x32xf32>
    %742 = math.exp %741 : vector<2x32xf32>
    %cst_200 = arith.constant 1.000000e+00 : f32
    %743 = vector.broadcast %cst_200 : f32 to vector<2x32xf32>
    %744 = arith.addf %743, %742 : vector<2x32xf32>
    %745 = arith.divf %743, %744 : vector<2x32xf32>
    %746 = arith.mulf %737, %688 : vector<2x32xf32>
    %747 = arith.mulf %731, %739 : vector<2x32xf32>
    %748 = arith.addf %746, %747 : vector<2x32xf32>
    %749 = math.tanh %748 : vector<2x32xf32>
    %750 = arith.mulf %745, %749 : vector<2x32xf32>
    %c6_201 = arith.constant 6 : index
    %c0_202 = arith.constant 0 : index
    %751 = vector.load %arg15[%c6_201, %c0_202] : memref<16x32xf32, #tpu.memory_space<vmem>>, vector<2x32xf32>
    tpu.vector_store %arg15[%c6_201, %c0_202], %724 {strides = array<i32>} : memref<16x32xf32, #tpu.memory_space<vmem>>, vector<2x32xf32>,
    %c8_203 = arith.constant 8 : index
    %c0_204 = arith.constant 0 : index
    %752 = vector.load %arg16[%c8_203, %c0_204] : memref<16x32xf32, #tpu.memory_space<vmem>>, vector<2x32xf32>
    tpu.vector_store %arg16[%c8_203, %c0_204], %750 {strides = array<i32>} : memref<16x32xf32, #tpu.memory_space<vmem>>, vector<2x32xf32>,
    %c8_205 = arith.constant 8 : index
    %c0_206 = arith.constant 0 : index
    %753 = vector.load %arg12[%c8_205, %c0_206] : memref<16x256xf32, #tpu.memory_space<vmem>>, vector<2x128xf32>
    %c6_207 = arith.constant 6 : index
    %c128_208 = arith.constant 128 : index
    %754 = vector.load %arg12[%c6_207, %c128_208] : memref<16x256xf32, #tpu.memory_space<vmem>>, vector<2x128xf32>
    %755 = tpu.concatenate %753, %754 in 1 : vector<2x128xf32>, vector<2x128xf32> -> vector<2x256xf32>
    %756 = tpu.concatenate %724, %750 in 1 : vector<2x32xf32>, vector<2x32xf32> -> vector<2x64xf32>
    %cst_209 = arith.constant dense<0.000000e+00> : vector<2x256xf32>
    %757 = tpu.matmul %756, %508, %cst_209 {dimension_numbers = #tpu.dot_dimension_numbers<[1], [0], [0], [1], [0, 0, 1, 1], [], []>} : vector<2x64xf32>, vector<64x256xf32>, vector<2x256xf32> -> vector<2x256xf32>
    %758 = arith.addf %755, %757 : vector<2x256xf32>
    %759 = vector.extract_strided_slice %758 {offsets = [0, 0], sizes = [2, 128], strides = [1, 1]} : vector<2x256xf32> to vector<2x128xf32>
    %760 = vector.extract_strided_slice %759 {offsets = [0, 0], sizes = [2, 32], strides = [1, 1]} : vector<2x128xf32> to vector<2x32xf32>
    %761 = arith.negf %760 : vector<2x32xf32>
    %762 = math.exp %761 : vector<2x32xf32>
    %cst_210 = arith.constant 1.000000e+00 : f32
    %763 = vector.broadcast %cst_210 : f32 to vector<2x32xf32>
    %764 = arith.addf %763, %762 : vector<2x32xf32>
    %765 = arith.divf %763, %764 : vector<2x32xf32>
    %766 = vector.extract_strided_slice %759 {offsets = [0, 32], sizes = [2, 32], strides = [1, 1]} : vector<2x128xf32> to vector<2x32xf32>
    %767 = arith.negf %766 : vector<2x32xf32>
    %768 = math.exp %767 : vector<2x32xf32>
    %cst_211 = arith.constant 1.000000e+00 : f32
    %769 = vector.broadcast %cst_211 : f32 to vector<2x32xf32>
    %770 = arith.addf %769, %768 : vector<2x32xf32>
    %771 = arith.divf %769, %770 : vector<2x32xf32>
    %772 = vector.extract_strided_slice %759 {offsets = [0, 64], sizes = [2, 32], strides = [1, 1]} : vector<2x128xf32> to vector<2x32xf32>
    %773 = math.tanh %772 : vector<2x32xf32>
    %774 = vector.extract_strided_slice %759 {offsets = [0, 96], sizes = [2, 32], strides = [1, 1]} : vector<2x128xf32> to vector<2x32xf32>
    %775 = arith.negf %774 : vector<2x32xf32>
    %776 = math.exp %775 : vector<2x32xf32>
    %cst_212 = arith.constant 1.000000e+00 : f32
    %777 = vector.broadcast %cst_212 : f32 to vector<2x32xf32>
    %778 = arith.addf %777, %776 : vector<2x32xf32>
    %779 = arith.divf %777, %778 : vector<2x32xf32>
    %780 = arith.mulf %771, %722 : vector<2x32xf32>
    %781 = arith.mulf %765, %773 : vector<2x32xf32>
    %782 = arith.addf %780, %781 : vector<2x32xf32>
    %783 = math.tanh %782 : vector<2x32xf32>
    %784 = arith.mulf %779, %783 : vector<2x32xf32>
    %785 = vector.extract_strided_slice %758 {offsets = [0, 128], sizes = [2, 128], strides = [1, 1]} : vector<2x256xf32> to vector<2x128xf32>
    %786 = vector.extract_strided_slice %785 {offsets = [0, 0], sizes = [2, 32], strides = [1, 1]} : vector<2x128xf32> to vector<2x32xf32>
    %787 = arith.negf %786 : vector<2x32xf32>
    %788 = math.exp %787 : vector<2x32xf32>
    %cst_213 = arith.constant 1.000000e+00 : f32
    %789 = vector.broadcast %cst_213 : f32 to vector<2x32xf32>
    %790 = arith.addf %789, %788 : vector<2x32xf32>
    %791 = arith.divf %789, %790 : vector<2x32xf32>
    %792 = vector.extract_strided_slice %785 {offsets = [0, 32], sizes = [2, 32], strides = [1, 1]} : vector<2x128xf32> to vector<2x32xf32>
    %793 = arith.negf %792 : vector<2x32xf32>
    %794 = math.exp %793 : vector<2x32xf32>
    %cst_214 = arith.constant 1.000000e+00 : f32
    %795 = vector.broadcast %cst_214 : f32 to vector<2x32xf32>
    %796 = arith.addf %795, %794 : vector<2x32xf32>
    %797 = arith.divf %795, %796 : vector<2x32xf32>
    %798 = vector.extract_strided_slice %785 {offsets = [0, 64], sizes = [2, 32], strides = [1, 1]} : vector<2x128xf32> to vector<2x32xf32>
    %799 = math.tanh %798 : vector<2x32xf32>
    %800 = vector.extract_strided_slice %785 {offsets = [0, 96], sizes = [2, 32], strides = [1, 1]} : vector<2x128xf32> to vector<2x32xf32>
    %801 = arith.negf %800 : vector<2x32xf32>
    %802 = math.exp %801 : vector<2x32xf32>
    %cst_215 = arith.constant 1.000000e+00 : f32
    %803 = vector.broadcast %cst_215 : f32 to vector<2x32xf32>
    %804 = arith.addf %803, %802 : vector<2x32xf32>
    %805 = arith.divf %803, %804 : vector<2x32xf32>
    %806 = arith.mulf %797, %748 : vector<2x32xf32>
    %807 = arith.mulf %791, %799 : vector<2x32xf32>
    %808 = arith.addf %806, %807 : vector<2x32xf32>
    %809 = math.tanh %808 : vector<2x32xf32>
    %810 = arith.mulf %805, %809 : vector<2x32xf32>
    %c8_216 = arith.constant 8 : index
    %c0_217 = arith.constant 0 : index
    %811 = vector.load %arg15[%c8_216, %c0_217] : memref<16x32xf32, #tpu.memory_space<vmem>>, vector<2x32xf32>
    tpu.vector_store %arg15[%c8_216, %c0_217], %784 {strides = array<i32>} : memref<16x32xf32, #tpu.memory_space<vmem>>, vector<2x32xf32>,
    %c6_218 = arith.constant 6 : index
    %c0_219 = arith.constant 0 : index
    %812 = vector.load %arg16[%c6_218, %c0_219] : memref<16x32xf32, #tpu.memory_space<vmem>>, vector<2x32xf32>
    tpu.vector_store %arg16[%c6_218, %c0_219], %810 {strides = array<i32>} : memref<16x32xf32, #tpu.memory_space<vmem>>, vector<2x32xf32>,
    %c10_220 = arith.constant 10 : index
    %c0_221 = arith.constant 0 : index
    %813 = vector.load %arg12[%c10_220, %c0_221] : memref<16x256xf32, #tpu.memory_space<vmem>>, vector<2x128xf32>
    %c4_222 = arith.constant 4 : index
    %c128_223 = arith.constant 128 : index
    %814 = vector.load %arg12[%c4_222, %c128_223] : memref<16x256xf32, #tpu.memory_space<vmem>>, vector<2x128xf32>
    %815 = tpu.concatenate %813, %814 in 1 : vector<2x128xf32>, vector<2x128xf32> -> vector<2x256xf32>
    %816 = tpu.concatenate %784, %810 in 1 : vector<2x32xf32>, vector<2x32xf32> -> vector<2x64xf32>
    %cst_224 = arith.constant dense<0.000000e+00> : vector<2x256xf32>
    %817 = tpu.matmul %816, %508, %cst_224 {dimension_numbers = #tpu.dot_dimension_numbers<[1], [0], [0], [1], [0, 0, 1, 1], [], []>} : vector<2x64xf32>, vector<64x256xf32>, vector<2x256xf32> -> vector<2x256xf32>
    %818 = arith.addf %815, %817 : vector<2x256xf32>
    %819 = vector.extract_strided_slice %818 {offsets = [0, 0], sizes = [2, 128], strides = [1, 1]} : vector<2x256xf32> to vector<2x128xf32>
    %820 = vector.extract_strided_slice %819 {offsets = [0, 0], sizes = [2, 32], strides = [1, 1]} : vector<2x128xf32> to vector<2x32xf32>
    %821 = arith.negf %820 : vector<2x32xf32>
    %822 = math.exp %821 : vector<2x32xf32>
    %cst_225 = arith.constant 1.000000e+00 : f32
    %823 = vector.broadcast %cst_225 : f32 to vector<2x32xf32>
    %824 = arith.addf %823, %822 : vector<2x32xf32>
    %825 = arith.divf %823, %824 : vector<2x32xf32>
    %826 = vector.extract_strided_slice %819 {offsets = [0, 32], sizes = [2, 32], strides = [1, 1]} : vector<2x128xf32> to vector<2x32xf32>
    %827 = arith.negf %826 : vector<2x32xf32>
    %828 = math.exp %827 : vector<2x32xf32>
    %cst_226 = arith.constant 1.000000e+00 : f32
    %829 = vector.broadcast %cst_226 : f32 to vector<2x32xf32>
    %830 = arith.addf %829, %828 : vector<2x32xf32>
    %831 = arith.divf %829, %830 : vector<2x32xf32>
    %832 = vector.extract_strided_slice %819 {offsets = [0, 64], sizes = [2, 32], strides = [1, 1]} : vector<2x128xf32> to vector<2x32xf32>
    %833 = math.tanh %832 : vector<2x32xf32>
    %834 = vector.extract_strided_slice %819 {offsets = [0, 96], sizes = [2, 32], strides = [1, 1]} : vector<2x128xf32> to vector<2x32xf32>
    %835 = arith.negf %834 : vector<2x32xf32>
    %836 = math.exp %835 : vector<2x32xf32>
    %cst_227 = arith.constant 1.000000e+00 : f32
    %837 = vector.broadcast %cst_227 : f32 to vector<2x32xf32>
    %838 = arith.addf %837, %836 : vector<2x32xf32>
    %839 = arith.divf %837, %838 : vector<2x32xf32>
    %840 = arith.mulf %831, %782 : vector<2x32xf32>
    %841 = arith.mulf %825, %833 : vector<2x32xf32>
    %842 = arith.addf %840, %841 : vector<2x32xf32>
    %843 = math.tanh %842 : vector<2x32xf32>
    %844 = arith.mulf %839, %843 : vector<2x32xf32>
    %845 = vector.extract_strided_slice %818 {offsets = [0, 128], sizes = [2, 128], strides = [1, 1]} : vector<2x256xf32> to vector<2x128xf32>
    %846 = vector.extract_strided_slice %845 {offsets = [0, 0], sizes = [2, 32], strides = [1, 1]} : vector<2x128xf32> to vector<2x32xf32>
    %847 = arith.negf %846 : vector<2x32xf32>
    %848 = math.exp %847 : vector<2x32xf32>
    %cst_228 = arith.constant 1.000000e+00 : f32
    %849 = vector.broadcast %cst_228 : f32 to vector<2x32xf32>
    %850 = arith.addf %849, %848 : vector<2x32xf32>
    %851 = arith.divf %849, %850 : vector<2x32xf32>
    %852 = vector.extract_strided_slice %845 {offsets = [0, 32], sizes = [2, 32], strides = [1, 1]} : vector<2x128xf32> to vector<2x32xf32>
    %853 = arith.negf %852 : vector<2x32xf32>
    %854 = math.exp %853 : vector<2x32xf32>
    %cst_229 = arith.constant 1.000000e+00 : f32
    %855 = vector.broadcast %cst_229 : f32 to vector<2x32xf32>
    %856 = arith.addf %855, %854 : vector<2x32xf32>
    %857 = arith.divf %855, %856 : vector<2x32xf32>
    %858 = vector.extract_strided_slice %845 {offsets = [0, 64], sizes = [2, 32], strides = [1, 1]} : vector<2x128xf32> to vector<2x32xf32>
    %859 = math.tanh %858 : vector<2x32xf32>
    %860 = vector.extract_strided_slice %845 {offsets = [0, 96], sizes = [2, 32], strides = [1, 1]} : vector<2x128xf32> to vector<2x32xf32>
    %861 = arith.negf %860 : vector<2x32xf32>
    %862 = math.exp %861 : vector<2x32xf32>
    %cst_230 = arith.constant 1.000000e+00 : f32
    %863 = vector.broadcast %cst_230 : f32 to vector<2x32xf32>
    %864 = arith.addf %863, %862 : vector<2x32xf32>
    %865 = arith.divf %863, %864 : vector<2x32xf32>
    %866 = arith.mulf %857, %808 : vector<2x32xf32>
    %867 = arith.mulf %851, %859 : vector<2x32xf32>
    %868 = arith.addf %866, %867 : vector<2x32xf32>
    %869 = math.tanh %868 : vector<2x32xf32>
    %870 = arith.mulf %865, %869 : vector<2x32xf32>
    %c10_231 = arith.constant 10 : index
    %c0_232 = arith.constant 0 : index
    %871 = vector.load %arg15[%c10_231, %c0_232] : memref<16x32xf32, #tpu.memory_space<vmem>>, vector<2x32xf32>
    tpu.vector_store %arg15[%c10_231, %c0_232], %844 {strides = array<i32>} : memref<16x32xf32, #tpu.memory_space<vmem>>, vector<2x32xf32>,
    %c4_233 = arith.constant 4 : index
    %c0_234 = arith.constant 0 : index
    %872 = vector.load %arg16[%c4_233, %c0_234] : memref<16x32xf32, #tpu.memory_space<vmem>>, vector<2x32xf32>
    tpu.vector_store %arg16[%c4_233, %c0_234], %870 {strides = array<i32>} : memref<16x32xf32, #tpu.memory_space<vmem>>, vector<2x32xf32>,
    %c12_235 = arith.constant 12 : index
    %c0_236 = arith.constant 0 : index
    %873 = vector.load %arg12[%c12_235, %c0_236] : memref<16x256xf32, #tpu.memory_space<vmem>>, vector<2x128xf32>
    %c2_237 = arith.constant 2 : index
    %c128_238 = arith.constant 128 : index
    %874 = vector.load %arg12[%c2_237, %c128_238] : memref<16x256xf32, #tpu.memory_space<vmem>>, vector<2x128xf32>
    %875 = tpu.concatenate %873, %874 in 1 : vector<2x128xf32>, vector<2x128xf32> -> vector<2x256xf32>
    %876 = tpu.concatenate %844, %870 in 1 : vector<2x32xf32>, vector<2x32xf32> -> vector<2x64xf32>
    %cst_239 = arith.constant dense<0.000000e+00> : vector<2x256xf32>
    %877 = tpu.matmul %876, %508, %cst_239 {dimension_numbers = #tpu.dot_dimension_numbers<[1], [0], [0], [1], [0, 0, 1, 1], [], []>} : vector<2x64xf32>, vector<64x256xf32>, vector<2x256xf32> -> vector<2x256xf32>
    %878 = arith.addf %875, %877 : vector<2x256xf32>
    %879 = vector.extract_strided_slice %878 {offsets = [0, 0], sizes = [2, 128], strides = [1, 1]} : vector<2x256xf32> to vector<2x128xf32>
    %880 = vector.extract_strided_slice %879 {offsets = [0, 0], sizes = [2, 32], strides = [1, 1]} : vector<2x128xf32> to vector<2x32xf32>
    %881 = arith.negf %880 : vector<2x32xf32>
    %882 = math.exp %881 : vector<2x32xf32>
    %cst_240 = arith.constant 1.000000e+00 : f32
    %883 = vector.broadcast %cst_240 : f32 to vector<2x32xf32>
    %884 = arith.addf %883, %882 : vector<2x32xf32>
    %885 = arith.divf %883, %884 : vector<2x32xf32>
    %886 = vector.extract_strided_slice %879 {offsets = [0, 32], sizes = [2, 32], strides = [1, 1]} : vector<2x128xf32> to vector<2x32xf32>
    %887 = arith.negf %886 : vector<2x32xf32>
    %888 = math.exp %887 : vector<2x32xf32>
    %cst_241 = arith.constant 1.000000e+00 : f32
    %889 = vector.broadcast %cst_241 : f32 to vector<2x32xf32>
    %890 = arith.addf %889, %888 : vector<2x32xf32>
    %891 = arith.divf %889, %890 : vector<2x32xf32>
    %892 = vector.extract_strided_slice %879 {offsets = [0, 64], sizes = [2, 32], strides = [1, 1]} : vector<2x128xf32> to vector<2x32xf32>
    %893 = math.tanh %892 : vector<2x32xf32>
    %894 = vector.extract_strided_slice %879 {offsets = [0, 96], sizes = [2, 32], strides = [1, 1]} : vector<2x128xf32> to vector<2x32xf32>
    %895 = arith.negf %894 : vector<2x32xf32>
    %896 = math.exp %895 : vector<2x32xf32>
    %cst_242 = arith.constant 1.000000e+00 : f32
    %897 = vector.broadcast %cst_242 : f32 to vector<2x32xf32>
    %898 = arith.addf %897, %896 : vector<2x32xf32>
    %899 = arith.divf %897, %898 : vector<2x32xf32>
    %900 = arith.mulf %891, %842 : vector<2x32xf32>
    %901 = arith.mulf %885, %893 : vector<2x32xf32>
    %902 = arith.addf %900, %901 : vector<2x32xf32>
    %903 = math.tanh %902 : vector<2x32xf32>
    %904 = arith.mulf %899, %903 : vector<2x32xf32>
    %905 = vector.extract_strided_slice %878 {offsets = [0, 128], sizes = [2, 128], strides = [1, 1]} : vector<2x256xf32> to vector<2x128xf32>
    %906 = vector.extract_strided_slice %905 {offsets = [0, 0], sizes = [2, 32], strides = [1, 1]} : vector<2x128xf32> to vector<2x32xf32>
    %907 = arith.negf %906 : vector<2x32xf32>
    %908 = math.exp %907 : vector<2x32xf32>
    %cst_243 = arith.constant 1.000000e+00 : f32
    %909 = vector.broadcast %cst_243 : f32 to vector<2x32xf32>
    %910 = arith.addf %909, %908 : vector<2x32xf32>
    %911 = arith.divf %909, %910 : vector<2x32xf32>
    %912 = vector.extract_strided_slice %905 {offsets = [0, 32], sizes = [2, 32], strides = [1, 1]} : vector<2x128xf32> to vector<2x32xf32>
    %913 = arith.negf %912 : vector<2x32xf32>
    %914 = math.exp %913 : vector<2x32xf32>
    %cst_244 = arith.constant 1.000000e+00 : f32
    %915 = vector.broadcast %cst_244 : f32 to vector<2x32xf32>
    %916 = arith.addf %915, %914 : vector<2x32xf32>
    %917 = arith.divf %915, %916 : vector<2x32xf32>
    %918 = vector.extract_strided_slice %905 {offsets = [0, 64], sizes = [2, 32], strides = [1, 1]} : vector<2x128xf32> to vector<2x32xf32>
    %919 = math.tanh %918 : vector<2x32xf32>
    %920 = vector.extract_strided_slice %905 {offsets = [0, 96], sizes = [2, 32], strides = [1, 1]} : vector<2x128xf32> to vector<2x32xf32>
    %921 = arith.negf %920 : vector<2x32xf32>
    %922 = math.exp %921 : vector<2x32xf32>
    %cst_245 = arith.constant 1.000000e+00 : f32
    %923 = vector.broadcast %cst_245 : f32 to vector<2x32xf32>
    %924 = arith.addf %923, %922 : vector<2x32xf32>
    %925 = arith.divf %923, %924 : vector<2x32xf32>
    %926 = arith.mulf %917, %868 : vector<2x32xf32>
    %927 = arith.mulf %911, %919 : vector<2x32xf32>
    %928 = arith.addf %926, %927 : vector<2x32xf32>
    %929 = math.tanh %928 : vector<2x32xf32>
    %930 = arith.mulf %925, %929 : vector<2x32xf32>
    %c12_246 = arith.constant 12 : index
    %c0_247 = arith.constant 0 : index
    %931 = vector.load %arg15[%c12_246, %c0_247] : memref<16x32xf32, #tpu.memory_space<vmem>>, vector<2x32xf32>
    tpu.vector_store %arg15[%c12_246, %c0_247], %904 {strides = array<i32>} : memref<16x32xf32, #tpu.memory_space<vmem>>, vector<2x32xf32>,
    %c2_248 = arith.constant 2 : index
    %c0_249 = arith.constant 0 : index
    %932 = vector.load %arg16[%c2_248, %c0_249] : memref<16x32xf32, #tpu.memory_space<vmem>>, vector<2x32xf32>
    tpu.vector_store %arg16[%c2_248, %c0_249], %930 {strides = array<i32>} : memref<16x32xf32, #tpu.memory_space<vmem>>, vector<2x32xf32>,
    %c14_250 = arith.constant 14 : index
    %c0_251 = arith.constant 0 : index
    %933 = vector.load %arg12[%c14_250, %c0_251] : memref<16x256xf32, #tpu.memory_space<vmem>>, vector<2x128xf32>
    %c0_252 = arith.constant 0 : index
    %c128_253 = arith.constant 128 : index
    %934 = vector.load %arg12[%c0_252, %c128_253] : memref<16x256xf32, #tpu.memory_space<vmem>>, vector<2x128xf32>
    %935 = tpu.concatenate %933, %934 in 1 : vector<2x128xf32>, vector<2x128xf32> -> vector<2x256xf32>
    %936 = tpu.concatenate %904, %930 in 1 : vector<2x32xf32>, vector<2x32xf32> -> vector<2x64xf32>
    %cst_254 = arith.constant dense<0.000000e+00> : vector<2x256xf32>
    %937 = tpu.matmul %936, %508, %cst_254 {dimension_numbers = #tpu.dot_dimension_numbers<[1], [0], [0], [1], [0, 0, 1, 1], [], []>} : vector<2x64xf32>, vector<64x256xf32>, vector<2x256xf32> -> vector<2x256xf32>
    %938 = arith.addf %935, %937 : vector<2x256xf32>
    %939 = vector.extract_strided_slice %938 {offsets = [0, 0], sizes = [2, 128], strides = [1, 1]} : vector<2x256xf32> to vector<2x128xf32>
    %940 = vector.extract_strided_slice %939 {offsets = [0, 0], sizes = [2, 32], strides = [1, 1]} : vector<2x128xf32> to vector<2x32xf32>
    %941 = arith.negf %940 : vector<2x32xf32>
    %942 = math.exp %941 : vector<2x32xf32>
    %cst_255 = arith.constant 1.000000e+00 : f32
    %943 = vector.broadcast %cst_255 : f32 to vector<2x32xf32>
    %944 = arith.addf %943, %942 : vector<2x32xf32>
    %945 = arith.divf %943, %944 : vector<2x32xf32>
    %946 = vector.extract_strided_slice %939 {offsets = [0, 32], sizes = [2, 32], strides = [1, 1]} : vector<2x128xf32> to vector<2x32xf32>
    %947 = arith.negf %946 : vector<2x32xf32>
    %948 = math.exp %947 : vector<2x32xf32>
    %cst_256 = arith.constant 1.000000e+00 : f32
    %949 = vector.broadcast %cst_256 : f32 to vector<2x32xf32>
    %950 = arith.addf %949, %948 : vector<2x32xf32>
    %951 = arith.divf %949, %950 : vector<2x32xf32>
    %952 = vector.extract_strided_slice %939 {offsets = [0, 64], sizes = [2, 32], strides = [1, 1]} : vector<2x128xf32> to vector<2x32xf32>
    %953 = math.tanh %952 : vector<2x32xf32>
    %954 = vector.extract_strided_slice %939 {offsets = [0, 96], sizes = [2, 32], strides = [1, 1]} : vector<2x128xf32> to vector<2x32xf32>
    %955 = arith.negf %954 : vector<2x32xf32>
    %956 = math.exp %955 : vector<2x32xf32>
    %cst_257 = arith.constant 1.000000e+00 : f32
    %957 = vector.broadcast %cst_257 : f32 to vector<2x32xf32>
    %958 = arith.addf %957, %956 : vector<2x32xf32>
    %959 = arith.divf %957, %958 : vector<2x32xf32>
    %960 = arith.mulf %951, %902 : vector<2x32xf32>
    %961 = arith.mulf %945, %953 : vector<2x32xf32>
    %962 = arith.addf %960, %961 : vector<2x32xf32>
    %963 = math.tanh %962 : vector<2x32xf32>
    %964 = arith.mulf %959, %963 : vector<2x32xf32>
    %965 = vector.extract_strided_slice %938 {offsets = [0, 128], sizes = [2, 128], strides = [1, 1]} : vector<2x256xf32> to vector<2x128xf32>
    %966 = vector.extract_strided_slice %965 {offsets = [0, 0], sizes = [2, 32], strides = [1, 1]} : vector<2x128xf32> to vector<2x32xf32>
    %967 = arith.negf %966 : vector<2x32xf32>
    %968 = math.exp %967 : vector<2x32xf32>
    %cst_258 = arith.constant 1.000000e+00 : f32
    %969 = vector.broadcast %cst_258 : f32 to vector<2x32xf32>
    %970 = arith.addf %969, %968 : vector<2x32xf32>
    %971 = arith.divf %969, %970 : vector<2x32xf32>
    %972 = vector.extract_strided_slice %965 {offsets = [0, 32], sizes = [2, 32], strides = [1, 1]} : vector<2x128xf32> to vector<2x32xf32>
    %973 = arith.negf %972 : vector<2x32xf32>
    %974 = math.exp %973 : vector<2x32xf32>
    %cst_259 = arith.constant 1.000000e+00 : f32
    %975 = vector.broadcast %cst_259 : f32 to vector<2x32xf32>
    %976 = arith.addf %975, %974 : vector<2x32xf32>
    %977 = arith.divf %975, %976 : vector<2x32xf32>
    %978 = vector.extract_strided_slice %965 {offsets = [0, 64], sizes = [2, 32], strides = [1, 1]} : vector<2x128xf32> to vector<2x32xf32>
    %979 = math.tanh %978 : vector<2x32xf32>
    %980 = vector.extract_strided_slice %965 {offsets = [0, 96], sizes = [2, 32], strides = [1, 1]} : vector<2x128xf32> to vector<2x32xf32>
    %981 = arith.negf %980 : vector<2x32xf32>
    %982 = math.exp %981 : vector<2x32xf32>
    %cst_260 = arith.constant 1.000000e+00 : f32
    %983 = vector.broadcast %cst_260 : f32 to vector<2x32xf32>
    %984 = arith.addf %983, %982 : vector<2x32xf32>
    %985 = arith.divf %983, %984 : vector<2x32xf32>
    %986 = arith.mulf %977, %928 : vector<2x32xf32>
    %987 = arith.mulf %971, %979 : vector<2x32xf32>
    %988 = arith.addf %986, %987 : vector<2x32xf32>
    %989 = math.tanh %988 : vector<2x32xf32>
    %990 = arith.mulf %985, %989 : vector<2x32xf32>
    %c14_261 = arith.constant 14 : index
    %c0_262 = arith.constant 0 : index
    %991 = vector.load %arg15[%c14_261, %c0_262] : memref<16x32xf32, #tpu.memory_space<vmem>>, vector<2x32xf32>
    tpu.vector_store %arg15[%c14_261, %c0_262], %964 {strides = array<i32>} : memref<16x32xf32, #tpu.memory_space<vmem>>, vector<2x32xf32>,
    %c0_263 = arith.constant 0 : index
    %c0_264 = arith.constant 0 : index
    %992 = vector.load %arg16[%c0_263, %c0_264] : memref<16x32xf32, #tpu.memory_space<vmem>>, vector<2x32xf32>
    tpu.vector_store %arg16[%c0_263, %c0_264], %990 {strides = array<i32>} : memref<16x32xf32, #tpu.memory_space<vmem>>, vector<2x32xf32>,
    %c0_265 = arith.constant 0 : index
    %c0_266 = arith.constant 0 : index
    %993 = vector.load %arg15[%c0_265, %c0_266] : memref<16x32xf32, #tpu.memory_space<vmem>>, vector<16x32xf32>
    %c0_267 = arith.constant 0 : index
    %c0_268 = arith.constant 0 : index
    %994 = vector.load %arg16[%c0_267, %c0_268] : memref<16x32xf32, #tpu.memory_space<vmem>>, vector<16x32xf32>
    %995 = tpu.concatenate %993, %994 in 1 : vector<16x32xf32>, vector<16x32xf32> -> vector<16x64xf32>
    %c0_269 = arith.constant 0 : index
    %c0_270 = arith.constant 0 : index
    %996 = vector.load %arg9[%c0_269, %c0_270] : memref<64x8xf32, #tpu.memory_space<vmem>>, vector<64x8xf32>
    %cst_271 = arith.constant dense<0.000000e+00> : vector<16x8xf32>
    %997 = tpu.matmul %995, %996, %cst_271 {dimension_numbers = #tpu.dot_dimension_numbers<[1], [0], [0], [1], [0, 0, 1, 1], [], []>} : vector<16x64xf32>, vector<64x8xf32>, vector<16x8xf32> -> vector<16x8xf32>
    %c0_272 = arith.constant 0 : index
    %c0_273 = arith.constant 0 : index
    %998 = vector.load %arg10[%c0_272, %c0_273] : memref<1x8xf32, #tpu.memory_space<vmem>>, vector<1x8xf32>
    %999 = vector.broadcast %998 : vector<1x8xf32> to vector<16x8xf32>
    %1000 = arith.addf %997, %999 : vector<16x8xf32>
    %c0_274 = arith.constant 0 : index
    %c0_275 = arith.constant 0 : index
    %1001 = vector.load %arg11[%c0_274, %c0_275] : memref<16x8xf32, #tpu.memory_space<vmem>>, vector<16x8xf32>
    tpu.vector_store %arg11[%c0_274, %c0_275], %1000 {strides = array<i32>} : memref<16x8xf32, #tpu.memory_space<vmem>>, vector<16x8xf32>,
    return
  }
  func.func @transform_0(%arg0: i32) -> (i32, i32) {
    %c0_i32 = arith.constant 0 : i32
    %c0_i32_0 = arith.constant 0 : i32
    %c0_i32_1 = arith.constant 0 : i32
    return %c0_i32, %c0_i32_0 : i32, i32
  }
  func.func @transform_1(%arg0: i32) -> (i32, i32) {
    %c0_i32 = arith.constant 0 : i32
    %c0_i32_0 = arith.constant 0 : i32
    %c0_i32_1 = arith.constant 0 : i32
    return %c0_i32, %c0_i32_0 : i32, i32
  }
  func.func @transform_2(%arg0: i32) -> (i32, i32) {
    %c0_i32 = arith.constant 0 : i32
    %c0_i32_0 = arith.constant 0 : i32
    %c0_i32_1 = arith.constant 0 : i32
    return %c0_i32, %c0_i32_0 : i32, i32
  }
  func.func @transform_3(%arg0: i32) -> (i32, i32) {
    %c0_i32 = arith.constant 0 : i32
    %c0_i32_0 = arith.constant 0 : i32
    %c0_i32_1 = arith.constant 0 : i32
    return %c0_i32, %c0_i32_0 : i32, i32
  }
  func.func @transform_4(%arg0: i32) -> (i32, i32) {
    %c0_i32 = arith.constant 0 : i32
    %c0_i32_0 = arith.constant 0 : i32
    %c0_i32_1 = arith.constant 0 : i32
    return %c0_i32, %c0_i32_0 : i32, i32
  }
  func.func @transform_5(%arg0: i32) -> (i32, i32) {
    %c0_i32 = arith.constant 0 : i32
    %c0_i32_0 = arith.constant 0 : i32
    %c0_i32_1 = arith.constant 0 : i32
    return %c0_i32, %c0_i32_0 : i32, i32
  }
  func.func @transform_6(%arg0: i32) -> (i32, i32) {
    %c0_i32 = arith.constant 0 : i32
    %c0_i32_0 = arith.constant 0 : i32
    %c0_i32_1 = arith.constant 0 : i32
    return %c0_i32, %c0_i32_0 : i32, i32
  }
  func.func @transform_7(%arg0: i32) -> (i32, i32) {
    %c0_i32 = arith.constant 0 : i32
    %c0_i32_0 = arith.constant 0 : i32
    %c0_i32_1 = arith.constant 0 : i32
    return %c0_i32, %c0_i32_0 : i32, i32
  }
  func.func @transform_8(%arg0: i32) -> (i32, i32) {
    %c0_i32 = arith.constant 0 : i32
    %c0_i32_0 = arith.constant 0 : i32
    %c0_i32_1 = arith.constant 0 : i32
    return %c0_i32, %c0_i32_0 : i32, i32
  }
  func.func @transform_9(%arg0: i32) -> (i32, i32) {
    %c0_i32 = arith.constant 0 : i32
    %c0_i32_0 = arith.constant 0 : i32
    %c0_i32_1 = arith.constant 0 : i32
    return %c0_i32, %c0_i32_0 : i32, i32
  }
  func.func @transform_10(%arg0: i32) -> (i32, i32) {
    %c0_i32 = arith.constant 0 : i32
    %c0_i32_0 = arith.constant 0 : i32
    %c0_i32_1 = arith.constant 0 : i32
    return %c0_i32, %c0_i32_0 : i32, i32
  }
}

</mosaic_0001>

<llo_original>
// kernel: ner_forward.1
$region0: #{ner_forward.1}
  #allocation0 [shape = 'u32[]', space=smem, size = 0x4, offset = 0x4, fixed_abs, tag = 'smem constant byte address 0x4 - core index']
  #allocation1 [shape = 'u32[144,128]{1,0:T(1,128)}', space=vmem, size = 0x12000, scoped, tag = 'internal scratch']
  #allocation2 [shape = 'f32[16,256]{1,0:T(8,128)}', space=vmem, size = 0x4000, scoped, tag = 'scratch operand']
  #allocation3 [shape = 'f32[16,32]{1,0:T(8,128)}', space=vmem, size = 0x2000, scoped, tag = 'scratch operand']
  #allocation4 [shape = 'f32[16,32]{1,0:T(8,128)}', space=vmem, size = 0x2000, scoped, tag = 'scratch operand']
  #allocation5 [shape = 'f32[16,32]{1,0:T(8,128)}', space=vmem, size = 0x2000, scoped, tag = 'scratch operand']
  #allocation6 [shape = 'f32[16,32]{1,0:T(8,128)}', space=vmem, size = 0x2000, scoped, tag = 'scratch operand']
  %s0 = inlined_call_operand.vmem [shape: s32[16,1], index: 0, kind: input, shape index: {}]
  %s1 = inlined_call_operand.hbm [shape: f32[32,32], index: 1, kind: input, shape index: {}]
  %s2 = inlined_call_operand.hbm [shape: f32[32,256], index: 2, kind: input, shape index: {}]
  %s3 = inlined_call_operand.vmem [shape: f32[1,256], index: 3, kind: input, shape index: {}]
  %s4 = inlined_call_operand.hbm [shape: f32[64,256], index: 4, kind: input, shape index: {}]
  %s5 = inlined_call_operand.vmem [shape: f32[64,256], index: 5, kind: input, shape index: {}]
  %s6 = inlined_call_operand.vmem [shape: f32[1,256], index: 6, kind: input, shape index: {}]
  %s7 = inlined_call_operand.hbm [shape: f32[64,256], index: 7, kind: input, shape index: {}]
  %s8 = inlined_call_operand.vmem [shape: f32[64,8], index: 8, kind: input, shape index: {}]
  %s9 = inlined_call_operand.vmem [shape: f32[1,8], index: 9, kind: input, shape index: {}]
  %s10 = inlined_call_operand.vmem [shape: f32[16,8], index: 10, kind: output, shape index: {}]
  %s11 = sld [smem:[#allocation0]]
  $region66: #{ner_forward.1} parent=0
    _
  %s13 = ssub.s32 1, %s11
  %s14 = scalar_select 0, %s13, %s11
  $region1: #{ner_forward.1} parent=0
    #allocation7 [shape = 'u8[16384]{0}', space=vmem, size = 0x4000, scoped, tag = 'input window, operand 1, single buffered']
    #allocation8 [shape = 's32[1]{0}', space=sflag, size = 0x4, scoped, tag = 'scoped memory for ner_forward.1']
    #allocation9 [shape = 'u8[32768]{0}', space=vmem, size = 0x8000, scoped, tag = 'input window, operand 2, single buffered']
    #allocation10 [shape = 's32[1]{0}', space=sflag, size = 0x4, scoped, tag = 'scoped memory for ner_forward.1']
    #allocation11 [shape = 'u8[65536]{0}', space=vmem, size = 0x10000, scoped, tag = 'input window, operand 4, single buffered']
    #allocation12 [shape = 'u8[65536]{0}', space=vmem, size = 0x10000, scoped, tag = 'input window, operand 7, single buffered']
    #allocation13 [shape = 's32[1]{0}', space=sflag, size = 0x4, scoped, tag = 'scoped memory for ner_forward.1']
    %15 = vsyncpa [#allocation8], 0
    %16 = vsyncpa [#allocation10], 0
    %17 = vsyncpa [#allocation13], 0
    // Predicated region
    $region2: #{ner_forward.1} parent=1 // pred_check
      _
    $region3: #{ner_forward.1} parent=1 // pred_check_branch
      %19 = sbr.rel (0) target = $region5
    $region4: #{ner_forward.1} parent=1 // pred_region
      _
    $region5: #{ner_forward.1} parent=1 // pred_fallthru
      _
    // Predicated region
    $region6: #{ner_forward.1} parent=1 // pred_check
      _
    $region7: #{ner_forward.1} parent=1 // pred_check_branch
      %21 = sbr.rel (0) target = $region9
    $region8: #{ner_forward.1} parent=1 // pred_region
      %s23 = ssub.s32 512, 512
      %24 = vsyncadd [#allocation8], %s23
      %s25 = sshll.u32 [#allocation7], 4
      %s26 = int_to_ptr.vmem [resolvable:$true] %s25
      %31 = dma.hbm_to_vmem [thread:$0]  %s1, 512, %s26, [#allocation8], 128, 128, 8
    $region9: #{ner_forward.1} parent=1 // pred_fallthru
      _
    // Predicated region
    $region10: #{ner_forward.1} parent=1 // pred_check
      _
    $region11: #{ner_forward.1} parent=1 // pred_check_branch
      %33 = sbr.rel (0) target = $region13
    $region12: #{ner_forward.1} parent=1 // pred_region
      %s35 = ssub.s32 1024, 1024
      %36 = vsyncadd [#allocation10], %s35
      %s37 = sshll.u32 [#allocation9], 4
      %s38 = int_to_ptr.vmem [resolvable:$true] %s37
      %43 = dma.hbm_to_vmem [thread:$0]  %s2, 1024, %s38, [#allocation10], 256, 256, 16
    $region13: #{ner_forward.1} parent=1 // pred_fallthru
      _
    // Predicated region
    $region14: #{ner_forward.1} parent=1 // pred_check
      _
    $region15: #{ner_forward.1} parent=1 // pred_check_branch
      %45 = sbr.rel (0) target = $region17
    $region16: #{ner_forward.1} parent=1 // pred_region
      _
    $region17: #{ner_forward.1} parent=1 // pred_fallthru
      _
    // Predicated region
    $region18: #{ner_forward.1} parent=1 // pred_check
      _
    $region19: #{ner_forward.1} parent=1 // pred_check_branch
      %47 = sbr.rel (0) target = $region21
    $region20: #{ner_forward.1} parent=1 // pred_region
      %s49 = ssub.s32 2048, 2048
      %50 = vsyncadd [#allocation10], %s49
      %s51 = sshll.u32 [#allocation11], 4
      %s52 = int_to_ptr.vmem [resolvable:$true] %s51
      %57 = dma.hbm_to_vmem [thread:$0]  %s4, 2048, %s52, [#allocation10], 256, 256, 16
    $region21: #{ner_forward.1} parent=1 // pred_fallthru
      _
    // Predicated region
    $region22: #{ner_forward.1} parent=1 // pred_check
      _
    $region23: #{ner_forward.1} parent=1 // pred_check_branch
      %59 = sbr.rel (0) target = $region25
    $region24: #{ner_forward.1} parent=1 // pred_region
      _
    $region25: #{ner_forward.1} parent=1 // pred_fallthru
      _
    // Predicated region
    $region26: #{ner_forward.1} parent=1 // pred_check
      _
    $region27: #{ner_forward.1} parent=1 // pred_check_branch
      %61 = sbr.rel (0) target = $region29
    $region28: #{ner_forward.1} parent=1 // pred_region
      _
    $region29: #{ner_forward.1} parent=1 // pred_fallthru
      _
    // Predicated region
    $region30: #{ner_forward.1} parent=1 // pred_check
      _
    $region31: #{ner_forward.1} parent=1 // pred_check_branch
      %63 = sbr.rel (0) target = $region33
    $region32: #{ner_forward.1} parent=1 // pred_region
      %s65 = ssub.s32 2048, 2048
      %66 = vsyncadd [#allocation13], %s65
      %s67 = sshll.u32 [#allocation12], 4
      %s68 = int_to_ptr.vmem [resolvable:$true] %s67
      %73 = dma.hbm_to_vmem [thread:$0]  %s7, 2048, %s68, [#allocation13], 256, 256, 16
    $region33: #{ner_forward.1} parent=1 // pred_fallthru
      _
    // Predicated region
    $region34: #{ner_forward.1} parent=1 // pred_check
      _
    $region35: #{ner_forward.1} parent=1 // pred_check_branch
      %75 = sbr.rel (0) target = $region37
    $region36: #{ner_forward.1} parent=1 // pred_region
      _
    $region37: #{ner_forward.1} parent=1 // pred_fallthru
      _
    // Predicated region
    $region38: #{ner_forward.1} parent=1 // pred_check
      _
    $region39: #{ner_forward.1} parent=1 // pred_check_branch
      %77 = sbr.rel (0) target = $region41
    $region40: #{ner_forward.1} parent=1 // pred_region
      _
    $region41: #{ner_forward.1} parent=1 // pred_fallthru
      _
    // Predicated region
    $region42: #{ner_forward.1} parent=1 // pred_check
      _
    $region43: #{ner_forward.1} parent=1 // pred_check_branch
      %79 = sbr.rel (0) target = $region45
    $region44: #{ner_forward.1} parent=1 // pred_region
      %80 = dma.done [#allocation8], 512
    $region45: #{ner_forward.1} parent=1 // pred_fallthru
      _
    // Predicated region
    $region46: #{ner_forward.1} parent=1 // pred_check
      _
    $region47: #{ner_forward.1} parent=1 // pred_check_branch
      %82 = sbr.rel (0) target = $region49
    $region48: #{ner_forward.1} parent=1 // pred_region
      %83 = dma.done [#allocation10], 1024
    $region49: #{ner_forward.1} parent=1 // pred_fallthru
      _
    // Predicated region
    $region50: #{ner_forward.1} parent=1 // pred_check
      _
    $region51: #{ner_forward.1} parent=1 // pred_check_branch
      %85 = sbr.rel (0) target = $region53
    $region52: #{ner_forward.1} parent=1 // pred_region
      %86 = dma.done [#allocation10], 2048
    $region53: #{ner_forward.1} parent=1 // pred_fallthru
      _
    // Predicated region
    $region54: #{ner_forward.1} parent=1 // pred_check
      _
    $region55: #{ner_forward.1} parent=1 // pred_check_branch
      %88 = sbr.rel (0) target = $region57
    $region56: #{ner_forward.1} parent=1 // pred_region
      %89 = dma.done [#allocation13], 2048
    $region57: #{ner_forward.1} parent=1 // pred_fallthru
      _
    %v90 = vld [vmem:[%s0] sm:$0xff]
    %v91 = vld [vmem:[%s0 + $0x8] sm:$0xff]
    %v92 = vlaneseq
    %v93 = vand.u32 %v92, 127
    %94 = vset.pattern.permute.xlu0 0
    %95 = vperm.xlu0 %94, %v90
    %v96 = vpop.permute.xlu0 %95
    %97 = vset.pattern.permute.xlu0 0
    %98 = vperm.xlu0 %97, %v91
    %v99 = vpop.permute.xlu0 %98
    %vm100 = vcmp.eq.s32.totalorder %v93, %v96
    %vm101 = vcmp.eq.s32.totalorder %v93, %v99
    %v102 = vsel %vm100, 1, 0
    %v103 = vsel %vm101, 1, 0
    %v104 = vcvt.s32.f32 %v102
    %v105 = vcvt.s32.f32 %v103
    %v106 = vld [vmem:[#allocation7] sm:$0xff]
    %v107 = vld [vmem:[#allocation7 + $0x8] sm:$0xff]
    %v108 = vld [vmem:[#allocation7 + $0x10] sm:$0xff]
    %v109 = vld [vmem:[#allocation7 + $0x18] sm:$0xff]
    %vm110 = vcmask 261120
    %v112 = vsel %vm110, %v104, 0
    %v115 = vsel %vm110, %v105, 0
    %117 = vmatprep.subr.mxu0 0.0
    %118 = vmatpush1.msra.mxu0 %v106
    %119 = vmatprep.subr.mxu0 0.0
    %120 = vmatpush1.msra.mxu0 %v107
    %121 = vmatprep.subr.mxu0 0.0
    %122 = vmatpush1.msra.mxu0 %v108
    %123 = vmatprep.subr.mxu0 0.0
    %124 = vmatpush1.msra.mxu0 %v109
    %125 = vmatprep.subr.mxu0 0.0
    %126 = vmatpush1.msra.mxu0 0.0
    %127 = vmatprep.subr.mxu0 0.0
    %128 = vmatpush1.msra.mxu0 0.0
    %129 = vmatprep.subr.mxu0 0.0
    %130 = vmatpush1.msra.mxu0 0.0
    %131 = vmatprep.subr.mxu0 0.0
    %132 = vmatpush1.msra.mxu0 0.0
    %133 = vmatprep.subr.mxu0 0.0
    %134 = vmatpush1.msra.mxu0 0.0
    %135 = vmatprep.subr.mxu0 0.0
    %136 = vmatpush1.msra.mxu0 0.0
    %137 = vmatprep.subr.mxu0 0.0
    %138 = vmatpush1.msra.mxu0 0.0
    %139 = vmatprep.subr.mxu0 0.0
    %140 = vmatpush1.msra.mxu0 0.0
    %141 = vmatprep.subr.mxu0 0.0
    %142 = vmatpush1.msra.mxu0 0.0
    %143 = vmatprep.subr.mxu0 0.0
    %144 = vmatpush1.msra.mxu0 0.0
    %145 = vmatprep.subr.mxu0 0.0
    %146 = vmatpush1.msra.mxu0 0.0
    %147 = vmatprep.subr.mxu0 0.0
    %148 = vmatpush1.msra.mxu0 0.0
    %149 = vmatprep.subr.mxu0 0.0
    %150 = vmatpush1.msra.mxu0 0.0
    %151 = vmatprep.subr.mxu0 0.0
    %152 = vmatpush1.msra.mxu0 0.0
    %153 = vmatprep.subr.mxu0 0.0
    %154 = vmatpush1.msra.mxu0 0.0
    %155 = vmatprep.subr.mxu0 0.0
    %156 = vmatpush1.msra.mxu0 0.0
    %157 = vmatprep.subr.mxu0 0.0
    %158 = vmatpush1.msra.mxu0 0.0
    %159 = vmatprep.subr.mxu0 0.0
    %160 = vmatpush1.msra.mxu0 0.0
    %161 = vmatprep.subr.mxu0 0.0
    %162 = vmatpush1.msra.mxu0 0.0
    %163 = vmatprep.subr.mxu0 0.0
    %164 = vmatpush1.msra.mxu0 0.0
    %165 = vmatprep.subr.mxu0 0.0
    %166 = vmatpush1.msra.mxu0 0.0
    %167 = vmatprep.subr.mxu0 0.0
    %168 = vmatpush1.msra.mxu0 0.0
    %169 = vmatprep.subr.mxu0 0.0
    %170 = vmatpush1.msra.mxu0 0.0
    %171 = vmatprep.subr.mxu0 0.0
    %172 = vmatpush1.msra.mxu0 0.0
    %173 = vmatprep.subr.mxu0 0.0
    %174 = vmatpush1.msra.mxu0 0.0
    %175 = vmatprep.subr.mxu0 0.0
    %176 = vmatpush1.msra.mxu0 0.0
    %177 = vmatprep.subr.mxu0 0.0
    %178 = vmatpush1.msra.mxu0 0.0
    %179 = vmatprep.subr.mxu0 0.0
    %180 = vmatpush1.msra.mxu0 0.0
    %181 = vmatprep.mubr.f32.mxu0 0.0
    %182 = vmatmul.mubr.f32.gmra.mrb[0].mxu0 %v112
    %v183 = vpop.f32.mrb[0].mxu0
    %v184 = vadd.f32 0.0, %v183
    %v185 = vpop.f32.mrb[0].mxu0
    %186 = vmatprep.mubr.f32.mxu0 0.0
    %187 = vmatmul.mubr.f32.gmra.mrb[0].mxu0 %v115
    %v188 = vpop.f32.mrb[0].mxu0
    %v189 = vadd.f32 0.0, %v188
    %v190 = vpop.f32.mrb[0].mxu0
    %191 = vdwg.mxu0
    %v192 = vld [vmem:[#allocation9] sm:$0xff]
    %v193 = vld [vmem:[#allocation9 + $0x8] sm:$0xff]
    %v194 = vld [vmem:[#allocation9 + $0x10] sm:$0xff]
    %v195 = vld [vmem:[#allocation9 + $0x18] sm:$0xff]
    %v196 = vld [vmem:[#allocation9 + $0x20] sm:$0xff]
    %v197 = vld [vmem:[#allocation9 + $0x28] sm:$0xff]
    %v198 = vld [vmem:[#allocation9 + $0x30] sm:$0xff]
    %v199 = vld [vmem:[#allocation9 + $0x38] sm:$0xff]
    %v200 = vld [vmem:[%s3] sm:$0x3]
    %v202 = vlaneseq
    %v203 = vshrl.u32 %v202, 7
    %v204 = vsub.s32 0, %v203
    %v205 = vrot.slane %v200, %v204
    %v206 = vlaneseq
    %v207 = vshrl.u32 %v206, 7
    %v208 = vsub.s32 1, %v207
    %v209 = vrot.slane %v200, %v208
    %v213 = vsel %vm110, %v184, 0
    %v216 = vsel %vm110, %v189, 0
    %218 = vmatprep.subr.mxu0 %v193
    %219 = vmatpush1.msra.mxu0 %v192
    %220 = vmatprep.subr.mxu0 %v195
    %221 = vmatpush1.msra.mxu0 %v194
    %222 = vmatprep.subr.mxu0 %v197
    %223 = vmatpush1.msra.mxu0 %v196
    %224 = vmatprep.subr.mxu0 %v199
    %225 = vmatpush1.msra.mxu0 %v198
    %226 = vmatprep.subr.mxu0 0.0
    %227 = vmatpush1.msra.mxu0 0.0
    %228 = vmatprep.subr.mxu0 0.0
    %229 = vmatpush1.msra.mxu0 0.0
    %230 = vmatprep.subr.mxu0 0.0
    %231 = vmatpush1.msra.mxu0 0.0
    %232 = vmatprep.subr.mxu0 0.0
    %233 = vmatpush1.msra.mxu0 0.0
    %234 = vmatprep.subr.mxu0 0.0
    %235 = vmatpush1.msra.mxu0 0.0
    %236 = vmatprep.subr.mxu0 0.0
    %237 = vmatpush1.msra.mxu0 0.0
    %238 = vmatprep.subr.mxu0 0.0
    %239 = vmatpush1.msra.mxu0 0.0
    %240 = vmatprep.subr.mxu0 0.0
    %241 = vmatpush1.msra.mxu0 0.0
    %242 = vmatprep.subr.mxu0 0.0
    %243 = vmatpush1.msra.mxu0 0.0
    %244 = vmatprep.subr.mxu0 0.0
    %245 = vmatpush1.msra.mxu0 0.0
    %246 = vmatprep.subr.mxu0 0.0
    %247 = vmatpush1.msra.mxu0 0.0
    %248 = vmatprep.subr.mxu0 0.0
    %249 = vmatpush1.msra.mxu0 0.0
    %250 = vmatprep.subr.mxu0 0.0
    %251 = vmatpush1.msra.mxu0 0.0
    %252 = vmatprep.subr.mxu0 0.0
    %253 = vmatpush1.msra.mxu0 0.0
    %254 = vmatprep.subr.mxu0 0.0
    %255 = vmatpush1.msra.mxu0 0.0
    %256 = vmatprep.subr.mxu0 0.0
    %257 = vmatpush1.msra.mxu0 0.0
    %258 = vmatprep.subr.mxu0 0.0
    %259 = vmatpush1.msra.mxu0 0.0
    %260 = vmatprep.subr.mxu0 0.0
    %261 = vmatpush1.msra.mxu0 0.0
    %262 = vmatprep.subr.mxu0 0.0
    %263 = vmatpush1.msra.mxu0 0.0
    %264 = vmatprep.subr.mxu0 0.0
    %265 = vmatpush1.msra.mxu0 0.0
    %266 = vmatprep.subr.mxu0 0.0
    %267 = vmatpush1.msra.mxu0 0.0
    %268 = vmatprep.subr.mxu0 0.0
    %269 = vmatpush1.msra.mxu0 0.0
    %270 = vmatprep.subr.mxu0 0.0
    %271 = vmatpush1.msra.mxu0 0.0
    %272 = vmatprep.subr.mxu0 0.0
    %273 = vmatpush1.msra.mxu0 0.0
    %274 = vmatprep.subr.mxu0 0.0
    %275 = vmatpush1.msra.mxu0 0.0
    %276 = vmatprep.subr.mxu0 0.0
    %277 = vmatpush1.msra.mxu0 0.0
    %278 = vmatprep.subr.mxu0 0.0
    %279 = vmatpush1.msra.mxu0 0.0
    %280 = vmatprep.subr.mxu0 0.0
    %281 = vmatpush1.msra.mxu0 0.0
    %282 = vmatprep.mubr.f32.mxu0 0.0
    %283 = vmatmul.mubr.f32.gmra.mrb[0].mxu0 %v213
    %v284 = vpop.f32.mrb[0].mxu0
    %v285 = vadd.f32 %v205, %v284
    %v286 = vpop.f32.mrb[0].mxu0
    %v287 = vadd.f32 %v209, %v286
    %288 = vmatprep.mubr.f32.mxu0 0.0
    %289 = vmatmul.mubr.f32.gmra.mrb[0].mxu0 %v216
    %v290 = vpop.f32.mrb[0].mxu0
    %v291 = vadd.f32 %v205, %v290
    %v292 = vpop.f32.mrb[0].mxu0
    %v293 = vadd.f32 %v209, %v292
    %294 = vdwg.mxu0
    %295 = vst [vmem:[#allocation2] sm:$0xff] %v285
    %296 = vst [vmem:[#allocation2 + $0x8] sm:$0xff] %v287
    %297 = vst [vmem:[#allocation2 + $0x10] sm:$0xff] %v291
    %298 = vst [vmem:[#allocation2 + $0x18] sm:$0xff] %v293
    %v299 = vld [vmem:[#allocation11] sm:$0xff]
    %v300 = vld [vmem:[#allocation11 + $0x8] sm:$0xff]
    %v301 = vld [vmem:[#allocation11 + $0x10] sm:$0xff]
    %v302 = vld [vmem:[#allocation11 + $0x18] sm:$0xff]
    %v303 = vld [vmem:[#allocation11 + $0x20] sm:$0xff]
    %v304 = vld [vmem:[#allocation11 + $0x28] sm:$0xff]
    %v305 = vld [vmem:[#allocation11 + $0x30] sm:$0xff]
    %v306 = vld [vmem:[#allocation11 + $0x38] sm:$0xff]
    %v307 = vld [vmem:[#allocation11 + $0x40] sm:$0xff]
    %v308 = vld [vmem:[#allocation11 + $0x48] sm:$0xff]
    %v309 = vld [vmem:[#allocation11 + $0x50] sm:$0xff]
    %v310 = vld [vmem:[#allocation11 + $0x58] sm:$0xff]
    %v311 = vld [vmem:[#allocation11 + $0x60] sm:$0xff]
    %v312 = vld [vmem:[#allocation11 + $0x68] sm:$0xff]
    %v313 = vld [vmem:[#allocation11 + $0x70] sm:$0xff]
    %v314 = vld [vmem:[#allocation11 + $0x78] sm:$0xff]
    %v315 = vld [vmem:[#allocation2] sm:$0x3]
    %v316 = vld [vmem:[#allocation2 + $0x18] sm:$0xc0]
    %v318 = vrot.slane %v316, 6
    %vm320 = vcmask 523264
    %v322 = vsel %vm320, 0.0, 0
    %324 = vmatprep.subr.mxu0 %v300
    %325 = vmatpush1.msra.mxu0 %v299
    %326 = vmatprep.subr.mxu0 %v302
    %327 = vmatpush1.msra.mxu0 %v301
    %328 = vmatprep.subr.mxu0 %v304
    %329 = vmatpush1.msra.mxu0 %v303
    %330 = vmatprep.subr.mxu0 %v306
    %331 = vmatpush1.msra.mxu0 %v305
    %332 = vmatprep.subr.mxu0 %v308
    %333 = vmatpush1.msra.mxu0 %v307
    %334 = vmatprep.subr.mxu0 %v310
    %335 = vmatpush1.msra.mxu0 %v309
    %336 = vmatprep.subr.mxu0 %v312
    %337 = vmatpush1.msra.mxu0 %v311
    %338 = vmatprep.subr.mxu0 %v314
    %339 = vmatpush1.msra.mxu0 %v313
    %340 = vmatprep.subr.mxu0 0.0
    %341 = vmatpush1.msra.mxu0 0.0
    %342 = vmatprep.subr.mxu0 0.0
    %343 = vmatpush1.msra.mxu0 0.0
    %344 = vmatprep.subr.mxu0 0.0
    %345 = vmatpush1.msra.mxu0 0.0
    %346 = vmatprep.subr.mxu0 0.0
    %347 = vmatpush1.msra.mxu0 0.0
    %348 = vmatprep.subr.mxu0 0.0
    %349 = vmatpush1.msra.mxu0 0.0
    %350 = vmatprep.subr.mxu0 0.0
    %351 = vmatpush1.msra.mxu0 0.0
    %352 = vmatprep.subr.mxu0 0.0
    %353 = vmatpush1.msra.mxu0 0.0
    %354 = vmatprep.subr.mxu0 0.0
    %355 = vmatpush1.msra.mxu0 0.0
    %356 = vmatprep.subr.mxu0 0.0
    %357 = vmatpush1.msra.mxu0 0.0
    %358 = vmatprep.subr.mxu0 0.0
    %359 = vmatpush1.msra.mxu0 0.0
    %360 = vmatprep.subr.mxu0 0.0
    %361 = vmatpush1.msra.mxu0 0.0
    %362 = vmatprep.subr.mxu0 0.0
    %363 = vmatpush1.msra.mxu0 0.0
    %364 = vmatprep.subr.mxu0 0.0
    %365 = vmatpush1.msra.mxu0 0.0
    %366 = vmatprep.subr.mxu0 0.0
    %367 = vmatpush1.msra.mxu0 0.0
    %368 = vmatprep.subr.mxu0 0.0
    %369 = vmatpush1.msra.mxu0 0.0
    %370 = vmatprep.subr.mxu0 0.0
    %371 = vmatpush1.msra.mxu0 0.0
    %372 = vmatprep.subr.mxu0 0.0
    %373 = vmatpush1.msra.mxu0 0.0
    %374 = vmatprep.subr.mxu0 0.0
    %375 = vmatpush1.msra.mxu0 0.0
    %376 = vmatprep.subr.mxu0 0.0
    %377 = vmatpush1.msra.mxu0 0.0
    %378 = vmatprep.subr.mxu0 0.0
    %379 = vmatpush1.msra.mxu0 0.0
    %380 = vmatprep.subr.mxu0 0.0
    %381 = vmatpush1.msra.mxu0 0.0
    %382 = vmatprep.subr.mxu0 0.0
    %383 = vmatpush1.msra.mxu0 0.0
    %384 = vmatprep.subr.mxu0 0.0
    %385 = vmatpush1.msra.mxu0 0.0
    %386 = vmatprep.subr.mxu0 0.0
    %387 = vmatpush1.msra.mxu0 0.0
    %388 = vmatprep.mubr.f32.mxu0 0.0
    %389 = vmatmul.mubr.f32.gmra.mrb[0].mxu0 %v322
    %v390 = vpop.f32.mrb[0].mxu0
    %v391 = vadd.f32 0.0, %v390
    %v392 = vpop.f32.mrb[0].mxu0
    %v393 = vadd.f32 0.0, %v392
    %394 = vdwg.mxu0
    %v395 = vadd.f32 %v315, %v391
    %v396 = vadd.f32 %v318, %v393
    %v397 = vxor.u32 %v395, 2147483648
    %v398 = vmul.f32 %v397, 1.442695
    %v399 = vpow.pop %v398
    %v400 = vadd.f32 %v399, 1.0
    %v401 = vrcp.pop %v400
    %v402 = vmul.f32 1.0, %v401
    %v403 = vtanh.pop %v395
    %v404 = vmul.f32 %v402, 0.0
    %406 = vrot.lane.b32.xlu0 %v403, 64
    %v407 = vpop.permute.xlu0 %406
    %v409 = vmul.f32 %v402, %v407
    %411 = vrot.lane.b32.xlu0 %v409, 32
    %v412 = vpop.permute.xlu0 %411
    %v414 = vadd.f32 %v404, %v412
    %v415 = vtanh.pop %v414
    %417 = vrot.lane.b32.xlu0 %v415, 64
    %v418 = vpop.permute.xlu0 %417
    %v420 = vmul.f32 %v402, %v418
    %v421 = vxor.u32 %v396, 2147483648
    %v422 = vmul.f32 %v421, 1.442695
    %v423 = vpow.pop %v422
    %v424 = vadd.f32 %v423, 1.0
    %v425 = vrcp.pop %v424
    %v426 = vmul.f32 1.0, %v425
    %v427 = vtanh.pop %v396
    %v428 = vmul.f32 %v426, 0.0
    %430 = vrot.lane.b32.xlu0 %v427, 64
    %v431 = vpop.permute.xlu0 %430
    %v433 = vmul.f32 %v426, %v431
    %435 = vrot.lane.b32.xlu0 %v433, 32
    %v436 = vpop.permute.xlu0 %435
    %v438 = vadd.f32 %v428, %v436
    %v439 = vtanh.pop %v438
    %441 = vrot.lane.b32.xlu0 %v439, 64
    %v442 = vpop.permute.xlu0 %441
    %v444 = vmul.f32 %v426, %v442
    %446 = vrot.lane.b32.xlu0 %v420, 32
    %v447 = vpop.permute.xlu0 %446
    %vm449 = vcmask 254976
    %450 = vst.msk [vmem:[#allocation3] sm:$0x3] %vm449, %v447
    %452 = vrot.lane.b32.xlu0 %v444, 32
    %v453 = vpop.permute.xlu0 %452
    %455 = vst.msk [vmem:[#allocation4 + $0xe] sm:$0x3] %vm449, %v453
    %v456 = vld [vmem:[#allocation2] sm:$0xc]
    %v457 = vld [vmem:[#allocation2 + $0x18] sm:$0x30]
    %v459 = vrot.slane %v457, 2
    %461 = vrot.lane.b32.xlu0 %v444, 64
    %v462 = vpop.permute.xlu0 %461
    %v464 = vsel %vm110, %v447, %v462
    %v466 = vsel %vm320, %v464, 0
    %468 = vmatprep.subr.mxu0 %v300
    %469 = vmatpush1.msra.mxu0 %v299
    %470 = vmatprep.subr.mxu0 %v302
    %471 = vmatpush1.msra.mxu0 %v301
    %472 = vmatprep.subr.mxu0 %v304
    %473 = vmatpush1.msra.mxu0 %v303
    %474 = vmatprep.subr.mxu0 %v306
    %475 = vmatpush1.msra.mxu0 %v305
    %476 = vmatprep.subr.mxu0 %v308
    %477 = vmatpush1.msra.mxu0 %v307
    %478 = vmatprep.subr.mxu0 %v310
    %479 = vmatpush1.msra.mxu0 %v309
    %480 = vmatprep.subr.mxu0 %v312
    %481 = vmatpush1.msra.mxu0 %v311
    %482 = vmatprep.subr.mxu0 %v314
    %483 = vmatpush1.msra.mxu0 %v313
    %484 = vmatprep.subr.mxu0 0.0
    %485 = vmatpush1.msra.mxu0 0.0
    %486 = vmatprep.subr.mxu0 0.0
    %487 = vmatpush1.msra.mxu0 0.0
    %488 = vmatprep.subr.mxu0 0.0
    %489 = vmatpush1.msra.mxu0 0.0
    %490 = vmatprep.subr.mxu0 0.0
    %491 = vmatpush1.msra.mxu0 0.0
    %492 = vmatprep.subr.mxu0 0.0
    %493 = vmatpush1.msra.mxu0 0.0
    %494 = vmatprep.subr.mxu0 0.0
    %495 = vmatpush1.msra.mxu0 0.0
    %496 = vmatprep.subr.mxu0 0.0
    %497 = vmatpush1.msra.mxu0 0.0
    %498 = vmatprep.subr.mxu0 0.0
    %499 = vmatpush1.msra.mxu0 0.0
    %500 = vmatprep.subr.mxu0 0.0
    %501 = vmatpush1.msra.mxu0 0.0
    %502 = vmatprep.subr.mxu0 0.0
    %503 = vmatpush1.msra.mxu0 0.0
    %504 = vmatprep.subr.mxu0 0.0
    %505 = vmatpush1.msra.mxu0 0.0
    %506 = vmatprep.subr.mxu0 0.0
    %507 = vmatpush1.msra.mxu0 0.0
    %508 = vmatprep.subr.mxu0 0.0
    %509 = vmatpush1.msra.mxu0 0.0
    %510 = vmatprep.subr.mxu0 0.0
    %511 = vmatpush1.msra.mxu0 0.0
    %512 = vmatprep.subr.mxu0 0.0
    %513 = vmatpush1.msra.mxu0 0.0
    %514 = vmatprep.subr.mxu0 0.0
    %515 = vmatpush1.msra.mxu0 0.0
    %516 = vmatprep.subr.mxu0 0.0
    %517 = vmatpush1.msra.mxu0 0.0
    %518 = vmatprep.subr.mxu0 0.0
    %519 = vmatpush1.msra.mxu0 0.0
    %520 = vmatprep.subr.mxu0 0.0
    %521 = vmatpush1.msra.mxu0 0.0
    %522 = vmatprep.subr.mxu0 0.0
    %523 = vmatpush1.msra.mxu0 0.0
    %524 = vmatprep.subr.mxu0 0.0
    %525 = vmatpush1.msra.mxu0 0.0
    %526 = vmatprep.subr.mxu0 0.0
    %527 = vmatpush1.msra.mxu0 0.0
    %528 = vmatprep.subr.mxu0 0.0
    %529 = vmatpush1.msra.mxu0 0.0
    %530 = vmatprep.subr.mxu0 0.0
    %531 = vmatpush1.msra.mxu0 0.0
    %532 = vmatprep.mubr.f32.mxu0 0.0
    %533 = vmatmul.mubr.f32.gmra.mrb[0].mxu0 %v466
    %v534 = vpop.f32.mrb[0].mxu0
    %v535 = vadd.f32 0.0, %v534
    %v536 = vpop.f32.mrb[0].mxu0
    %v537 = vadd.f32 0.0, %v536
    %538 = vdwg.mxu0
    %v541 = vrot.slane %v535, 6
    %v542 = vrot.slane %v537, 6
    %v545 = vadd.f32 %v456, %v541
    %v546 = vadd.f32 %v459, %v542
    %v547 = vxor.u32 %v545, 2147483648
    %v548 = vmul.f32 %v547, 1.442695
    %v549 = vpow.pop %v548
    %v550 = vadd.f32 %v549, 1.0
    %v551 = vrcp.pop %v550
    %v552 = vmul.f32 1.0, %v551
    %v553 = vtanh.pop %v545
    %v555 = vrot.slane %v414, 6
    %v557 = vmul.f32 %v552, %v555
    %559 = vrot.lane.b32.xlu0 %v553, 64
    %v560 = vpop.permute.xlu0 %559
    %v562 = vmul.f32 %v552, %v560
    %564 = vrot.lane.b32.xlu0 %v562, 32
    %v565 = vpop.permute.xlu0 %564
    %v567 = vadd.f32 %v557, %v565
    %v568 = vtanh.pop %v567
    %570 = vrot.lane.b32.xlu0 %v568, 64
    %v571 = vpop.permute.xlu0 %570
    %v573 = vmul.f32 %v552, %v571
    %v574 = vxor.u32 %v546, 2147483648
    %v575 = vmul.f32 %v574, 1.442695
    %v576 = vpow.pop %v575
    %v577 = vadd.f32 %v576, 1.0
    %v578 = vrcp.pop %v577
    %v579 = vmul.f32 1.0, %v578
    %v580 = vtanh.pop %v546
    %v582 = vrot.slane %v438, 6
    %v584 = vmul.f32 %v579, %v582
    %586 = vrot.lane.b32.xlu0 %v580, 64
    %v587 = vpop.permute.xlu0 %586
    %v589 = vmul.f32 %v579, %v587
    %591 = vrot.lane.b32.xlu0 %v589, 32
    %v592 = vpop.permute.xlu0 %591
    %v594 = vadd.f32 %v584, %v592
    %v595 = vtanh.pop %v594
    %597 = vrot.lane.b32.xlu0 %v595, 64
    %v598 = vpop.permute.xlu0 %597
    %v600 = vmul.f32 %v579, %v598
    %602 = vrot.lane.b32.xlu0 %v573, 32
    %v603 = vpop.permute.xlu0 %602
    %vm605 = vcmask 257026
    %606 = vst.msk [vmem:[#allocation3] sm:$0xc] %vm605, %v603
    %608 = vrot.lane.b32.xlu0 %v600, 32
    %v609 = vpop.permute.xlu0 %608
    %611 = vst.msk [vmem:[#allocation4 + $0xa] sm:$0xc] %vm605, %v609
    %v612 = vld [vmem:[#allocation2] sm:$0x30]
    %v613 = vld [vmem:[#allocation2 + $0x18] sm:$0xc]
    %v615 = vrot.slane %v613, 6
    %617 = vrot.lane.b32.xlu0 %v600, 64
    %v618 = vpop.permute.xlu0 %617
    %v620 = vsel %vm110, %v603, %v618
    %v622 = vrot.slane %v620, 2
    %v623 = vsel %vm320, %v622, 0
    %625 = vmatprep.subr.mxu0 %v300
    %626 = vmatpush1.msra.mxu0 %v299
    %627 = vmatprep.subr.mxu0 %v302
    %628 = vmatpush1.msra.mxu0 %v301
    %629 = vmatprep.subr.mxu0 %v304
    %630 = vmatpush1.msra.mxu0 %v303
    %631 = vmatprep.subr.mxu0 %v306
    %632 = vmatpush1.msra.mxu0 %v305
    %633 = vmatprep.subr.mxu0 %v308
    %634 = vmatpush1.msra.mxu0 %v307
    %635 = vmatprep.subr.mxu0 %v310
    %636 = vmatpush1.msra.mxu0 %v309
    %637 = vmatprep.subr.mxu0 %v312
    %638 = vmatpush1.msra.mxu0 %v311
    %639 = vmatprep.subr.mxu0 %v314
    %640 = vmatpush1.msra.mxu0 %v313
    %641 = vmatprep.subr.mxu0 0.0
    %642 = vmatpush1.msra.mxu0 0.0
    %643 = vmatprep.subr.mxu0 0.0
    %644 = vmatpush1.msra.mxu0 0.0
    %645 = vmatprep.subr.mxu0 0.0
    %646 = vmatpush1.msra.mxu0 0.0
    %647 = vmatprep.subr.mxu0 0.0
    %648 = vmatpush1.msra.mxu0 0.0
    %649 = vmatprep.subr.mxu0 0.0
    %650 = vmatpush1.msra.mxu0 0.0
    %651 = vmatprep.subr.mxu0 0.0
    %652 = vmatpush1.msra.mxu0 0.0
    %653 = vmatprep.subr.mxu0 0.0
    %654 = vmatpush1.msra.mxu0 0.0
    %655 = vmatprep.subr.mxu0 0.0
    %656 = vmatpush1.msra.mxu0 0.0
    %657 = vmatprep.subr.mxu0 0.0
    %658 = vmatpush1.msra.mxu0 0.0
    %659 = vmatprep.subr.mxu0 0.0
    %660 = vmatpush1.msra.mxu0 0.0
    %661 = vmatprep.subr.mxu0 0.0
    %662 = vmatpush1.msra.mxu0 0.0
    %663 = vmatprep.subr.mxu0 0.0
    %664 = vmatpush1.msra.mxu0 0.0
    %665 = vmatprep.subr.mxu0 0.0
    %666 = vmatpush1.msra.mxu0 0.0
    %667 = vmatprep.subr.mxu0 0.0
    %668 = vmatpush1.msra.mxu0 0.0
    %669 = vmatprep.subr.mxu0 0.0
    %670 = vmatpush1.msra.mxu0 0.0
    %671 = vmatprep.subr.mxu0 0.0
    %672 = vmatpush1.msra.mxu0 0.0
    %673 = vmatprep.subr.mxu0 0.0
    %674 = vmatpush1.msra.mxu0 0.0
    %675 = vmatprep.subr.mxu0 0.0
    %676 = vmatpush1.msra.mxu0 0.0
    %677 = vmatprep.subr.mxu0 0.0
    %678 = vmatpush1.msra.mxu0 0.0
    %679 = vmatprep.subr.mxu0 0.0
    %680 = vmatpush1.msra.mxu0 0.0
    %681 = vmatprep.subr.mxu0 0.0
    %682 = vmatpush1.msra.mxu0 0.0
    %683 = vmatprep.subr.mxu0 0.0
    %684 = vmatpush1.msra.mxu0 0.0
    %685 = vmatprep.subr.mxu0 0.0
    %686 = vmatpush1.msra.mxu0 0.0
    %687 = vmatprep.subr.mxu0 0.0
    %688 = vmatpush1.msra.mxu0 0.0
    %689 = vmatprep.mubr.f32.mxu0 0.0
    %690 = vmatmul.mubr.f32.gmra.mrb[0].mxu0 %v623
    %v691 = vpop.f32.mrb[0].mxu0
    %v692 = vadd.f32 0.0, %v691
    %v693 = vpop.f32.mrb[0].mxu0
    %v694 = vadd.f32 0.0, %v693
    %695 = vdwg.mxu0
    %v698 = vrot.slane %v692, 4
    %v699 = vrot.slane %v694, 4
    %v702 = vadd.f32 %v612, %v698
    %v703 = vadd.f32 %v615, %v699
    %v704 = vxor.u32 %v702, 2147483648
    %v705 = vmul.f32 %v704, 1.442695
    %v706 = vpow.pop %v705
    %v707 = vadd.f32 %v706, 1.0
    %v708 = vrcp.pop %v707
    %v709 = vmul.f32 1.0, %v708
    %v710 = vtanh.pop %v702
    %v712 = vrot.slane %v567, 6
    %v714 = vmul.f32 %v709, %v712
    %716 = vrot.lane.b32.xlu0 %v710, 64
    %v717 = vpop.permute.xlu0 %716
    %v719 = vmul.f32 %v709, %v717
    %721 = vrot.lane.b32.xlu0 %v719, 32
    %v722 = vpop.permute.xlu0 %721
    %v724 = vadd.f32 %v714, %v722
    %v725 = vtanh.pop %v724
    %727 = vrot.lane.b32.xlu0 %v725, 64
    %v728 = vpop.permute.xlu0 %727
    %v730 = vmul.f32 %v709, %v728
    %v731 = vxor.u32 %v703, 2147483648
    %v732 = vmul.f32 %v731, 1.442695
    %v733 = vpow.pop %v732
    %v734 = vadd.f32 %v733, 1.0
    %v735 = vrcp.pop %v734
    %v736 = vmul.f32 1.0, %v735
    %v737 = vtanh.pop %v703
    %v739 = vrot.slane %v594, 6
    %v741 = vmul.f32 %v736, %v739
    %743 = vrot.lane.b32.xlu0 %v737, 64
    %v744 = vpop.permute.xlu0 %743
    %v746 = vmul.f32 %v736, %v744
    %748 = vrot.lane.b32.xlu0 %v746, 32
    %v749 = vpop.permute.xlu0 %748
    %v751 = vadd.f32 %v741, %v749
    %v752 = vtanh.pop %v751
    %754 = vrot.lane.b32.xlu0 %v752, 64
    %v755 = vpop.permute.xlu0 %754
    %v757 = vmul.f32 %v736, %v755
    %759 = vrot.lane.b32.xlu0 %v730, 32
    %v760 = vpop.permute.xlu0 %759
    %vm762 = vcmask 259076
    %763 = vst.msk [vmem:[#allocation3] sm:$0x30] %vm762, %v760
    %765 = vrot.lane.b32.xlu0 %v757, 32
    %v766 = vpop.permute.xlu0 %765
    %768 = vst.msk [vmem:[#allocation4 + $0x6] sm:$0x30] %vm762, %v766
    %v769 = vld [vmem:[#allocation2] sm:$0xc0]
    %v770 = vld [vmem:[#allocation2 + $0x18] sm:$0x3]
    %v772 = vrot.slane %v770, 2
    %774 = vrot.lane.b32.xlu0 %v757, 64
    %v775 = vpop.permute.xlu0 %774
    %v777 = vsel %vm110, %v760, %v775
    %v779 = vrot.slane %v777, 4
    %v780 = vsel %vm320, %v779, 0
    %782 = vmatprep.subr.mxu0 %v300
    %783 = vmatpush1.msra.mxu0 %v299
    %784 = vmatprep.subr.mxu0 %v302
    %785 = vmatpush1.msra.mxu0 %v301
    %786 = vmatprep.subr.mxu0 %v304
    %787 = vmatpush1.msra.mxu0 %v303
    %788 = vmatprep.subr.mxu0 %v306
    %789 = vmatpush1.msra.mxu0 %v305
    %790 = vmatprep.subr.mxu0 %v308
    %791 = vmatpush1.msra.mxu0 %v307
    %792 = vmatprep.subr.mxu0 %v310
    %793 = vmatpush1.msra.mxu0 %v309
    %794 = vmatprep.subr.mxu0 %v312
    %795 = vmatpush1.msra.mxu0 %v311
    %796 = vmatprep.subr.mxu0 %v314
    %797 = vmatpush1.msra.mxu0 %v313
    %798 = vmatprep.subr.mxu0 0.0
    %799 = vmatpush1.msra.mxu0 0.0
    %800 = vmatprep.subr.mxu0 0.0
    %801 = vmatpush1.msra.mxu0 0.0
    %802 = vmatprep.subr.mxu0 0.0
    %803 = vmatpush1.msra.mxu0 0.0
    %804 = vmatprep.subr.mxu0 0.0
    %805 = vmatpush1.msra.mxu0 0.0
    %806 = vmatprep.subr.mxu0 0.0
    %807 = vmatpush1.msra.mxu0 0.0
    %808 = vmatprep.subr.mxu0 0.0
    %809 = vmatpush1.msra.mxu0 0.0
    %810 = vmatprep.subr.mxu0 0.0
    %811 = vmatpush1.msra.mxu0 0.0
    %812 = vmatprep.subr.mxu0 0.0
    %813 = vmatpush1.msra.mxu0 0.0
    %814 = vmatprep.subr.mxu0 0.0
    %815 = vmatpush1.msra.mxu0 0.0
    %816 = vmatprep.subr.mxu0 0.0
    %817 = vmatpush1.msra.mxu0 0.0
    %818 = vmatprep.subr.mxu0 0.0
    %819 = vmatpush1.msra.mxu0 0.0
    %820 = vmatprep.subr.mxu0 0.0
    %821 = vmatpush1.msra.mxu0 0.0
    %822 = vmatprep.subr.mxu0 0.0
    %823 = vmatpush1.msra.mxu0 0.0
    %824 = vmatprep.subr.mxu0 0.0
    %825 = vmatpush1.msra.mxu0 0.0
    %826 = vmatprep.subr.mxu0 0.0
    %827 = vmatpush1.msra.mxu0 0.0
    %828 = vmatprep.subr.mxu0 0.0
    %829 = vmatpush1.msra.mxu0 0.0
    %830 = vmatprep.subr.mxu0 0.0
    %831 = vmatpush1.msra.mxu0 0.0
    %832 = vmatprep.subr.mxu0 0.0
    %833 = vmatpush1.msra.mxu0 0.0
    %834 = vmatprep.subr.mxu0 0.0
    %835 = vmatpush1.msra.mxu0 0.0
    %836 = vmatprep.subr.mxu0 0.0
    %837 = vmatpush1.msra.mxu0 0.0
    %838 = vmatprep.subr.mxu0 0.0
    %839 = vmatpush1.msra.mxu0 0.0
    %840 = vmatprep.subr.mxu0 0.0
    %841 = vmatpush1.msra.mxu0 0.0
    %842 = vmatprep.subr.mxu0 0.0
    %843 = vmatpush1.msra.mxu0 0.0
    %844 = vmatprep.subr.mxu0 0.0
    %845 = vmatpush1.msra.mxu0 0.0
    %846 = vmatprep.mubr.f32.mxu0 0.0
    %847 = vmatmul.mubr.f32.gmra.mrb[0].mxu0 %v780
    %v848 = vpop.f32.mrb[0].mxu0
    %v849 = vadd.f32 0.0, %v848
    %v850 = vpop.f32.mrb[0].mxu0
    %v851 = vadd.f32 0.0, %v850
    %852 = vdwg.mxu0
    %v855 = vrot.slane %v849, 2
    %v856 = vrot.slane %v851, 2
    %v859 = vadd.f32 %v769, %v855
    %v860 = vadd.f32 %v772, %v856
    %v861 = vxor.u32 %v859, 2147483648
    %v862 = vmul.f32 %v861, 1.442695
    %v863 = vpow.pop %v862
    %v864 = vadd.f32 %v863, 1.0
    %v865 = vrcp.pop %v864
    %v866 = vmul.f32 1.0, %v865
    %v867 = vtanh.pop %v859
    %v869 = vrot.slane %v724, 6
    %v871 = vmul.f32 %v866, %v869
    %873 = vrot.lane.b32.xlu0 %v867, 64
    %v874 = vpop.permute.xlu0 %873
    %v876 = vmul.f32 %v866, %v874
    %878 = vrot.lane.b32.xlu0 %v876, 32
    %v879 = vpop.permute.xlu0 %878
    %v881 = vadd.f32 %v871, %v879
    %v882 = vtanh.pop %v881
    %884 = vrot.lane.b32.xlu0 %v882, 64
    %v885 = vpop.permute.xlu0 %884
    %v887 = vmul.f32 %v866, %v885
    %v888 = vxor.u32 %v860, 2147483648
    %v889 = vmul.f32 %v888, 1.442695
    %v890 = vpow.pop %v889
    %v891 = vadd.f32 %v890, 1.0
    %v892 = vrcp.pop %v891
    %v893 = vmul.f32 1.0, %v892
    %v894 = vtanh.pop %v860
    %v896 = vrot.slane %v751, 6
    %v898 = vmul.f32 %v893, %v896
    %900 = vrot.lane.b32.xlu0 %v894, 64
    %v901 = vpop.permute.xlu0 %900
    %v903 = vmul.f32 %v893, %v901
    %905 = vrot.lane.b32.xlu0 %v903, 32
    %v906 = vpop.permute.xlu0 %905
    %v908 = vadd.f32 %v898, %v906
    %v909 = vtanh.pop %v908
    %911 = vrot.lane.b32.xlu0 %v909, 64
    %v912 = vpop.permute.xlu0 %911
    %v914 = vmul.f32 %v893, %v912
    %916 = vrot.lane.b32.xlu0 %v887, 32
    %v917 = vpop.permute.xlu0 %916
    %vm919 = vcmask 261126
    %920 = vst.msk [vmem:[#allocation3] sm:$0xc0] %vm919, %v917
    %922 = vrot.lane.b32.xlu0 %v914, 32
    %v923 = vpop.permute.xlu0 %922
    %925 = vst.msk [vmem:[#allocation4 + $0x2] sm:$0xc0] %vm919, %v923
    %v926 = vld [vmem:[#allocation2 + $0x10] sm:$0x3]
    %v927 = vld [vmem:[#allocation2 + $0x8] sm:$0xc0]
    %v929 = vrot.slane %v927, 6
    %931 = vrot.lane.b32.xlu0 %v914, 64
    %v932 = vpop.permute.xlu0 %931
    %v934 = vsel %vm110, %v917, %v932
    %v936 = vrot.slane %v934, 6
    %v937 = vsel %vm320, %v936, 0
    %939 = vmatprep.subr.mxu0 %v300
    %940 = vmatpush1.msra.mxu0 %v299
    %941 = vmatprep.subr.mxu0 %v302
    %942 = vmatpush1.msra.mxu0 %v301
    %943 = vmatprep.subr.mxu0 %v304
    %944 = vmatpush1.msra.mxu0 %v303
    %945 = vmatprep.subr.mxu0 %v306
    %946 = vmatpush1.msra.mxu0 %v305
    %947 = vmatprep.subr.mxu0 %v308
    %948 = vmatpush1.msra.mxu0 %v307
    %949 = vmatprep.subr.mxu0 %v310
    %950 = vmatpush1.msra.mxu0 %v309
    %951 = vmatprep.subr.mxu0 %v312
    %952 = vmatpush1.msra.mxu0 %v311
    %953 = vmatprep.subr.mxu0 %v314
    %954 = vmatpush1.msra.mxu0 %v313
    %955 = vmatprep.subr.mxu0 0.0
    %956 = vmatpush1.msra.mxu0 0.0
    %957 = vmatprep.subr.mxu0 0.0
    %958 = vmatpush1.msra.mxu0 0.0
    %959 = vmatprep.subr.mxu0 0.0
    %960 = vmatpush1.msra.mxu0 0.0
    %961 = vmatprep.subr.mxu0 0.0
    %962 = vmatpush1.msra.mxu0 0.0
    %963 = vmatprep.subr.mxu0 0.0
    %964 = vmatpush1.msra.mxu0 0.0
    %965 = vmatprep.subr.mxu0 0.0
    %966 = vmatpush1.msra.mxu0 0.0
    %967 = vmatprep.subr.mxu0 0.0
    %968 = vmatpush1.msra.mxu0 0.0
    %969 = vmatprep.subr.mxu0 0.0
    %970 = vmatpush1.msra.mxu0 0.0
    %971 = vmatprep.subr.mxu0 0.0
    %972 = vmatpush1.msra.mxu0 0.0
    %973 = vmatprep.subr.mxu0 0.0
    %974 = vmatpush1.msra.mxu0 0.0
    %975 = vmatprep.subr.mxu0 0.0
    %976 = vmatpush1.msra.mxu0 0.0
    %977 = vmatprep.subr.mxu0 0.0
    %978 = vmatpush1.msra.mxu0 0.0
    %979 = vmatprep.subr.mxu0 0.0
    %980 = vmatpush1.msra.mxu0 0.0
    %981 = vmatprep.subr.mxu0 0.0
    %982 = vmatpush1.msra.mxu0 0.0
    %983 = vmatprep.subr.mxu0 0.0
    %984 = vmatpush1.msra.mxu0 0.0
    %985 = vmatprep.subr.mxu0 0.0
    %986 = vmatpush1.msra.mxu0 0.0
    %987 = vmatprep.subr.mxu0 0.0
    %988 = vmatpush1.msra.mxu0 0.0
    %989 = vmatprep.subr.mxu0 0.0
    %990 = vmatpush1.msra.mxu0 0.0
    %991 = vmatprep.subr.mxu0 0.0
    %992 = vmatpush1.msra.mxu0 0.0
    %993 = vmatprep.subr.mxu0 0.0
    %994 = vmatpush1.msra.mxu0 0.0
    %995 = vmatprep.subr.mxu0 0.0
    %996 = vmatpush1.msra.mxu0 0.0
    %997 = vmatprep.subr.mxu0 0.0
    %998 = vmatpush1.msra.mxu0 0.0
    %999 = vmatprep.subr.mxu0 0.0
    %1000 = vmatpush1.msra.mxu0 0.0
    %1001 = vmatprep.subr.mxu0 0.0
    %1002 = vmatpush1.msra.mxu0 0.0
    %1003 = vmatprep.mubr.f32.mxu0 0.0
    %1004 = vmatmul.mubr.f32.gmra.mrb[0].mxu0 %v937
    %v1005 = vpop.f32.mrb[0].mxu0
    %v1006 = vadd.f32 0.0, %v1005
    %v1007 = vpop.f32.mrb[0].mxu0
    %v1008 = vadd.f32 0.0, %v1007
    %1009 = vdwg.mxu0
    %v1010 = vadd.f32 %v926, %v1006
    %v1011 = vadd.f32 %v929, %v1008
    %v1012 = vxor.u32 %v1010, 2147483648
    %v1013 = vmul.f32 %v1012, 1.442695
    %v1014 = vpow.pop %v1013
    %v1015 = vadd.f32 %v1014, 1.0
    %v1016 = vrcp.pop %v1015
    %v1017 = vmul.f32 1.0, %v1016
    %v1018 = vtanh.pop %v1010
    %v1020 = vrot.slane %v881, 6
    %v1022 = vmul.f32 %v1017, %v1020
    %1024 = vrot.lane.b32.xlu0 %v1018, 64
    %v1025 = vpop.permute.xlu0 %1024
    %v1027 = vmul.f32 %v1017, %v1025
    %1029 = vrot.lane.b32.xlu0 %v1027, 32
    %v1030 = vpop.permute.xlu0 %1029
    %v1032 = vadd.f32 %v1022, %v1030
    %v1033 = vtanh.pop %v1032
    %1035 = vrot.lane.b32.xlu0 %v1033, 64
    %v1036 = vpop.permute.xlu0 %1035
    %v1038 = vmul.f32 %v1017, %v1036
    %v1039 = vxor.u32 %v1011, 2147483648
    %v1040 = vmul.f32 %v1039, 1.442695
    %v1041 = vpow.pop %v1040
    %v1042 = vadd.f32 %v1041, 1.0
    %v1043 = vrcp.pop %v1042
    %v1044 = vmul.f32 1.0, %v1043
    %v1045 = vtanh.pop %v1011
    %v1047 = vrot.slane %v908, 6
    %v1049 = vmul.f32 %v1044, %v1047
    %1051 = vrot.lane.b32.xlu0 %v1045, 64
    %v1052 = vpop.permute.xlu0 %1051
    %v1054 = vmul.f32 %v1044, %v1052
    %1056 = vrot.lane.b32.xlu0 %v1054, 32
    %v1057 = vpop.permute.xlu0 %1056
    %v1059 = vadd.f32 %v1049, %v1057
    %v1060 = vtanh.pop %v1059
    %1062 = vrot.lane.b32.xlu0 %v1060, 64
    %v1063 = vpop.permute.xlu0 %1062
    %v1065 = vmul.f32 %v1044, %v1063
    %1067 = vrot.lane.b32.xlu0 %v1038, 32
    %v1068 = vpop.permute.xlu0 %1067
    %1070 = vst.msk [vmem:[#allocation3 + $0x8] sm:$0x3] %vm449, %v1068
    %1072 = vrot.lane.b32.xlu0 %v1065, 32
    %v1073 = vpop.permute.xlu0 %1072
    %1075 = vst.msk [vmem:[#allocation4 + $0x6] sm:$0x3] %vm449, %v1073
    %v1076 = vld [vmem:[#allocation2 + $0x10] sm:$0xc]
    %v1077 = vld [vmem:[#allocation2 + $0x8] sm:$0x30]
    %v1079 = vrot.slane %v1077, 2
    %1081 = vrot.lane.b32.xlu0 %v1065, 64
    %v1082 = vpop.permute.xlu0 %1081
    %v1084 = vsel %vm110, %v1068, %v1082
    %v1086 = vsel %vm320, %v1084, 0
    %1088 = vmatprep.subr.mxu0 %v300
    %1089 = vmatpush1.msra.mxu0 %v299
    %1090 = vmatprep.subr.mxu0 %v302
    %1091 = vmatpush1.msra.mxu0 %v301
    %1092 = vmatprep.subr.mxu0 %v304
    %1093 = vmatpush1.msra.mxu0 %v303
    %1094 = vmatprep.subr.mxu0 %v306
    %1095 = vmatpush1.msra.mxu0 %v305
    %1096 = vmatprep.subr.mxu0 %v308
    %1097 = vmatpush1.msra.mxu0 %v307
    %1098 = vmatprep.subr.mxu0 %v310
    %1099 = vmatpush1.msra.mxu0 %v309
    %1100 = vmatprep.subr.mxu0 %v312
    %1101 = vmatpush1.msra.mxu0 %v311
    %1102 = vmatprep.subr.mxu0 %v314
    %1103 = vmatpush1.msra.mxu0 %v313
    %1104 = vmatprep.subr.mxu0 0.0
    %1105 = vmatpush1.msra.mxu0 0.0
    %1106 = vmatprep.subr.mxu0 0.0
    %1107 = vmatpush1.msra.mxu0 0.0
    %1108 = vmatprep.subr.mxu0 0.0
    %1109 = vmatpush1.msra.mxu0 0.0
    %1110 = vmatprep.subr.mxu0 0.0
    %1111 = vmatpush1.msra.mxu0 0.0
    %1112 = vmatprep.subr.mxu0 0.0
    %1113 = vmatpush1.msra.mxu0 0.0
    %1114 = vmatprep.subr.mxu0 0.0
    %1115 = vmatpush1.msra.mxu0 0.0
    %1116 = vmatprep.subr.mxu0 0.0
    %1117 = vmatpush1.msra.mxu0 0.0
    %1118 = vmatprep.subr.mxu0 0.0
    %1119 = vmatpush1.msra.mxu0 0.0
    %1120 = vmatprep.subr.mxu0 0.0
    %1121 = vmatpush1.msra.mxu0 0.0
    %1122 = vmatprep.subr.mxu0 0.0
    %1123 = vmatpush1.msra.mxu0 0.0
    %1124 = vmatprep.subr.mxu0 0.0
    %1125 = vmatpush1.msra.mxu0 0.0
    %1126 = vmatprep.subr.mxu0 0.0
    %1127 = vmatpush1.msra.mxu0 0.0
    %1128 = vmatprep.subr.mxu0 0.0
    %1129 = vmatpush1.msra.mxu0 0.0
    %1130 = vmatprep.subr.mxu0 0.0
    %1131 = vmatpush1.msra.mxu0 0.0
    %1132 = vmatprep.subr.mxu0 0.0
    %1133 = vmatpush1.msra.mxu0 0.0
    %1134 = vmatprep.subr.mxu0 0.0
    %1135 = vmatpush1.msra.mxu0 0.0
    %1136 = vmatprep.subr.mxu0 0.0
    %1137 = vmatpush1.msra.mxu0 0.0
    %1138 = vmatprep.subr.mxu0 0.0
    %1139 = vmatpush1.msra.mxu0 0.0
    %1140 = vmatprep.subr.mxu0 0.0
    %1141 = vmatpush1.msra.mxu0 0.0
    %1142 = vmatprep.subr.mxu0 0.0
    %1143 = vmatpush1.msra.mxu0 0.0
    %1144 = vmatprep.subr.mxu0 0.0
    %1145 = vmatpush1.msra.mxu0 0.0
    %1146 = vmatprep.subr.mxu0 0.0
    %1147 = vmatpush1.msra.mxu0 0.0
    %1148 = vmatprep.subr.mxu0 0.0
    %1149 = vmatpush1.msra.mxu0 0.0
    %1150 = vmatprep.subr.mxu0 0.0
    %1151 = vmatpush1.msra.mxu0 0.0
    %1152 = vmatprep.mubr.f32.mxu0 0.0
    %1153 = vmatmul.mubr.f32.gmra.mrb[0].mxu0 %v1086
    %v1154 = vpop.f32.mrb[0].mxu0
    %v1155 = vadd.f32 0.0, %v1154
    %v1156 = vpop.f32.mrb[0].mxu0
    %v1157 = vadd.f32 0.0, %v1156
    %1158 = vdwg.mxu0
    %v1161 = vrot.slane %v1155, 6
    %v1162 = vrot.slane %v1157, 6
    %v1165 = vadd.f32 %v1076, %v1161
    %v1166 = vadd.f32 %v1079, %v1162
    %v1167 = vxor.u32 %v1165, 2147483648
    %v1168 = vmul.f32 %v1167, 1.442695
    %v1169 = vpow.pop %v1168
    %v1170 = vadd.f32 %v1169, 1.0
    %v1171 = vrcp.pop %v1170
    %v1172 = vmul.f32 1.0, %v1171
    %v1173 = vtanh.pop %v1165
    %v1175 = vrot.slane %v1032, 6
    %v1177 = vmul.f32 %v1172, %v1175
    %1179 = vrot.lane.b32.xlu0 %v1173, 64
    %v1180 = vpop.permute.xlu0 %1179
    %v1182 = vmul.f32 %v1172, %v1180
    %1184 = vrot.lane.b32.xlu0 %v1182, 32
    %v1185 = vpop.permute.xlu0 %1184
    %v1187 = vadd.f32 %v1177, %v1185
    %v1188 = vtanh.pop %v1187
    %1190 = vrot.lane.b32.xlu0 %v1188, 64
    %v1191 = vpop.permute.xlu0 %1190
    %v1193 = vmul.f32 %v1172, %v1191
    %v1194 = vxor.u32 %v1166, 2147483648
    %v1195 = vmul.f32 %v1194, 1.442695
    %v1196 = vpow.pop %v1195
    %v1197 = vadd.f32 %v1196, 1.0
    %v1198 = vrcp.pop %v1197
    %v1199 = vmul.f32 1.0, %v1198
    %v1200 = vtanh.pop %v1166
    %v1202 = vrot.slane %v1059, 6
    %v1204 = vmul.f32 %v1199, %v1202
    %1206 = vrot.lane.b32.xlu0 %v1200, 64
    %v1207 = vpop.permute.xlu0 %1206
    %v1209 = vmul.f32 %v1199, %v1207
    %1211 = vrot.lane.b32.xlu0 %v1209, 32
    %v1212 = vpop.permute.xlu0 %1211
    %v1214 = vadd.f32 %v1204, %v1212
    %v1215 = vtanh.pop %v1214
    %1217 = vrot.lane.b32.xlu0 %v1215, 64
    %v1218 = vpop.permute.xlu0 %1217
    %v1220 = vmul.f32 %v1199, %v1218
    %1222 = vrot.lane.b32.xlu0 %v1193, 32
    %v1223 = vpop.permute.xlu0 %1222
    %1225 = vst.msk [vmem:[#allocation3 + $0x8] sm:$0xc] %vm605, %v1223
    %1227 = vrot.lane.b32.xlu0 %v1220, 32
    %v1228 = vpop.permute.xlu0 %1227
    %1230 = vst.msk [vmem:[#allocation4 + $0x2] sm:$0xc] %vm605, %v1228
    %v1231 = vld [vmem:[#allocation2 + $0x10] sm:$0x30]
    %v1232 = vld [vmem:[#allocation2 + $0x8] sm:$0xc]
    %v1234 = vrot.slane %v1232, 6
    %1236 = vrot.lane.b32.xlu0 %v1220, 64
    %v1237 = vpop.permute.xlu0 %1236
    %v1239 = vsel %vm110, %v1223, %v1237
    %v1241 = vrot.slane %v1239, 2
    %v1242 = vsel %vm320, %v1241, 0
    %1244 = vmatprep.subr.mxu0 %v300
    %1245 = vmatpush1.msra.mxu0 %v299
    %1246 = vmatprep.subr.mxu0 %v302
    %1247 = vmatpush1.msra.mxu0 %v301
    %1248 = vmatprep.subr.mxu0 %v304
    %1249 = vmatpush1.msra.mxu0 %v303
    %1250 = vmatprep.subr.mxu0 %v306
    %1251 = vmatpush1.msra.mxu0 %v305
    %1252 = vmatprep.subr.mxu0 %v308
    %1253 = vmatpush1.msra.mxu0 %v307
    %1254 = vmatprep.subr.mxu0 %v310
    %1255 = vmatpush1.msra.mxu0 %v309
    %1256 = vmatprep.subr.mxu0 %v312
    %1257 = vmatpush1.msra.mxu0 %v311
    %1258 = vmatprep.subr.mxu0 %v314
    %1259 = vmatpush1.msra.mxu0 %v313
    %1260 = vmatprep.subr.mxu0 0.0
    %1261 = vmatpush1.msra.mxu0 0.0
    %1262 = vmatprep.subr.mxu0 0.0
    %1263 = vmatpush1.msra.mxu0 0.0
    %1264 = vmatprep.subr.mxu0 0.0
    %1265 = vmatpush1.msra.mxu0 0.0
    %1266 = vmatprep.subr.mxu0 0.0
    %1267 = vmatpush1.msra.mxu0 0.0
    %1268 = vmatprep.subr.mxu0 0.0
    %1269 = vmatpush1.msra.mxu0 0.0
    %1270 = vmatprep.subr.mxu0 0.0
    %1271 = vmatpush1.msra.mxu0 0.0
    %1272 = vmatprep.subr.mxu0 0.0
    %1273 = vmatpush1.msra.mxu0 0.0
    %1274 = vmatprep.subr.mxu0 0.0
    %1275 = vmatpush1.msra.mxu0 0.0
    %1276 = vmatprep.subr.mxu0 0.0
    %1277 = vmatpush1.msra.mxu0 0.0
    %1278 = vmatprep.subr.mxu0 0.0
    %1279 = vmatpush1.msra.mxu0 0.0
    %1280 = vmatprep.subr.mxu0 0.0
    %1281 = vmatpush1.msra.mxu0 0.0
    %1282 = vmatprep.subr.mxu0 0.0
    %1283 = vmatpush1.msra.mxu0 0.0
    %1284 = vmatprep.subr.mxu0 0.0
    %1285 = vmatpush1.msra.mxu0 0.0
    %1286 = vmatprep.subr.mxu0 0.0
    %1287 = vmatpush1.msra.mxu0 0.0
    %1288 = vmatprep.subr.mxu0 0.0
    %1289 = vmatpush1.msra.mxu0 0.0
    %1290 = vmatprep.subr.mxu0 0.0
    %1291 = vmatpush1.msra.mxu0 0.0
    %1292 = vmatprep.subr.mxu0 0.0
    %1293 = vmatpush1.msra.mxu0 0.0
    %1294 = vmatprep.subr.mxu0 0.0
    %1295 = vmatpush1.msra.mxu0 0.0
    %1296 = vmatprep.subr.mxu0 0.0
    %1297 = vmatpush1.msra.mxu0 0.0
    %1298 = vmatprep.subr.mxu0 0.0
    %1299 = vmatpush1.msra.mxu0 0.0
    %1300 = vmatprep.subr.mxu0 0.0
    %1301 = vmatpush1.msra.mxu0 0.0
    %1302 = vmatprep.subr.mxu0 0.0
    %1303 = vmatpush1.msra.mxu0 0.0
    %1304 = vmatprep.subr.mxu0 0.0
    %1305 = vmatpush1.msra.mxu0 0.0
    %1306 = vmatprep.subr.mxu0 0.0
    %1307 = vmatpush1.msra.mxu0 0.0
    %1308 = vmatprep.mubr.f32.mxu0 0.0
    %1309 = vmatmul.mubr.f32.gmra.mrb[0].mxu0 %v1242
    %v1310 = vpop.f32.mrb[0].mxu0
    %v1311 = vadd.f32 0.0, %v1310
    %v1312 = vpop.f32.mrb[0].mxu0
    %v1313 = vadd.f32 0.0, %v1312
    %1314 = vdwg.mxu0
    %v1317 = vrot.slane %v1311, 4
    %v1318 = vrot.slane %v1313, 4
    %v1321 = vadd.f32 %v1231, %v1317
    %v1322 = vadd.f32 %v1234, %v1318
    %v1323 = vxor.u32 %v1321, 2147483648
    %v1324 = vmul.f32 %v1323, 1.442695
    %v1325 = vpow.pop %v1324
    %v1326 = vadd.f32 %v1325, 1.0
    %v1327 = vrcp.pop %v1326
    %v1328 = vmul.f32 1.0, %v1327
    %v1329 = vtanh.pop %v1321
    %v1331 = vrot.slane %v1187, 6
    %v1333 = vmul.f32 %v1328, %v1331
    %1335 = vrot.lane.b32.xlu0 %v1329, 64
    %v1336 = vpop.permute.xlu0 %1335
    %v1338 = vmul.f32 %v1328, %v1336
    %1340 = vrot.lane.b32.xlu0 %v1338, 32
    %v1341 = vpop.permute.xlu0 %1340
    %v1343 = vadd.f32 %v1333, %v1341
    %v1344 = vtanh.pop %v1343
    %1346 = vrot.lane.b32.xlu0 %v1344, 64
    %v1347 = vpop.permute.xlu0 %1346
    %v1349 = vmul.f32 %v1328, %v1347
    %v1350 = vxor.u32 %v1322, 2147483648
    %v1351 = vmul.f32 %v1350, 1.442695
    %v1352 = vpow.pop %v1351
    %v1353 = vadd.f32 %v1352, 1.0
    %v1354 = vrcp.pop %v1353
    %v1355 = vmul.f32 1.0, %v1354
    %v1356 = vtanh.pop %v1322
    %v1358 = vrot.slane %v1214, 6
    %v1360 = vmul.f32 %v1355, %v1358
    %1362 = vrot.lane.b32.xlu0 %v1356, 64
    %v1363 = vpop.permute.xlu0 %1362
    %v1365 = vmul.f32 %v1355, %v1363
    %1367 = vrot.lane.b32.xlu0 %v1365, 32
    %v1368 = vpop.permute.xlu0 %1367
    %v1370 = vadd.f32 %v1360, %v1368
    %v1371 = vtanh.pop %v1370
    %1373 = vrot.lane.b32.xlu0 %v1371, 64
    %v1374 = vpop.permute.xlu0 %1373
    %v1376 = vmul.f32 %v1355, %v1374
    %1378 = vrot.lane.b32.xlu0 %v1349, 32
    %v1379 = vpop.permute.xlu0 %1378
    %1381 = vst.msk [vmem:[#allocation3 + $0x8] sm:$0x30] %vm762, %v1379
    %1383 = vrot.lane.b32.xlu0 %v1376, 32
    %v1384 = vpop.permute.xlu0 %1383
    %1386 = vst.msk [vmem:[#allocation4 - $0x2] sm:$0x30] %vm762, %v1384
    %v1387 = vld [vmem:[#allocation2 + $0x10] sm:$0xc0]
    %v1388 = vld [vmem:[#allocation2 + $0x8] sm:$0x3]
    %v1390 = vrot.slane %v1388, 2
    %1392 = vrot.lane.b32.xlu0 %v1376, 64
    %v1393 = vpop.permute.xlu0 %1392
    %v1395 = vsel %vm110, %v1379, %v1393
    %v1397 = vrot.slane %v1395, 4
    %v1398 = vsel %vm320, %v1397, 0
    %1400 = vmatprep.subr.mxu0 %v300
    %1401 = vmatpush1.msra.mxu0 %v299
    %1402 = vmatprep.subr.mxu0 %v302
    %1403 = vmatpush1.msra.mxu0 %v301
    %1404 = vmatprep.subr.mxu0 %v304
    %1405 = vmatpush1.msra.mxu0 %v303
    %1406 = vmatprep.subr.mxu0 %v306
    %1407 = vmatpush1.msra.mxu0 %v305
    %1408 = vmatprep.subr.mxu0 %v308
    %1409 = vmatpush1.msra.mxu0 %v307
    %1410 = vmatprep.subr.mxu0 %v310
    %1411 = vmatpush1.msra.mxu0 %v309
    %1412 = vmatprep.subr.mxu0 %v312
    %1413 = vmatpush1.msra.mxu0 %v311
    %1414 = vmatprep.subr.mxu0 %v314
    %1415 = vmatpush1.msra.mxu0 %v313
    %1416 = vmatprep.subr.mxu0 0.0
    %1417 = vmatpush1.msra.mxu0 0.0
    %1418 = vmatprep.subr.mxu0 0.0
    %1419 = vmatpush1.msra.mxu0 0.0
    %1420 = vmatprep.subr.mxu0 0.0
    %1421 = vmatpush1.msra.mxu0 0.0
    %1422 = vmatprep.subr.mxu0 0.0
    %1423 = vmatpush1.msra.mxu0 0.0
    %1424 = vmatprep.subr.mxu0 0.0
    %1425 = vmatpush1.msra.mxu0 0.0
    %1426 = vmatprep.subr.mxu0 0.0
    %1427 = vmatpush1.msra.mxu0 0.0
    %1428 = vmatprep.subr.mxu0 0.0
    %1429 = vmatpush1.msra.mxu0 0.0
    %1430 = vmatprep.subr.mxu0 0.0
    %1431 = vmatpush1.msra.mxu0 0.0
    %1432 = vmatprep.subr.mxu0 0.0
    %1433 = vmatpush1.msra.mxu0 0.0
    %1434 = vmatprep.subr.mxu0 0.0
    %1435 = vmatpush1.msra.mxu0 0.0
    %1436 = vmatprep.subr.mxu0 0.0
    %1437 = vmatpush1.msra.mxu0 0.0
    %1438 = vmatprep.subr.mxu0 0.0
    %1439 = vmatpush1.msra.mxu0 0.0
    %1440 = vmatprep.subr.mxu0 0.0
    %1441 = vmatpush1.msra.mxu0 0.0
    %1442 = vmatprep.subr.mxu0 0.0
    %1443 = vmatpush1.msra.mxu0 0.0
    %1444 = vmatprep.subr.mxu0 0.0
    %1445 = vmatpush1.msra.mxu0 0.0
    %1446 = vmatprep.subr.mxu0 0.0
    %1447 = vmatpush1.msra.mxu0 0.0
    %1448 = vmatprep.subr.mxu0 0.0
    %1449 = vmatpush1.msra.mxu0 0.0
    %1450 = vmatprep.subr.mxu0 0.0
    %1451 = vmatpush1.msra.mxu0 0.0
    %1452 = vmatprep.subr.mxu0 0.0
    %1453 = vmatpush1.msra.mxu0 0.0
    %1454 = vmatprep.subr.mxu0 0.0
    %1455 = vmatpush1.msra.mxu0 0.0
    %1456 = vmatprep.subr.mxu0 0.0
    %1457 = vmatpush1.msra.mxu0 0.0
    %1458 = vmatprep.subr.mxu0 0.0
    %1459 = vmatpush1.msra.mxu0 0.0
    %1460 = vmatprep.subr.mxu0 0.0
    %1461 = vmatpush1.msra.mxu0 0.0
    %1462 = vmatprep.subr.mxu0 0.0
    %1463 = vmatpush1.msra.mxu0 0.0
    %1464 = vmatprep.mubr.f32.mxu0 0.0
    %1465 = vmatmul.mubr.f32.gmra.mrb[0].mxu0 %v1398
    %v1466 = vpop.f32.mrb[0].mxu0
    %v1467 = vadd.f32 0.0, %v1466
    %v1468 = vpop.f32.mrb[0].mxu0
    %v1469 = vadd.f32 0.0, %v1468
    %1470 = vdwg.mxu0
    %v1473 = vrot.slane %v1467, 2
    %v1474 = vrot.slane %v1469, 2
    %v1477 = vadd.f32 %v1387, %v1473
    %v1478 = vadd.f32 %v1390, %v1474
    %v1479 = vxor.u32 %v1477, 2147483648
    %v1480 = vmul.f32 %v1479, 1.442695
    %v1481 = vpow.pop %v1480
    %v1482 = vadd.f32 %v1481, 1.0
    %v1483 = vrcp.pop %v1482
    %v1484 = vmul.f32 1.0, %v1483
    %v1485 = vtanh.pop %v1477
    %v1487 = vrot.slane %v1343, 6
    %v1489 = vmul.f32 %v1484, %v1487
    %1491 = vrot.lane.b32.xlu0 %v1485, 64
    %v1492 = vpop.permute.xlu0 %1491
    %v1494 = vmul.f32 %v1484, %v1492
    %1496 = vrot.lane.b32.xlu0 %v1494, 32
    %v1497 = vpop.permute.xlu0 %1496
    %v1499 = vadd.f32 %v1489, %v1497
    %v1500 = vtanh.pop %v1499
    %1502 = vrot.lane.b32.xlu0 %v1500, 64
    %v1503 = vpop.permute.xlu0 %1502
    %v1505 = vmul.f32 %v1484, %v1503
    %v1506 = vxor.u32 %v1478, 2147483648
    %v1507 = vmul.f32 %v1506, 1.442695
    %v1508 = vpow.pop %v1507
    %v1509 = vadd.f32 %v1508, 1.0
    %v1510 = vrcp.pop %v1509
    %v1511 = vmul.f32 1.0, %v1510
    %v1512 = vtanh.pop %v1478
    %v1514 = vrot.slane %v1370, 6
    %v1516 = vmul.f32 %v1511, %v1514
    %1518 = vrot.lane.b32.xlu0 %v1512, 64
    %v1519 = vpop.permute.xlu0 %1518
    %v1521 = vmul.f32 %v1511, %v1519
    %1523 = vrot.lane.b32.xlu0 %v1521, 32
    %v1524 = vpop.permute.xlu0 %1523
    %v1526 = vadd.f32 %v1516, %v1524
    %v1527 = vtanh.pop %v1526
    %1529 = vrot.lane.b32.xlu0 %v1527, 64
    %v1530 = vpop.permute.xlu0 %1529
    %v1532 = vmul.f32 %v1511, %v1530
    %1534 = vrot.lane.b32.xlu0 %v1505, 32
    %v1535 = vpop.permute.xlu0 %1534
    %1537 = vst.msk [vmem:[#allocation3 + $0x8] sm:$0xc0] %vm919, %v1535
    %1539 = vrot.lane.b32.xlu0 %v1532, 32
    %v1540 = vpop.permute.xlu0 %1539
    %1542 = vst.msk [vmem:[#allocation4 - $0x6] sm:$0xc0] %vm919, %v1540
    %v1543 = vld [vmem:[#allocation3] sm:$0xff]
    %v1544 = vld [vmem:[#allocation3 + $0x8] sm:$0xff]
    %v1545 = vld [vmem:[#allocation4] sm:$0xff]
    %v1546 = vld [vmem:[#allocation4 + $0x8] sm:$0xff]
    %1549 = vrot.lane.b32.xlu0 %v1545, 32
    %v1550 = vpop.permute.xlu0 %1549
    %1551 = vrot.lane.b32.xlu0 %v1546, 32
    %v1552 = vpop.permute.xlu0 %1551
    %v1555 = vsel %vm110, %v1543, %v1550
    %v1556 = vsel %vm110, %v1544, %v1552
    %v1557 = vld [vmem:[%s5] sm:$0xff]
    %v1558 = vld [vmem:[%s5 + $0x8] sm:$0xff]
    %v1559 = vld [vmem:[%s5 + $0x10] sm:$0xff]
    %v1560 = vld [vmem:[%s5 + $0x18] sm:$0xff]
    %v1561 = vld [vmem:[%s5 + $0x20] sm:$0xff]
    %v1562 = vld [vmem:[%s5 + $0x28] sm:$0xff]
    %v1563 = vld [vmem:[%s5 + $0x30] sm:$0xff]
    %v1564 = vld [vmem:[%s5 + $0x38] sm:$0xff]
    %v1565 = vld [vmem:[%s5 + $0x40] sm:$0xff]
    %v1566 = vld [vmem:[%s5 + $0x48] sm:$0xff]
    %v1567 = vld [vmem:[%s5 + $0x50] sm:$0xff]
    %v1568 = vld [vmem:[%s5 + $0x58] sm:$0xff]
    %v1569 = vld [vmem:[%s5 + $0x60] sm:$0xff]
    %v1570 = vld [vmem:[%s5 + $0x68] sm:$0xff]
    %v1571 = vld [vmem:[%s5 + $0x70] sm:$0xff]
    %v1572 = vld [vmem:[%s5 + $0x78] sm:$0xff]
    %v1573 = vld [vmem:[%s6] sm:$0x3]
    %v1575 = vlaneseq
    %v1576 = vshrl.u32 %v1575, 7
    %v1577 = vsub.s32 0, %v1576
    %v1578 = vrot.slane %v1573, %v1577
    %v1579 = vlaneseq
    %v1580 = vshrl.u32 %v1579, 7
    %v1581 = vsub.s32 1, %v1580
    %v1582 = vrot.slane %v1573, %v1581
    %v1586 = vsel %vm320, %v1555, 0
    %v1589 = vsel %vm320, %v1556, 0
    %1591 = vmatprep.subr.mxu0 %v1558
    %1592 = vmatpush1.msra.mxu0 %v1557
    %1593 = vmatprep.subr.mxu0 %v1560
    %1594 = vmatpush1.msra.mxu0 %v1559
    %1595 = vmatprep.subr.mxu0 %v1562
    %1596 = vmatpush1.msra.mxu0 %v1561
    %1597 = vmatprep.subr.mxu0 %v1564
    %1598 = vmatpush1.msra.mxu0 %v1563
    %1599 = vmatprep.subr.mxu0 %v1566
    %1600 = vmatpush1.msra.mxu0 %v1565
    %1601 = vmatprep.subr.mxu0 %v1568
    %1602 = vmatpush1.msra.mxu0 %v1567
    %1603 = vmatprep.subr.mxu0 %v1570
    %1604 = vmatpush1.msra.mxu0 %v1569
    %1605 = vmatprep.subr.mxu0 %v1572
    %1606 = vmatpush1.msra.mxu0 %v1571
    %1607 = vmatprep.subr.mxu0 0.0
    %1608 = vmatpush1.msra.mxu0 0.0
    %1609 = vmatprep.subr.mxu0 0.0
    %1610 = vmatpush1.msra.mxu0 0.0
    %1611 = vmatprep.subr.mxu0 0.0
    %1612 = vmatpush1.msra.mxu0 0.0
    %1613 = vmatprep.subr.mxu0 0.0
    %1614 = vmatpush1.msra.mxu0 0.0
    %1615 = vmatprep.subr.mxu0 0.0
    %1616 = vmatpush1.msra.mxu0 0.0
    %1617 = vmatprep.subr.mxu0 0.0
    %1618 = vmatpush1.msra.mxu0 0.0
    %1619 = vmatprep.subr.mxu0 0.0
    %1620 = vmatpush1.msra.mxu0 0.0
    %1621 = vmatprep.subr.mxu0 0.0
    %1622 = vmatpush1.msra.mxu0 0.0
    %1623 = vmatprep.subr.mxu0 0.0
    %1624 = vmatpush1.msra.mxu0 0.0
    %1625 = vmatprep.subr.mxu0 0.0
    %1626 = vmatpush1.msra.mxu0 0.0
    %1627 = vmatprep.subr.mxu0 0.0
    %1628 = vmatpush1.msra.mxu0 0.0
    %1629 = vmatprep.subr.mxu0 0.0
    %1630 = vmatpush1.msra.mxu0 0.0
    %1631 = vmatprep.subr.mxu0 0.0
    %1632 = vmatpush1.msra.mxu0 0.0
    %1633 = vmatprep.subr.mxu0 0.0
    %1634 = vmatpush1.msra.mxu0 0.0
    %1635 = vmatprep.subr.mxu0 0.0
    %1636 = vmatpush1.msra.mxu0 0.0
    %1637 = vmatprep.subr.mxu0 0.0
    %1638 = vmatpush1.msra.mxu0 0.0
    %1639 = vmatprep.subr.mxu0 0.0
    %1640 = vmatpush1.msra.mxu0 0.0
    %1641 = vmatprep.subr.mxu0 0.0
    %1642 = vmatpush1.msra.mxu0 0.0
    %1643 = vmatprep.subr.mxu0 0.0
    %1644 = vmatpush1.msra.mxu0 0.0
    %1645 = vmatprep.subr.mxu0 0.0
    %1646 = vmatpush1.msra.mxu0 0.0
    %1647 = vmatprep.subr.mxu0 0.0
    %1648 = vmatpush1.msra.mxu0 0.0
    %1649 = vmatprep.subr.mxu0 0.0
    %1650 = vmatpush1.msra.mxu0 0.0
    %1651 = vmatprep.subr.mxu0 0.0
    %1652 = vmatpush1.msra.mxu0 0.0
    %1653 = vmatprep.subr.mxu0 0.0
    %1654 = vmatpush1.msra.mxu0 0.0
    %1655 = vmatprep.mubr.f32.mxu0 0.0
    %1656 = vmatmul.mubr.f32.gmra.mrb[0].mxu0 %v1586
    %v1657 = vpop.f32.mrb[0].mxu0
    %v1658 = vadd.f32 %v1578, %v1657
    %v1659 = vpop.f32.mrb[0].mxu0
    %v1660 = vadd.f32 %v1582, %v1659
    %1661 = vmatprep.mubr.f32.mxu0 0.0
    %1662 = vmatmul.mubr.f32.gmra.mrb[0].mxu0 %v1589
    %v1663 = vpop.f32.mrb[0].mxu0
    %v1664 = vadd.f32 %v1578, %v1663
    %v1665 = vpop.f32.mrb[0].mxu0
    %v1666 = vadd.f32 %v1582, %v1665
    %1667 = vdwg.mxu0
    %1668 = vst [vmem:[#allocation2] sm:$0xff] %v1658
    %1669 = vst [vmem:[#allocation2 + $0x8] sm:$0xff] %v1660
    %1670 = vst [vmem:[#allocation2 + $0x10] sm:$0xff] %v1664
    %1671 = vst [vmem:[#allocation2 + $0x18] sm:$0xff] %v1666
    %v1672 = vld [vmem:[#allocation12] sm:$0xff]
    %v1673 = vld [vmem:[#allocation12 + $0x8] sm:$0xff]
    %v1674 = vld [vmem:[#allocation12 + $0x10] sm:$0xff]
    %v1675 = vld [vmem:[#allocation12 + $0x18] sm:$0xff]
    %v1676 = vld [vmem:[#allocation12 + $0x20] sm:$0xff]
    %v1677 = vld [vmem:[#allocation12 + $0x28] sm:$0xff]
    %v1678 = vld [vmem:[#allocation12 + $0x30] sm:$0xff]
    %v1679 = vld [vmem:[#allocation12 + $0x38] sm:$0xff]
    %v1680 = vld [vmem:[#allocation12 + $0x40] sm:$0xff]
    %v1681 = vld [vmem:[#allocation12 + $0x48] sm:$0xff]
    %v1682 = vld [vmem:[#allocation12 + $0x50] sm:$0xff]
    %v1683 = vld [vmem:[#allocation12 + $0x58] sm:$0xff]
    %v1684 = vld [vmem:[#allocation12 + $0x60] sm:$0xff]
    %v1685 = vld [vmem:[#allocation12 + $0x68] sm:$0xff]
    %v1686 = vld [vmem:[#allocation12 + $0x70] sm:$0xff]
    %v1687 = vld [vmem:[#allocation12 + $0x78] sm:$0xff]
    %v1688 = vld [vmem:[#allocation2] sm:$0x3]
    %v1689 = vld [vmem:[#allocation2 + $0x18] sm:$0xc0]
    %v1691 = vrot.slane %v1689, 6
    %1693 = vmatprep.subr.mxu0 %v1673
    %1694 = vmatpush1.msra.mxu0 %v1672
    %1695 = vmatprep.subr.mxu0 %v1675
    %1696 = vmatpush1.msra.mxu0 %v1674
    %1697 = vmatprep.subr.mxu0 %v1677
    %1698 = vmatpush1.msra.mxu0 %v1676
    %1699 = vmatprep.subr.mxu0 %v1679
    %1700 = vmatpush1.msra.mxu0 %v1678
    %1701 = vmatprep.subr.mxu0 %v1681
    %1702 = vmatpush1.msra.mxu0 %v1680
    %1703 = vmatprep.subr.mxu0 %v1683
    %1704 = vmatpush1.msra.mxu0 %v1682
    %1705 = vmatprep.subr.mxu0 %v1685
    %1706 = vmatpush1.msra.mxu0 %v1684
    %1707 = vmatprep.subr.mxu0 %v1687
    %1708 = vmatpush1.msra.mxu0 %v1686
    %1709 = vmatprep.subr.mxu0 0.0
    %1710 = vmatpush1.msra.mxu0 0.0
    %1711 = vmatprep.subr.mxu0 0.0
    %1712 = vmatpush1.msra.mxu0 0.0
    %1713 = vmatprep.subr.mxu0 0.0
    %1714 = vmatpush1.msra.mxu0 0.0
    %1715 = vmatprep.subr.mxu0 0.0
    %1716 = vmatpush1.msra.mxu0 0.0
    %1717 = vmatprep.subr.mxu0 0.0
    %1718 = vmatpush1.msra.mxu0 0.0
    %1719 = vmatprep.subr.mxu0 0.0
    %1720 = vmatpush1.msra.mxu0 0.0
    %1721 = vmatprep.subr.mxu0 0.0
    %1722 = vmatpush1.msra.mxu0 0.0
    %1723 = vmatprep.subr.mxu0 0.0
    %1724 = vmatpush1.msra.mxu0 0.0
    %1725 = vmatprep.subr.mxu0 0.0
    %1726 = vmatpush1.msra.mxu0 0.0
    %1727 = vmatprep.subr.mxu0 0.0
    %1728 = vmatpush1.msra.mxu0 0.0
    %1729 = vmatprep.subr.mxu0 0.0
    %1730 = vmatpush1.msra.mxu0 0.0
    %1731 = vmatprep.subr.mxu0 0.0
    %1732 = vmatpush1.msra.mxu0 0.0
    %1733 = vmatprep.subr.mxu0 0.0
    %1734 = vmatpush1.msra.mxu0 0.0
    %1735 = vmatprep.subr.mxu0 0.0
    %1736 = vmatpush1.msra.mxu0 0.0
    %1737 = vmatprep.subr.mxu0 0.0
    %1738 = vmatpush1.msra.mxu0 0.0
    %1739 = vmatprep.subr.mxu0 0.0
    %1740 = vmatpush1.msra.mxu0 0.0
    %1741 = vmatprep.subr.mxu0 0.0
    %1742 = vmatpush1.msra.mxu0 0.0
    %1743 = vmatprep.subr.mxu0 0.0
    %1744 = vmatpush1.msra.mxu0 0.0
    %1745 = vmatprep.subr.mxu0 0.0
    %1746 = vmatpush1.msra.mxu0 0.0
    %1747 = vmatprep.subr.mxu0 0.0
    %1748 = vmatpush1.msra.mxu0 0.0
    %1749 = vmatprep.subr.mxu0 0.0
    %1750 = vmatpush1.msra.mxu0 0.0
    %1751 = vmatprep.subr.mxu0 0.0
    %1752 = vmatpush1.msra.mxu0 0.0
    %1753 = vmatprep.subr.mxu0 0.0
    %1754 = vmatpush1.msra.mxu0 0.0
    %1755 = vmatprep.subr.mxu0 0.0
    %1756 = vmatpush1.msra.mxu0 0.0
    %1757 = vmatprep.mubr.f32.mxu0 0.0
    %1758 = vmatmul.mubr.f32.gmra.mrb[0].mxu0 %v322
    %v1759 = vpop.f32.mrb[0].mxu0
    %v1760 = vadd.f32 0.0, %v1759
    %v1761 = vpop.f32.mrb[0].mxu0
    %v1762 = vadd.f32 0.0, %v1761
    %1763 = vdwg.mxu0
    %v1764 = vadd.f32 %v1688, %v1760
    %v1765 = vadd.f32 %v1691, %v1762
    %v1766 = vxor.u32 %v1764, 2147483648
    %v1767 = vmul.f32 %v1766, 1.442695
    %v1768 = vpow.pop %v1767
    %v1769 = vadd.f32 %v1768, 1.0
    %v1770 = vrcp.pop %v1769
    %v1771 = vmul.f32 1.0, %v1770
    %v1772 = vtanh.pop %v1764
    %v1773 = vmul.f32 %v1771, 0.0
    %1775 = vrot.lane.b32.xlu0 %v1772, 64
    %v1776 = vpop.permute.xlu0 %1775
    %v1778 = vmul.f32 %v1771, %v1776
    %1780 = vrot.lane.b32.xlu0 %v1778, 32
    %v1781 = vpop.permute.xlu0 %1780
    %v1783 = vadd.f32 %v1773, %v1781
    %v1784 = vtanh.pop %v1783
    %1786 = vrot.lane.b32.xlu0 %v1784, 64
    %v1787 = vpop.permute.xlu0 %1786
    %v1789 = vmul.f32 %v1771, %v1787
    %v1790 = vxor.u32 %v1765, 2147483648
    %v1791 = vmul.f32 %v1790, 1.442695
    %v1792 = vpow.pop %v1791
    %v1793 = vadd.f32 %v1792, 1.0
    %v1794 = vrcp.pop %v1793
    %v1795 = vmul.f32 1.0, %v1794
    %v1796 = vtanh.pop %v1765
    %v1797 = vmul.f32 %v1795, 0.0
    %1799 = vrot.lane.b32.xlu0 %v1796, 64
    %v1800 = vpop.permute.xlu0 %1799
    %v1802 = vmul.f32 %v1795, %v1800
    %1804 = vrot.lane.b32.xlu0 %v1802, 32
    %v1805 = vpop.permute.xlu0 %1804
    %v1807 = vadd.f32 %v1797, %v1805
    %v1808 = vtanh.pop %v1807
    %1810 = vrot.lane.b32.xlu0 %v1808, 64
    %v1811 = vpop.permute.xlu0 %1810
    %v1813 = vmul.f32 %v1795, %v1811
    %1815 = vrot.lane.b32.xlu0 %v1789, 32
    %v1816 = vpop.permute.xlu0 %1815
    %1818 = vst.msk [vmem:[#allocation5] sm:$0x3] %vm449, %v1816
    %1820 = vrot.lane.b32.xlu0 %v1813, 32
    %v1821 = vpop.permute.xlu0 %1820
    %1823 = vst.msk [vmem:[#allocation6 + $0xe] sm:$0x3] %vm449, %v1821
    %v1824 = vld [vmem:[#allocation2] sm:$0xc]
    %v1825 = vld [vmem:[#allocation2 + $0x18] sm:$0x30]
    %v1827 = vrot.slane %v1825, 2
    %1829 = vrot.lane.b32.xlu0 %v1813, 64
    %v1830 = vpop.permute.xlu0 %1829
    %v1832 = vsel %vm110, %v1816, %v1830
    %v1834 = vsel %vm320, %v1832, 0
    %1836 = vmatprep.subr.mxu0 %v1673
    %1837 = vmatpush1.msra.mxu0 %v1672
    %1838 = vmatprep.subr.mxu0 %v1675
    %1839 = vmatpush1.msra.mxu0 %v1674
    %1840 = vmatprep.subr.mxu0 %v1677
    %1841 = vmatpush1.msra.mxu0 %v1676
    %1842 = vmatprep.subr.mxu0 %v1679
    %1843 = vmatpush1.msra.mxu0 %v1678
    %1844 = vmatprep.subr.mxu0 %v1681
    %1845 = vmatpush1.msra.mxu0 %v1680
    %1846 = vmatprep.subr.mxu0 %v1683
    %1847 = vmatpush1.msra.mxu0 %v1682
    %1848 = vmatprep.subr.mxu0 %v1685
    %1849 = vmatpush1.msra.mxu0 %v1684
    %1850 = vmatprep.subr.mxu0 %v1687
    %1851 = vmatpush1.msra.mxu0 %v1686
    %1852 = vmatprep.subr.mxu0 0.0
    %1853 = vmatpush1.msra.mxu0 0.0
    %1854 = vmatprep.subr.mxu0 0.0
    %1855 = vmatpush1.msra.mxu0 0.0
    %1856 = vmatprep.subr.mxu0 0.0
    %1857 = vmatpush1.msra.mxu0 0.0
    %1858 = vmatprep.subr.mxu0 0.0
    %1859 = vmatpush1.msra.mxu0 0.0
    %1860 = vmatprep.subr.mxu0 0.0
    %1861 = vmatpush1.msra.mxu0 0.0
    %1862 = vmatprep.subr.mxu0 0.0
    %1863 = vmatpush1.msra.mxu0 0.0
    %1864 = vmatprep.subr.mxu0 0.0
    %1865 = vmatpush1.msra.mxu0 0.0
    %1866 = vmatprep.subr.mxu0 0.0
    %1867 = vmatpush1.msra.mxu0 0.0
    %1868 = vmatprep.subr.mxu0 0.0
    %1869 = vmatpush1.msra.mxu0 0.0
    %1870 = vmatprep.subr.mxu0 0.0
    %1871 = vmatpush1.msra.mxu0 0.0
    %1872 = vmatprep.subr.mxu0 0.0
    %1873 = vmatpush1.msra.mxu0 0.0
    %1874 = vmatprep.subr.mxu0 0.0
    %1875 = vmatpush1.msra.mxu0 0.0
    %1876 = vmatprep.subr.mxu0 0.0
    %1877 = vmatpush1.msra.mxu0 0.0
    %1878 = vmatprep.subr.mxu0 0.0
    %1879 = vmatpush1.msra.mxu0 0.0
    %1880 = vmatprep.subr.mxu0 0.0
    %1881 = vmatpush1.msra.mxu0 0.0
    %1882 = vmatprep.subr.mxu0 0.0
    %1883 = vmatpush1.msra.mxu0 0.0
    %1884 = vmatprep.subr.mxu0 0.0
    %1885 = vmatpush1.msra.mxu0 0.0
    %1886 = vmatprep.subr.mxu0 0.0
    %1887 = vmatpush1.msra.mxu0 0.0
    %1888 = vmatprep.subr.mxu0 0.0
    %1889 = vmatpush1.msra.mxu0 0.0
    %1890 = vmatprep.subr.mxu0 0.0
    %1891 = vmatpush1.msra.mxu0 0.0
    %1892 = vmatprep.subr.mxu0 0.0
    %1893 = vmatpush1.msra.mxu0 0.0
    %1894 = vmatprep.subr.mxu0 0.0
    %1895 = vmatpush1.msra.mxu0 0.0
    %1896 = vmatprep.subr.mxu0 0.0
    %1897 = vmatpush1.msra.mxu0 0.0
    %1898 = vmatprep.subr.mxu0 0.0
    %1899 = vmatpush1.msra.mxu0 0.0
    %1900 = vmatprep.mubr.f32.mxu0 0.0
    %1901 = vmatmul.mubr.f32.gmra.mrb[0].mxu0 %v1834
    %v1902 = vpop.f32.mrb[0].mxu0
    %v1903 = vadd.f32 0.0, %v1902
    %v1904 = vpop.f32.mrb[0].mxu0
    %v1905 = vadd.f32 0.0, %v1904
    %1906 = vdwg.mxu0
    %v1909 = vrot.slane %v1903, 6
    %v1910 = vrot.slane %v1905, 6
    %v1913 = vadd.f32 %v1824, %v1909
    %v1914 = vadd.f32 %v1827, %v1910
    %v1915 = vxor.u32 %v1913, 2147483648
    %v1916 = vmul.f32 %v1915, 1.442695
    %v1917 = vpow.pop %v1916
    %v1918 = vadd.f32 %v1917, 1.0
    %v1919 = vrcp.pop %v1918
    %v1920 = vmul.f32 1.0, %v1919
    %v1921 = vtanh.pop %v1913
    %v1923 = vrot.slane %v1783, 6
    %v1925 = vmul.f32 %v1920, %v1923
    %1927 = vrot.lane.b32.xlu0 %v1921, 64
    %v1928 = vpop.permute.xlu0 %1927
    %v1930 = vmul.f32 %v1920, %v1928
    %1932 = vrot.lane.b32.xlu0 %v1930, 32
    %v1933 = vpop.permute.xlu0 %1932
    %v1935 = vadd.f32 %v1925, %v1933
    %v1936 = vtanh.pop %v1935
    %1938 = vrot.lane.b32.xlu0 %v1936, 64
    %v1939 = vpop.permute.xlu0 %1938
    %v1941 = vmul.f32 %v1920, %v1939
    %v1942 = vxor.u32 %v1914, 2147483648
    %v1943 = vmul.f32 %v1942, 1.442695
    %v1944 = vpow.pop %v1943
    %v1945 = vadd.f32 %v1944, 1.0
    %v1946 = vrcp.pop %v1945
    %v1947 = vmul.f32 1.0, %v1946
    %v1948 = vtanh.pop %v1914
    %v1950 = vrot.slane %v1807, 6
    %v1952 = vmul.f32 %v1947, %v1950
    %1954 = vrot.lane.b32.xlu0 %v1948, 64
    %v1955 = vpop.permute.xlu0 %1954
    %v1957 = vmul.f32 %v1947, %v1955
    %1959 = vrot.lane.b32.xlu0 %v1957, 32
    %v1960 = vpop.permute.xlu0 %1959
    %v1962 = vadd.f32 %v1952, %v1960
    %v1963 = vtanh.pop %v1962
    %1965 = vrot.lane.b32.xlu0 %v1963, 64
    %v1966 = vpop.permute.xlu0 %1965
    %v1968 = vmul.f32 %v1947, %v1966
    %1970 = vrot.lane.b32.xlu0 %v1941, 32
    %v1971 = vpop.permute.xlu0 %1970
    %1973 = vst.msk [vmem:[#allocation5] sm:$0xc] %vm605, %v1971
    %1975 = vrot.lane.b32.xlu0 %v1968, 32
    %v1976 = vpop.permute.xlu0 %1975
    %1978 = vst.msk [vmem:[#allocation6 + $0xa] sm:$0xc] %vm605, %v1976
    %v1979 = vld [vmem:[#allocation2] sm:$0x30]
    %v1980 = vld [vmem:[#allocation2 + $0x18] sm:$0xc]
    %v1982 = vrot.slane %v1980, 6
    %1984 = vrot.lane.b32.xlu0 %v1968, 64
    %v1985 = vpop.permute.xlu0 %1984
    %v1987 = vsel %vm110, %v1971, %v1985
    %v1989 = vrot.slane %v1987, 2
    %v1990 = vsel %vm320, %v1989, 0
    %1992 = vmatprep.subr.mxu0 %v1673
    %1993 = vmatpush1.msra.mxu0 %v1672
    %1994 = vmatprep.subr.mxu0 %v1675
    %1995 = vmatpush1.msra.mxu0 %v1674
    %1996 = vmatprep.subr.mxu0 %v1677
    %1997 = vmatpush1.msra.mxu0 %v1676
    %1998 = vmatprep.subr.mxu0 %v1679
    %1999 = vmatpush1.msra.mxu0 %v1678
    %2000 = vmatprep.subr.mxu0 %v1681
    %2001 = vmatpush1.msra.mxu0 %v1680
    %2002 = vmatprep.subr.mxu0 %v1683
    %2003 = vmatpush1.msra.mxu0 %v1682
    %2004 = vmatprep.subr.mxu0 %v1685
    %2005 = vmatpush1.msra.mxu0 %v1684
    %2006 = vmatprep.subr.mxu0 %v1687
    %2007 = vmatpush1.msra.mxu0 %v1686
    %2008 = vmatprep.subr.mxu0 0.0
    %2009 = vmatpush1.msra.mxu0 0.0
    %2010 = vmatprep.subr.mxu0 0.0
    %2011 = vmatpush1.msra.mxu0 0.0
    %2012 = vmatprep.subr.mxu0 0.0
    %2013 = vmatpush1.msra.mxu0 0.0
    %2014 = vmatprep.subr.mxu0 0.0
    %2015 = vmatpush1.msra.mxu0 0.0
    %2016 = vmatprep.subr.mxu0 0.0
    %2017 = vmatpush1.msra.mxu0 0.0
    %2018 = vmatprep.subr.mxu0 0.0
    %2019 = vmatpush1.msra.mxu0 0.0
    %2020 = vmatprep.subr.mxu0 0.0
    %2021 = vmatpush1.msra.mxu0 0.0
    %2022 = vmatprep.subr.mxu0 0.0
    %2023 = vmatpush1.msra.mxu0 0.0
    %2024 = vmatprep.subr.mxu0 0.0
    %2025 = vmatpush1.msra.mxu0 0.0
    %2026 = vmatprep.subr.mxu0 0.0
    %2027 = vmatpush1.msra.mxu0 0.0
    %2028 = vmatprep.subr.mxu0 0.0
    %2029 = vmatpush1.msra.mxu0 0.0
    %2030 = vmatprep.subr.mxu0 0.0
    %2031 = vmatpush1.msra.mxu0 0.0
    %2032 = vmatprep.subr.mxu0 0.0
    %2033 = vmatpush1.msra.mxu0 0.0
    %2034 = vmatprep.subr.mxu0 0.0
    %2035 = vmatpush1.msra.mxu0 0.0
    %2036 = vmatprep.subr.mxu0 0.0
    %2037 = vmatpush1.msra.mxu0 0.0
    %2038 = vmatprep.subr.mxu0 0.0
    %2039 = vmatpush1.msra.mxu0 0.0
    %2040 = vmatprep.subr.mxu0 0.0
    %2041 = vmatpush1.msra.mxu0 0.0
    %2042 = vmatprep.subr.mxu0 0.0
    %2043 = vmatpush1.msra.mxu0 0.0
    %2044 = vmatprep.subr.mxu0 0.0
    %2045 = vmatpush1.msra.mxu0 0.0
    %2046 = vmatprep.subr.mxu0 0.0
    %2047 = vmatpush1.msra.mxu0 0.0
    %2048 = vmatprep.subr.mxu0 0.0
    %2049 = vmatpush1.msra.mxu0 0.0
    %2050 = vmatprep.subr.mxu0 0.0
    %2051 = vmatpush1.msra.mxu0 0.0
    %2052 = vmatprep.subr.mxu0 0.0
    %2053 = vmatpush1.msra.mxu0 0.0
    %2054 = vmatprep.subr.mxu0 0.0
    %2055 = vmatpush1.msra.mxu0 0.0
    %2056 = vmatprep.mubr.f32.mxu0 0.0
    %2057 = vmatmul.mubr.f32.gmra.mrb[0].mxu0 %v1990
    %v2058 = vpop.f32.mrb[0].mxu0
    %v2059 = vadd.f32 0.0, %v2058
    %v2060 = vpop.f32.mrb[0].mxu0
    %v2061 = vadd.f32 0.0, %v2060
    %2062 = vdwg.mxu0
    %v2065 = vrot.slane %v2059, 4
    %v2066 = vrot.slane %v2061, 4
    %v2069 = vadd.f32 %v1979, %v2065
    %v2070 = vadd.f32 %v1982, %v2066
    %v2071 = vxor.u32 %v2069, 2147483648
    %v2072 = vmul.f32 %v2071, 1.442695
    %v2073 = vpow.pop %v2072
    %v2074 = vadd.f32 %v2073, 1.0
    %v2075 = vrcp.pop %v2074
    %v2076 = vmul.f32 1.0, %v2075
    %v2077 = vtanh.pop %v2069
    %v2079 = vrot.slane %v1935, 6
    %v2081 = vmul.f32 %v2076, %v2079
    %2083 = vrot.lane.b32.xlu0 %v2077, 64
    %v2084 = vpop.permute.xlu0 %2083
    %v2086 = vmul.f32 %v2076, %v2084
    %2088 = vrot.lane.b32.xlu0 %v2086, 32
    %v2089 = vpop.permute.xlu0 %2088
    %v2091 = vadd.f32 %v2081, %v2089
    %v2092 = vtanh.pop %v2091
    %2094 = vrot.lane.b32.xlu0 %v2092, 64
    %v2095 = vpop.permute.xlu0 %2094
    %v2097 = vmul.f32 %v2076, %v2095
    %v2098 = vxor.u32 %v2070, 2147483648
    %v2099 = vmul.f32 %v2098, 1.442695
    %v2100 = vpow.pop %v2099
    %v2101 = vadd.f32 %v2100, 1.0
    %v2102 = vrcp.pop %v2101
    %v2103 = vmul.f32 1.0, %v2102
    %v2104 = vtanh.pop %v2070
    %v2106 = vrot.slane %v1962, 6
    %v2108 = vmul.f32 %v2103, %v2106
    %2110 = vrot.lane.b32.xlu0 %v2104, 64
    %v2111 = vpop.permute.xlu0 %2110
    %v2113 = vmul.f32 %v2103, %v2111
    %2115 = vrot.lane.b32.xlu0 %v2113, 32
    %v2116 = vpop.permute.xlu0 %2115
    %v2118 = vadd.f32 %v2108, %v2116
    %v2119 = vtanh.pop %v2118
    %2121 = vrot.lane.b32.xlu0 %v2119, 64
    %v2122 = vpop.permute.xlu0 %2121
    %v2124 = vmul.f32 %v2103, %v2122
    %2126 = vrot.lane.b32.xlu0 %v2097, 32
    %v2127 = vpop.permute.xlu0 %2126
    %2129 = vst.msk [vmem:[#allocation5] sm:$0x30] %vm762, %v2127
    %2131 = vrot.lane.b32.xlu0 %v2124, 32
    %v2132 = vpop.permute.xlu0 %2131
    %2134 = vst.msk [vmem:[#allocation6 + $0x6] sm:$0x30] %vm762, %v2132
    %v2135 = vld [vmem:[#allocation2] sm:$0xc0]
    %v2136 = vld [vmem:[#allocation2 + $0x18] sm:$0x3]
    %v2138 = vrot.slane %v2136, 2
    %2140 = vrot.lane.b32.xlu0 %v2124, 64
    %v2141 = vpop.permute.xlu0 %2140
    %v2143 = vsel %vm110, %v2127, %v2141
    %v2145 = vrot.slane %v2143, 4
    %v2146 = vsel %vm320, %v2145, 0
    %2148 = vmatprep.subr.mxu0 %v1673
    %2149 = vmatpush1.msra.mxu0 %v1672
    %2150 = vmatprep.subr.mxu0 %v1675
    %2151 = vmatpush1.msra.mxu0 %v1674
    %2152 = vmatprep.subr.mxu0 %v1677
    %2153 = vmatpush1.msra.mxu0 %v1676
    %2154 = vmatprep.subr.mxu0 %v1679
    %2155 = vmatpush1.msra.mxu0 %v1678
    %2156 = vmatprep.subr.mxu0 %v1681
    %2157 = vmatpush1.msra.mxu0 %v1680
    %2158 = vmatprep.subr.mxu0 %v1683
    %2159 = vmatpush1.msra.mxu0 %v1682
    %2160 = vmatprep.subr.mxu0 %v1685
    %2161 = vmatpush1.msra.mxu0 %v1684
    %2162 = vmatprep.subr.mxu0 %v1687
    %2163 = vmatpush1.msra.mxu0 %v1686
    %2164 = vmatprep.subr.mxu0 0.0
    %2165 = vmatpush1.msra.mxu0 0.0
    %2166 = vmatprep.subr.mxu0 0.0
    %2167 = vmatpush1.msra.mxu0 0.0
    %2168 = vmatprep.subr.mxu0 0.0
    %2169 = vmatpush1.msra.mxu0 0.0
    %2170 = vmatprep.subr.mxu0 0.0
    %2171 = vmatpush1.msra.mxu0 0.0
    %2172 = vmatprep.subr.mxu0 0.0
    %2173 = vmatpush1.msra.mxu0 0.0
    %2174 = vmatprep.subr.mxu0 0.0
    %2175 = vmatpush1.msra.mxu0 0.0
    %2176 = vmatprep.subr.mxu0 0.0
    %2177 = vmatpush1.msra.mxu0 0.0
    %2178 = vmatprep.subr.mxu0 0.0
    %2179 = vmatpush1.msra.mxu0 0.0
    %2180 = vmatprep.subr.mxu0 0.0
    %2181 = vmatpush1.msra.mxu0 0.0
    %2182 = vmatprep.subr.mxu0 0.0
    %2183 = vmatpush1.msra.mxu0 0.0
    %2184 = vmatprep.subr.mxu0 0.0
    %2185 = vmatpush1.msra.mxu0 0.0
    %2186 = vmatprep.subr.mxu0 0.0
    %2187 = vmatpush1.msra.mxu0 0.0
    %2188 = vmatprep.subr.mxu0 0.0
    %2189 = vmatpush1.msra.mxu0 0.0
    %2190 = vmatprep.subr.mxu0 0.0
    %2191 = vmatpush1.msra.mxu0 0.0
    %2192 = vmatprep.subr.mxu0 0.0
    %2193 = vmatpush1.msra.mxu0 0.0
    %2194 = vmatprep.subr.mxu0 0.0
    %2195 = vmatpush1.msra.mxu0 0.0
    %2196 = vmatprep.subr.mxu0 0.0
    %2197 = vmatpush1.msra.mxu0 0.0
    %2198 = vmatprep.subr.mxu0 0.0
    %2199 = vmatpush1.msra.mxu0 0.0
    %2200 = vmatprep.subr.mxu0 0.0
    %2201 = vmatpush1.msra.mxu0 0.0
    %2202 = vmatprep.subr.mxu0 0.0
    %2203 = vmatpush1.msra.mxu0 0.0
    %2204 = vmatprep.subr.mxu0 0.0
    %2205 = vmatpush1.msra.mxu0 0.0
    %2206 = vmatprep.subr.mxu0 0.0
    %2207 = vmatpush1.msra.mxu0 0.0
    %2208 = vmatprep.subr.mxu0 0.0
    %2209 = vmatpush1.msra.mxu0 0.0
    %2210 = vmatprep.subr.mxu0 0.0
    %2211 = vmatpush1.msra.mxu0 0.0
    %2212 = vmatprep.mubr.f32.mxu0 0.0
    %2213 = vmatmul.mubr.f32.gmra.mrb[0].mxu0 %v2146
    %v2214 = vpop.f32.mrb[0].mxu0
    %v2215 = vadd.f32 0.0, %v2214
    %v2216 = vpop.f32.mrb[0].mxu0
    %v2217 = vadd.f32 0.0, %v2216
    %2218 = vdwg.mxu0
    %v2221 = vrot.slane %v2215, 2
    %v2222 = vrot.slane %v2217, 2
    %v2225 = vadd.f32 %v2135, %v2221
    %v2226 = vadd.f32 %v2138, %v2222
    %v2227 = vxor.u32 %v2225, 2147483648
    %v2228 = vmul.f32 %v2227, 1.442695
    %v2229 = vpow.pop %v2228
    %v2230 = vadd.f32 %v2229, 1.0
    %v2231 = vrcp.pop %v2230
    %v2232 = vmul.f32 1.0, %v2231
    %v2233 = vtanh.pop %v2225
    %v2235 = vrot.slane %v2091, 6
    %v2237 = vmul.f32 %v2232, %v2235
    %2239 = vrot.lane.b32.xlu0 %v2233, 64
    %v2240 = vpop.permute.xlu0 %2239
    %v2242 = vmul.f32 %v2232, %v2240
    %2244 = vrot.lane.b32.xlu0 %v2242, 32
    %v2245 = vpop.permute.xlu0 %2244
    %v2247 = vadd.f32 %v2237, %v2245
    %v2248 = vtanh.pop %v2247
    %2250 = vrot.lane.b32.xlu0 %v2248, 64
    %v2251 = vpop.permute.xlu0 %2250
    %v2253 = vmul.f32 %v2232, %v2251
    %v2254 = vxor.u32 %v2226, 2147483648
    %v2255 = vmul.f32 %v2254, 1.442695
    %v2256 = vpow.pop %v2255
    %v2257 = vadd.f32 %v2256, 1.0
    %v2258 = vrcp.pop %v2257
    %v2259 = vmul.f32 1.0, %v2258
    %v2260 = vtanh.pop %v2226
    %v2262 = vrot.slane %v2118, 6
    %v2264 = vmul.f32 %v2259, %v2262
    %2266 = vrot.lane.b32.xlu0 %v2260, 64
    %v2267 = vpop.permute.xlu0 %2266
    %v2269 = vmul.f32 %v2259, %v2267
    %2271 = vrot.lane.b32.xlu0 %v2269, 32
    %v2272 = vpop.permute.xlu0 %2271
    %v2274 = vadd.f32 %v2264, %v2272
    %v2275 = vtanh.pop %v2274
    %2277 = vrot.lane.b32.xlu0 %v2275, 64
    %v2278 = vpop.permute.xlu0 %2277
    %v2280 = vmul.f32 %v2259, %v2278
    %2282 = vrot.lane.b32.xlu0 %v2253, 32
    %v2283 = vpop.permute.xlu0 %2282
    %2285 = vst.msk [vmem:[#allocation5] sm:$0xc0] %vm919, %v2283
    %2287 = vrot.lane.b32.xlu0 %v2280, 32
    %v2288 = vpop.permute.xlu0 %2287
    %2290 = vst.msk [vmem:[#allocation6 + $0x2] sm:$0xc0] %vm919, %v2288
    %v2291 = vld [vmem:[#allocation2 + $0x10] sm:$0x3]
    %v2292 = vld [vmem:[#allocation2 + $0x8] sm:$0xc0]
    %v2294 = vrot.slane %v2292, 6
    %2296 = vrot.lane.b32.xlu0 %v2280, 64
    %v2297 = vpop.permute.xlu0 %2296
    %v2299 = vsel %vm110, %v2283, %v2297
    %v2301 = vrot.slane %v2299, 6
    %v2302 = vsel %vm320, %v2301, 0
    %2304 = vmatprep.subr.mxu0 %v1673
    %2305 = vmatpush1.msra.mxu0 %v1672
    %2306 = vmatprep.subr.mxu0 %v1675
    %2307 = vmatpush1.msra.mxu0 %v1674
    %2308 = vmatprep.subr.mxu0 %v1677
    %2309 = vmatpush1.msra.mxu0 %v1676
    %2310 = vmatprep.subr.mxu0 %v1679
    %2311 = vmatpush1.msra.mxu0 %v1678
    %2312 = vmatprep.subr.mxu0 %v1681
    %2313 = vmatpush1.msra.mxu0 %v1680
    %2314 = vmatprep.subr.mxu0 %v1683
    %2315 = vmatpush1.msra.mxu0 %v1682
    %2316 = vmatprep.subr.mxu0 %v1685
    %2317 = vmatpush1.msra.mxu0 %v1684
    %2318 = vmatprep.subr.mxu0 %v1687
    %2319 = vmatpush1.msra.mxu0 %v1686
    %2320 = vmatprep.subr.mxu0 0.0
    %2321 = vmatpush1.msra.mxu0 0.0
    %2322 = vmatprep.subr.mxu0 0.0
    %2323 = vmatpush1.msra.mxu0 0.0
    %2324 = vmatprep.subr.mxu0 0.0
    %2325 = vmatpush1.msra.mxu0 0.0
    %2326 = vmatprep.subr.mxu0 0.0
    %2327 = vmatpush1.msra.mxu0 0.0
    %2328 = vmatprep.subr.mxu0 0.0
    %2329 = vmatpush1.msra.mxu0 0.0
    %2330 = vmatprep.subr.mxu0 0.0
    %2331 = vmatpush1.msra.mxu0 0.0
    %2332 = vmatprep.subr.mxu0 0.0
    %2333 = vmatpush1.msra.mxu0 0.0
    %2334 = vmatprep.subr.mxu0 0.0
    %2335 = vmatpush1.msra.mxu0 0.0
    %2336 = vmatprep.subr.mxu0 0.0
    %2337 = vmatpush1.msra.mxu0 0.0
    %2338 = vmatprep.subr.mxu0 0.0
    %2339 = vmatpush1.msra.mxu0 0.0
    %2340 = vmatprep.subr.mxu0 0.0
    %2341 = vmatpush1.msra.mxu0 0.0
    %2342 = vmatprep.subr.mxu0 0.0
    %2343 = vmatpush1.msra.mxu0 0.0
    %2344 = vmatprep.subr.mxu0 0.0
    %2345 = vmatpush1.msra.mxu0 0.0
    %2346 = vmatprep.subr.mxu0 0.0
    %2347 = vmatpush1.msra.mxu0 0.0
    %2348 = vmatprep.subr.mxu0 0.0
    %2349 = vmatpush1.msra.mxu0 0.0
    %2350 = vmatprep.subr.mxu0 0.0
    %2351 = vmatpush1.msra.mxu0 0.0
    %2352 = vmatprep.subr.mxu0 0.0
    %2353 = vmatpush1.msra.mxu0 0.0
    %2354 = vmatprep.subr.mxu0 0.0
    %2355 = vmatpush1.msra.mxu0 0.0
    %2356 = vmatprep.subr.mxu0 0.0
    %2357 = vmatpush1.msra.mxu0 0.0
    %2358 = vmatprep.subr.mxu0 0.0
    %2359 = vmatpush1.msra.mxu0 0.0
    %2360 = vmatprep.subr.mxu0 0.0
    %2361 = vmatpush1.msra.mxu0 0.0
    %2362 = vmatprep.subr.mxu0 0.0
    %2363 = vmatpush1.msra.mxu0 0.0
    %2364 = vmatprep.subr.mxu0 0.0
    %2365 = vmatpush1.msra.mxu0 0.0
    %2366 = vmatprep.subr.mxu0 0.0
    %2367 = vmatpush1.msra.mxu0 0.0
    %2368 = vmatprep.mubr.f32.mxu0 0.0
    %2369 = vmatmul.mubr.f32.gmra.mrb[0].mxu0 %v2302
    %v2370 = vpop.f32.mrb[0].mxu0
    %v2371 = vadd.f32 0.0, %v2370
    %v2372 = vpop.f32.mrb[0].mxu0
    %v2373 = vadd.f32 0.0, %v2372
    %2374 = vdwg.mxu0
    %v2375 = vadd.f32 %v2291, %v2371
    %v2376 = vadd.f32 %v2294, %v2373
    %v2377 = vxor.u32 %v2375, 2147483648
    %v2378 = vmul.f32 %v2377, 1.442695
    %v2379 = vpow.pop %v2378
    %v2380 = vadd.f32 %v2379, 1.0
    %v2381 = vrcp.pop %v2380
    %v2382 = vmul.f32 1.0, %v2381
    %v2383 = vtanh.pop %v2375
    %v2385 = vrot.slane %v2247, 6
    %v2387 = vmul.f32 %v2382, %v2385
    %2389 = vrot.lane.b32.xlu0 %v2383, 64
    %v2390 = vpop.permute.xlu0 %2389
    %v2392 = vmul.f32 %v2382, %v2390
    %2394 = vrot.lane.b32.xlu0 %v2392, 32
    %v2395 = vpop.permute.xlu0 %2394
    %v2397 = vadd.f32 %v2387, %v2395
    %v2398 = vtanh.pop %v2397
    %2400 = vrot.lane.b32.xlu0 %v2398, 64
    %v2401 = vpop.permute.xlu0 %2400
    %v2403 = vmul.f32 %v2382, %v2401
    %v2404 = vxor.u32 %v2376, 2147483648
    %v2405 = vmul.f32 %v2404, 1.442695
    %v2406 = vpow.pop %v2405
    %v2407 = vadd.f32 %v2406, 1.0
    %v2408 = vrcp.pop %v2407
    %v2409 = vmul.f32 1.0, %v2408
    %v2410 = vtanh.pop %v2376
    %v2412 = vrot.slane %v2274, 6
    %v2414 = vmul.f32 %v2409, %v2412
    %2416 = vrot.lane.b32.xlu0 %v2410, 64
    %v2417 = vpop.permute.xlu0 %2416
    %v2419 = vmul.f32 %v2409, %v2417
    %2421 = vrot.lane.b32.xlu0 %v2419, 32
    %v2422 = vpop.permute.xlu0 %2421
    %v2424 = vadd.f32 %v2414, %v2422
    %v2425 = vtanh.pop %v2424
    %2427 = vrot.lane.b32.xlu0 %v2425, 64
    %v2428 = vpop.permute.xlu0 %2427
    %v2430 = vmul.f32 %v2409, %v2428
    %2432 = vrot.lane.b32.xlu0 %v2403, 32
    %v2433 = vpop.permute.xlu0 %2432
    %2435 = vst.msk [vmem:[#allocation5 + $0x8] sm:$0x3] %vm449, %v2433
    %2437 = vrot.lane.b32.xlu0 %v2430, 32
    %v2438 = vpop.permute.xlu0 %2437
    %2440 = vst.msk [vmem:[#allocation6 + $0x6] sm:$0x3] %vm449, %v2438
    %v2441 = vld [vmem:[#allocation2 + $0x10] sm:$0xc]
    %v2442 = vld [vmem:[#allocation2 + $0x8] sm:$0x30]
    %v2444 = vrot.slane %v2442, 2
    %2446 = vrot.lane.b32.xlu0 %v2430, 64
    %v2447 = vpop.permute.xlu0 %2446
    %v2449 = vsel %vm110, %v2433, %v2447
    %v2451 = vsel %vm320, %v2449, 0
    %2453 = vmatprep.subr.mxu0 %v1673
    %2454 = vmatpush1.msra.mxu0 %v1672
    %2455 = vmatprep.subr.mxu0 %v1675
    %2456 = vmatpush1.msra.mxu0 %v1674
    %2457 = vmatprep.subr.mxu0 %v1677
    %2458 = vmatpush1.msra.mxu0 %v1676
    %2459 = vmatprep.subr.mxu0 %v1679
    %2460 = vmatpush1.msra.mxu0 %v1678
    %2461 = vmatprep.subr.mxu0 %v1681
    %2462 = vmatpush1.msra.mxu0 %v1680
    %2463 = vmatprep.subr.mxu0 %v1683
    %2464 = vmatpush1.msra.mxu0 %v1682
    %2465 = vmatprep.subr.mxu0 %v1685
    %2466 = vmatpush1.msra.mxu0 %v1684
    %2467 = vmatprep.subr.mxu0 %v1687
    %2468 = vmatpush1.msra.mxu0 %v1686
    %2469 = vmatprep.subr.mxu0 0.0
    %2470 = vmatpush1.msra.mxu0 0.0
    %2471 = vmatprep.subr.mxu0 0.0
    %2472 = vmatpush1.msra.mxu0 0.0
    %2473 = vmatprep.subr.mxu0 0.0
    %2474 = vmatpush1.msra.mxu0 0.0
    %2475 = vmatprep.subr.mxu0 0.0
    %2476 = vmatpush1.msra.mxu0 0.0
    %2477 = vmatprep.subr.mxu0 0.0
    %2478 = vmatpush1.msra.mxu0 0.0
    %2479 = vmatprep.subr.mxu0 0.0
    %2480 = vmatpush1.msra.mxu0 0.0
    %2481 = vmatprep.subr.mxu0 0.0
    %2482 = vmatpush1.msra.mxu0 0.0
    %2483 = vmatprep.subr.mxu0 0.0
    %2484 = vmatpush1.msra.mxu0 0.0
    %2485 = vmatprep.subr.mxu0 0.0
    %2486 = vmatpush1.msra.mxu0 0.0
    %2487 = vmatprep.subr.mxu0 0.0
    %2488 = vmatpush1.msra.mxu0 0.0
    %2489 = vmatprep.subr.mxu0 0.0
    %2490 = vmatpush1.msra.mxu0 0.0
    %2491 = vmatprep.subr.mxu0 0.0
    %2492 = vmatpush1.msra.mxu0 0.0
    %2493 = vmatprep.subr.mxu0 0.0
    %2494 = vmatpush1.msra.mxu0 0.0
    %2495 = vmatprep.subr.mxu0 0.0
    %2496 = vmatpush1.msra.mxu0 0.0
    %2497 = vmatprep.subr.mxu0 0.0
    %2498 = vmatpush1.msra.mxu0 0.0
    %2499 = vmatprep.subr.mxu0 0.0
    %2500 = vmatpush1.msra.mxu0 0.0
    %2501 = vmatprep.subr.mxu0 0.0
    %2502 = vmatpush1.msra.mxu0 0.0
    %2503 = vmatprep.subr.mxu0 0.0
    %2504 = vmatpush1.msra.mxu0 0.0
    %2505 = vmatprep.subr.mxu0 0.0
    %2506 = vmatpush1.msra.mxu0 0.0
    %2507 = vmatprep.subr.mxu0 0.0
    %2508 = vmatpush1.msra.mxu0 0.0
    %2509 = vmatprep.subr.mxu0 0.0
    %2510 = vmatpush1.msra.mxu0 0.0
    %2511 = vmatprep.subr.mxu0 0.0
    %2512 = vmatpush1.msra.mxu0 0.0
    %2513 = vmatprep.subr.mxu0 0.0
    %2514 = vmatpush1.msra.mxu0 0.0
    %2515 = vmatprep.subr.mxu0 0.0
    %2516 = vmatpush1.msra.mxu0 0.0
    %2517 = vmatprep.mubr.f32.mxu0 0.0
    %2518 = vmatmul.mubr.f32.gmra.mrb[0].mxu0 %v2451
    %v2519 = vpop.f32.mrb[0].mxu0
    %v2520 = vadd.f32 0.0, %v2519
    %v2521 = vpop.f32.mrb[0].mxu0
    %v2522 = vadd.f32 0.0, %v2521
    %2523 = vdwg.mxu0
    %v2526 = vrot.slane %v2520, 6
    %v2527 = vrot.slane %v2522, 6
    %v2530 = vadd.f32 %v2441, %v2526
    %v2531 = vadd.f32 %v2444, %v2527
    %v2532 = vxor.u32 %v2530, 2147483648
    %v2533 = vmul.f32 %v2532, 1.442695
    %v2534 = vpow.pop %v2533
    %v2535 = vadd.f32 %v2534, 1.0
    %v2536 = vrcp.pop %v2535
    %v2537 = vmul.f32 1.0, %v2536
    %v2538 = vtanh.pop %v2530
    %v2540 = vrot.slane %v2397, 6
    %v2542 = vmul.f32 %v2537, %v2540
    %2544 = vrot.lane.b32.xlu0 %v2538, 64
    %v2545 = vpop.permute.xlu0 %2544
    %v2547 = vmul.f32 %v2537, %v2545
    %2549 = vrot.lane.b32.xlu0 %v2547, 32
    %v2550 = vpop.permute.xlu0 %2549
    %v2552 = vadd.f32 %v2542, %v2550
    %v2553 = vtanh.pop %v2552
    %2555 = vrot.lane.b32.xlu0 %v2553, 64
    %v2556 = vpop.permute.xlu0 %2555
    %v2558 = vmul.f32 %v2537, %v2556
    %v2559 = vxor.u32 %v2531, 2147483648
    %v2560 = vmul.f32 %v2559, 1.442695
    %v2561 = vpow.pop %v2560
    %v2562 = vadd.f32 %v2561, 1.0
    %v2563 = vrcp.pop %v2562
    %v2564 = vmul.f32 1.0, %v2563
    %v2565 = vtanh.pop %v2531
    %v2567 = vrot.slane %v2424, 6
    %v2569 = vmul.f32 %v2564, %v2567
    %2571 = vrot.lane.b32.xlu0 %v2565, 64
    %v2572 = vpop.permute.xlu0 %2571
    %v2574 = vmul.f32 %v2564, %v2572
    %2576 = vrot.lane.b32.xlu0 %v2574, 32
    %v2577 = vpop.permute.xlu0 %2576
    %v2579 = vadd.f32 %v2569, %v2577
    %v2580 = vtanh.pop %v2579
    %2582 = vrot.lane.b32.xlu0 %v2580, 64
    %v2583 = vpop.permute.xlu0 %2582
    %v2585 = vmul.f32 %v2564, %v2583
    %2587 = vrot.lane.b32.xlu0 %v2558, 32
    %v2588 = vpop.permute.xlu0 %2587
    %2590 = vst.msk [vmem:[#allocation5 + $0x8] sm:$0xc] %vm605, %v2588
    %2592 = vrot.lane.b32.xlu0 %v2585, 32
    %v2593 = vpop.permute.xlu0 %2592
    %2595 = vst.msk [vmem:[#allocation6 + $0x2] sm:$0xc] %vm605, %v2593
    %v2596 = vld [vmem:[#allocation2 + $0x10] sm:$0x30]
    %v2597 = vld [vmem:[#allocation2 + $0x8] sm:$0xc]
    %v2599 = vrot.slane %v2597, 6
    %2601 = vrot.lane.b32.xlu0 %v2585, 64
    %v2602 = vpop.permute.xlu0 %2601
    %v2604 = vsel %vm110, %v2588, %v2602
    %v2606 = vrot.slane %v2604, 2
    %v2607 = vsel %vm320, %v2606, 0
    %2609 = vmatprep.subr.mxu0 %v1673
    %2610 = vmatpush1.msra.mxu0 %v1672
    %2611 = vmatprep.subr.mxu0 %v1675
    %2612 = vmatpush1.msra.mxu0 %v1674
    %2613 = vmatprep.subr.mxu0 %v1677
    %2614 = vmatpush1.msra.mxu0 %v1676
    %2615 = vmatprep.subr.mxu0 %v1679
    %2616 = vmatpush1.msra.mxu0 %v1678
    %2617 = vmatprep.subr.mxu0 %v1681
    %2618 = vmatpush1.msra.mxu0 %v1680
    %2619 = vmatprep.subr.mxu0 %v1683
    %2620 = vmatpush1.msra.mxu0 %v1682
    %2621 = vmatprep.subr.mxu0 %v1685
    %2622 = vmatpush1.msra.mxu0 %v1684
    %2623 = vmatprep.subr.mxu0 %v1687
    %2624 = vmatpush1.msra.mxu0 %v1686
    %2625 = vmatprep.subr.mxu0 0.0
    %2626 = vmatpush1.msra.mxu0 0.0
    %2627 = vmatprep.subr.mxu0 0.0
    %2628 = vmatpush1.msra.mxu0 0.0
    %2629 = vmatprep.subr.mxu0 0.0
    %2630 = vmatpush1.msra.mxu0 0.0
    %2631 = vmatprep.subr.mxu0 0.0
    %2632 = vmatpush1.msra.mxu0 0.0
    %2633 = vmatprep.subr.mxu0 0.0
    %2634 = vmatpush1.msra.mxu0 0.0
    %2635 = vmatprep.subr.mxu0 0.0
    %2636 = vmatpush1.msra.mxu0 0.0
    %2637 = vmatprep.subr.mxu0 0.0
    %2638 = vmatpush1.msra.mxu0 0.0
    %2639 = vmatprep.subr.mxu0 0.0
    %2640 = vmatpush1.msra.mxu0 0.0
    %2641 = vmatprep.subr.mxu0 0.0
    %2642 = vmatpush1.msra.mxu0 0.0
    %2643 = vmatprep.subr.mxu0 0.0
    %2644 = vmatpush1.msra.mxu0 0.0
    %2645 = vmatprep.subr.mxu0 0.0
    %2646 = vmatpush1.msra.mxu0 0.0
    %2647 = vmatprep.subr.mxu0 0.0
    %2648 = vmatpush1.msra.mxu0 0.0
    %2649 = vmatprep.subr.mxu0 0.0
    %2650 = vmatpush1.msra.mxu0 0.0
    %2651 = vmatprep.subr.mxu0 0.0
    %2652 = vmatpush1.msra.mxu0 0.0
    %2653 = vmatprep.subr.mxu0 0.0
    %2654 = vmatpush1.msra.mxu0 0.0
    %2655 = vmatprep.subr.mxu0 0.0
    %2656 = vmatpush1.msra.mxu0 0.0
    %2657 = vmatprep.subr.mxu0 0.0
    %2658 = vmatpush1.msra.mxu0 0.0
    %2659 = vmatprep.subr.mxu0 0.0
    %2660 = vmatpush1.msra.mxu0 0.0
    %2661 = vmatprep.subr.mxu0 0.0
    %2662 = vmatpush1.msra.mxu0 0.0
    %2663 = vmatprep.subr.mxu0 0.0
    %2664 = vmatpush1.msra.mxu0 0.0
    %2665 = vmatprep.subr.mxu0 0.0
    %2666 = vmatpush1.msra.mxu0 0.0
    %2667 = vmatprep.subr.mxu0 0.0
    %2668 = vmatpush1.msra.mxu0 0.0
    %2669 = vmatprep.subr.mxu0 0.0
    %2670 = vmatpush1.msra.mxu0 0.0
    %2671 = vmatprep.subr.mxu0 0.0
    %2672 = vmatpush1.msra.mxu0 0.0
    %2673 = vmatprep.mubr.f32.mxu0 0.0
    %2674 = vmatmul.mubr.f32.gmra.mrb[0].mxu0 %v2607
    %v2675 = vpop.f32.mrb[0].mxu0
    %v2676 = vadd.f32 0.0, %v2675
    %v2677 = vpop.f32.mrb[0].mxu0
    %v2678 = vadd.f32 0.0, %v2677
    %2679 = vdwg.mxu0
    %v2682 = vrot.slane %v2676, 4
    %v2683 = vrot.slane %v2678, 4
    %v2686 = vadd.f32 %v2596, %v2682
    %v2687 = vadd.f32 %v2599, %v2683
    %v2688 = vxor.u32 %v2686, 2147483648
    %v2689 = vmul.f32 %v2688, 1.442695
    %v2690 = vpow.pop %v2689
    %v2691 = vadd.f32 %v2690, 1.0
    %v2692 = vrcp.pop %v2691
    %v2693 = vmul.f32 1.0, %v2692
    %v2694 = vtanh.pop %v2686
    %v2696 = vrot.slane %v2552, 6
    %v2698 = vmul.f32 %v2693, %v2696
    %2700 = vrot.lane.b32.xlu0 %v2694, 64
    %v2701 = vpop.permute.xlu0 %2700
    %v2703 = vmul.f32 %v2693, %v2701
    %2705 = vrot.lane.b32.xlu0 %v2703, 32
    %v2706 = vpop.permute.xlu0 %2705
    %v2708 = vadd.f32 %v2698, %v2706
    %v2709 = vtanh.pop %v2708
    %2711 = vrot.lane.b32.xlu0 %v2709, 64
    %v2712 = vpop.permute.xlu0 %2711
    %v2714 = vmul.f32 %v2693, %v2712
    %v2715 = vxor.u32 %v2687, 2147483648
    %v2716 = vmul.f32 %v2715, 1.442695
    %v2717 = vpow.pop %v2716
    %v2718 = vadd.f32 %v2717, 1.0
    %v2719 = vrcp.pop %v2718
    %v2720 = vmul.f32 1.0, %v2719
    %v2721 = vtanh.pop %v2687
    %v2723 = vrot.slane %v2579, 6
    %v2725 = vmul.f32 %v2720, %v2723
    %2727 = vrot.lane.b32.xlu0 %v2721, 64
    %v2728 = vpop.permute.xlu0 %2727
    %v2730 = vmul.f32 %v2720, %v2728
    %2732 = vrot.lane.b32.xlu0 %v2730, 32
    %v2733 = vpop.permute.xlu0 %2732
    %v2735 = vadd.f32 %v2725, %v2733
    %v2736 = vtanh.pop %v2735
    %2738 = vrot.lane.b32.xlu0 %v2736, 64
    %v2739 = vpop.permute.xlu0 %2738
    %v2741 = vmul.f32 %v2720, %v2739
    %2743 = vrot.lane.b32.xlu0 %v2714, 32
    %v2744 = vpop.permute.xlu0 %2743
    %2746 = vst.msk [vmem:[#allocation5 + $0x8] sm:$0x30] %vm762, %v2744
    %2748 = vrot.lane.b32.xlu0 %v2741, 32
    %v2749 = vpop.permute.xlu0 %2748
    %2751 = vst.msk [vmem:[#allocation6 - $0x2] sm:$0x30] %vm762, %v2749
    %v2752 = vld [vmem:[#allocation2 + $0x10] sm:$0xc0]
    %v2753 = vld [vmem:[#allocation2 + $0x8] sm:$0x3]
    %v2755 = vrot.slane %v2753, 2
    %2757 = vrot.lane.b32.xlu0 %v2741, 64
    %v2758 = vpop.permute.xlu0 %2757
    %v2760 = vsel %vm110, %v2744, %v2758
    %v2762 = vrot.slane %v2760, 4
    %v2763 = vsel %vm320, %v2762, 0
    %2765 = vmatprep.subr.mxu0 %v1673
    %2766 = vmatpush1.msra.mxu0 %v1672
    %2767 = vmatprep.subr.mxu0 %v1675
    %2768 = vmatpush1.msra.mxu0 %v1674
    %2769 = vmatprep.subr.mxu0 %v1677
    %2770 = vmatpush1.msra.mxu0 %v1676
    %2771 = vmatprep.subr.mxu0 %v1679
    %2772 = vmatpush1.msra.mxu0 %v1678
    %2773 = vmatprep.subr.mxu0 %v1681
    %2774 = vmatpush1.msra.mxu0 %v1680
    %2775 = vmatprep.subr.mxu0 %v1683
    %2776 = vmatpush1.msra.mxu0 %v1682
    %2777 = vmatprep.subr.mxu0 %v1685
    %2778 = vmatpush1.msra.mxu0 %v1684
    %2779 = vmatprep.subr.mxu0 %v1687
    %2780 = vmatpush1.msra.mxu0 %v1686
    %2781 = vmatprep.subr.mxu0 0.0
    %2782 = vmatpush1.msra.mxu0 0.0
    %2783 = vmatprep.subr.mxu0 0.0
    %2784 = vmatpush1.msra.mxu0 0.0
    %2785 = vmatprep.subr.mxu0 0.0
    %2786 = vmatpush1.msra.mxu0 0.0
    %2787 = vmatprep.subr.mxu0 0.0
    %2788 = vmatpush1.msra.mxu0 0.0
    %2789 = vmatprep.subr.mxu0 0.0
    %2790 = vmatpush1.msra.mxu0 0.0
    %2791 = vmatprep.subr.mxu0 0.0
    %2792 = vmatpush1.msra.mxu0 0.0
    %2793 = vmatprep.subr.mxu0 0.0
    %2794 = vmatpush1.msra.mxu0 0.0
    %2795 = vmatprep.subr.mxu0 0.0
    %2796 = vmatpush1.msra.mxu0 0.0
    %2797 = vmatprep.subr.mxu0 0.0
    %2798 = vmatpush1.msra.mxu0 0.0
    %2799 = vmatprep.subr.mxu0 0.0
    %2800 = vmatpush1.msra.mxu0 0.0
    %2801 = vmatprep.subr.mxu0 0.0
    %2802 = vmatpush1.msra.mxu0 0.0
    %2803 = vmatprep.subr.mxu0 0.0
    %2804 = vmatpush1.msra.mxu0 0.0
    %2805 = vmatprep.subr.mxu0 0.0
    %2806 = vmatpush1.msra.mxu0 0.0
    %2807 = vmatprep.subr.mxu0 0.0
    %2808 = vmatpush1.msra.mxu0 0.0
    %2809 = vmatprep.subr.mxu0 0.0
    %2810 = vmatpush1.msra.mxu0 0.0
    %2811 = vmatprep.subr.mxu0 0.0
    %2812 = vmatpush1.msra.mxu0 0.0
    %2813 = vmatprep.subr.mxu0 0.0
    %2814 = vmatpush1.msra.mxu0 0.0
    %2815 = vmatprep.subr.mxu0 0.0
    %2816 = vmatpush1.msra.mxu0 0.0
    %2817 = vmatprep.subr.mxu0 0.0
    %2818 = vmatpush1.msra.mxu0 0.0
    %2819 = vmatprep.subr.mxu0 0.0
    %2820 = vmatpush1.msra.mxu0 0.0
    %2821 = vmatprep.subr.mxu0 0.0
    %2822 = vmatpush1.msra.mxu0 0.0
    %2823 = vmatprep.subr.mxu0 0.0
    %2824 = vmatpush1.msra.mxu0 0.0
    %2825 = vmatprep.subr.mxu0 0.0
    %2826 = vmatpush1.msra.mxu0 0.0
    %2827 = vmatprep.subr.mxu0 0.0
    %2828 = vmatpush1.msra.mxu0 0.0
    %2829 = vmatprep.mubr.f32.mxu0 0.0
    %2830 = vmatmul.mubr.f32.gmra.mrb[0].mxu0 %v2763
    %v2831 = vpop.f32.mrb[0].mxu0
    %v2832 = vadd.f32 0.0, %v2831
    %v2833 = vpop.f32.mrb[0].mxu0
    %v2834 = vadd.f32 0.0, %v2833
    %2835 = vdwg.mxu0
    %v2838 = vrot.slane %v2832, 2
    %v2839 = vrot.slane %v2834, 2
    %v2842 = vadd.f32 %v2752, %v2838
    %v2843 = vadd.f32 %v2755, %v2839
    %v2844 = vxor.u32 %v2842, 2147483648
    %v2845 = vmul.f32 %v2844, 1.442695
    %v2846 = vpow.pop %v2845
    %v2847 = vadd.f32 %v2846, 1.0
    %v2848 = vrcp.pop %v2847
    %v2849 = vmul.f32 1.0, %v2848
    %v2850 = vtanh.pop %v2842
    %v2852 = vrot.slane %v2708, 6
    %v2854 = vmul.f32 %v2849, %v2852
    %2856 = vrot.lane.b32.xlu0 %v2850, 64
    %v2857 = vpop.permute.xlu0 %2856
    %v2859 = vmul.f32 %v2849, %v2857
    %2861 = vrot.lane.b32.xlu0 %v2859, 32
    %v2862 = vpop.permute.xlu0 %2861
    %v2864 = vadd.f32 %v2854, %v2862
    %v2865 = vtanh.pop %v2864
    %2867 = vrot.lane.b32.xlu0 %v2865, 64
    %v2868 = vpop.permute.xlu0 %2867
    %v2870 = vmul.f32 %v2849, %v2868
    %v2871 = vxor.u32 %v2843, 2147483648
    %v2872 = vmul.f32 %v2871, 1.442695
    %v2873 = vpow.pop %v2872
    %v2874 = vadd.f32 %v2873, 1.0
    %v2875 = vrcp.pop %v2874
    %v2876 = vmul.f32 1.0, %v2875
    %v2877 = vtanh.pop %v2843
    %v2879 = vrot.slane %v2735, 6
    %v2881 = vmul.f32 %v2876, %v2879
    %2883 = vrot.lane.b32.xlu0 %v2877, 64
    %v2884 = vpop.permute.xlu0 %2883
    %v2886 = vmul.f32 %v2876, %v2884
    %2888 = vrot.lane.b32.xlu0 %v2886, 32
    %v2889 = vpop.permute.xlu0 %2888
    %v2891 = vadd.f32 %v2881, %v2889
    %v2892 = vtanh.pop %v2891
    %2894 = vrot.lane.b32.xlu0 %v2892, 64
    %v2895 = vpop.permute.xlu0 %2894
    %v2897 = vmul.f32 %v2876, %v2895
    %2899 = vrot.lane.b32.xlu0 %v2870, 32
    %v2900 = vpop.permute.xlu0 %2899
    %2902 = vst.msk [vmem:[#allocation5 + $0x8] sm:$0xc0] %vm919, %v2900
    %2904 = vrot.lane.b32.xlu0 %v2897, 32
    %v2905 = vpop.permute.xlu0 %2904
    %2907 = vst.msk [vmem:[#allocation6 - $0x6] sm:$0xc0] %vm919, %v2905
    %v2908 = vld [vmem:[#allocation5] sm:$0xff]
    %v2909 = vld [vmem:[#allocation5 + $0x8] sm:$0xff]
    %v2910 = vld [vmem:[#allocation6] sm:$0xff]
    %v2911 = vld [vmem:[#allocation6 + $0x8] sm:$0xff]
    %2914 = vrot.lane.b32.xlu0 %v2910, 32
    %v2915 = vpop.permute.xlu0 %2914
    %2916 = vrot.lane.b32.xlu0 %v2911, 32
    %v2917 = vpop.permute.xlu0 %2916
    %v2920 = vsel %vm110, %v2908, %v2915
    %v2921 = vsel %vm110, %v2909, %v2917
    %v2922 = vld [vmem:[%s8] sm:$0xff]
    %v2923 = vld [vmem:[%s8 + $0x8] sm:$0xff]
    %v2924 = vld [vmem:[%s8 + $0x10] sm:$0xff]
    %v2925 = vld [vmem:[%s8 + $0x18] sm:$0xff]
    %v2926 = vld [vmem:[%s8 + $0x20] sm:$0xff]
    %v2927 = vld [vmem:[%s8 + $0x28] sm:$0xff]
    %v2928 = vld [vmem:[%s8 + $0x30] sm:$0xff]
    %v2929 = vld [vmem:[%s8 + $0x38] sm:$0xff]
    %v2930 = vld [vmem:[%s9] sm:$0x1]
    %v2932 = vlaneseq
    %v2933 = vshrl.u32 %v2932, 7
    %v2934 = vsub.s32 0, %v2933
    %v2935 = vrot.slane %v2930, %v2934
    %v2938 = vsel %vm320, %v2920, 0
    %v2941 = vsel %vm320, %v2921, 0
    %2943 = vmatprep.subr.mxu0 0.0
    %2944 = vmatpush1.msra.mxu0 %v2922
    %2945 = vmatprep.subr.mxu0 0.0
    %2946 = vmatpush1.msra.mxu0 %v2923
    %2947 = vmatprep.subr.mxu0 0.0
    %2948 = vmatpush1.msra.mxu0 %v2924
    %2949 = vmatprep.subr.mxu0 0.0
    %2950 = vmatpush1.msra.mxu0 %v2925
    %2951 = vmatprep.subr.mxu0 0.0
    %2952 = vmatpush1.msra.mxu0 %v2926
    %2953 = vmatprep.subr.mxu0 0.0
    %2954 = vmatpush1.msra.mxu0 %v2927
    %2955 = vmatprep.subr.mxu0 0.0
    %2956 = vmatpush1.msra.mxu0 %v2928
    %2957 = vmatprep.subr.mxu0 0.0
    %2958 = vmatpush1.msra.mxu0 %v2929
    %2959 = vmatprep.subr.mxu0 0.0
    %2960 = vmatpush1.msra.mxu0 0.0
    %2961 = vmatprep.subr.mxu0 0.0
    %2962 = vmatpush1.msra.mxu0 0.0
    %2963 = vmatprep.subr.mxu0 0.0
    %2964 = vmatpush1.msra.mxu0 0.0
    %2965 = vmatprep.subr.mxu0 0.0
    %2966 = vmatpush1.msra.mxu0 0.0
    %2967 = vmatprep.subr.mxu0 0.0
    %2968 = vmatpush1.msra.mxu0 0.0
    %2969 = vmatprep.subr.mxu0 0.0
    %2970 = vmatpush1.msra.mxu0 0.0
    %2971 = vmatprep.subr.mxu0 0.0
    %2972 = vmatpush1.msra.mxu0 0.0
    %2973 = vmatprep.subr.mxu0 0.0
    %2974 = vmatpush1.msra.mxu0 0.0
    %2975 = vmatprep.subr.mxu0 0.0
    %2976 = vmatpush1.msra.mxu0 0.0
    %2977 = vmatprep.subr.mxu0 0.0
    %2978 = vmatpush1.msra.mxu0 0.0
    %2979 = vmatprep.subr.mxu0 0.0
    %2980 = vmatpush1.msra.mxu0 0.0
    %2981 = vmatprep.subr.mxu0 0.0
    %2982 = vmatpush1.msra.mxu0 0.0
    %2983 = vmatprep.subr.mxu0 0.0
    %2984 = vmatpush1.msra.mxu0 0.0
    %2985 = vmatprep.subr.mxu0 0.0
    %2986 = vmatpush1.msra.mxu0 0.0
    %2987 = vmatprep.subr.mxu0 0.0
    %2988 = vmatpush1.msra.mxu0 0.0
    %2989 = vmatprep.subr.mxu0 0.0
    %2990 = vmatpush1.msra.mxu0 0.0
    %2991 = vmatprep.subr.mxu0 0.0
    %2992 = vmatpush1.msra.mxu0 0.0
    %2993 = vmatprep.subr.mxu0 0.0
    %2994 = vmatpush1.msra.mxu0 0.0
    %2995 = vmatprep.subr.mxu0 0.0
    %2996 = vmatpush1.msra.mxu0 0.0
    %2997 = vmatprep.subr.mxu0 0.0
    %2998 = vmatpush1.msra.mxu0 0.0
    %2999 = vmatprep.subr.mxu0 0.0
    %3000 = vmatpush1.msra.mxu0 0.0
    %3001 = vmatprep.subr.mxu0 0.0
    %3002 = vmatpush1.msra.mxu0 0.0
    %3003 = vmatprep.subr.mxu0 0.0
    %3004 = vmatpush1.msra.mxu0 0.0
    %3005 = vmatprep.subr.mxu0 0.0
    %3006 = vmatpush1.msra.mxu0 0.0
    %3007 = vmatprep.mubr.f32.mxu0 0.0
    %3008 = vmatmul.mubr.f32.gmra.mrb[0].mxu0 %v2938
    %v3009 = vpop.f32.mrb[0].mxu0
    %v3010 = vadd.f32 %v2935, %v3009
    %v3011 = vpop.f32.mrb[0].mxu0
    %3012 = vmatprep.mubr.f32.mxu0 0.0
    %3013 = vmatmul.mubr.f32.gmra.mrb[0].mxu0 %v2941
    %v3014 = vpop.f32.mrb[0].mxu0
    %v3015 = vadd.f32 %v2935, %v3014
    %v3016 = vpop.f32.mrb[0].mxu0
    %3017 = vdwg.mxu0
    %vm3018 = vcmask 64512
    %3019 = vst.msk [vmem:[%s10] sm:$0xff] %vm3018, %v3010
    %3020 = vst.msk [vmem:[%s10 + $0x8] sm:$0xff] %vm3018, %v3015
    // Predicated region
    $region58: #{ner_forward.1} parent=1 // pred_check
      _
    $region59: #{ner_forward.1} parent=1 // pred_check_branch
      %3022 = sbr.rel (0) target = $region61
    $region60: #{ner_forward.1} parent=1 // pred_region
      _
    $region61: #{ner_forward.1} parent=1 // pred_fallthru
      _
    // Predicated region
    $region62: #{ner_forward.1} parent=1 // pred_check
      _
    $region63: #{ner_forward.1} parent=1 // pred_check_branch
      %3024 = sbr.rel (0) target = $region65
    $region64: #{ner_forward.1} parent=1 // pred_region
      _
    $region65: #{ner_forward.1} parent=1 // pred_fallthru
      _
    %3025 = vsyncpa [#allocation8], 1
    %3026 = vsyncpa [#allocation10], 1
    %3027 = vsyncpa [#allocation13], 1

</llo_original>
